<compile_context>
chip_gen: v6e
topology: v6e:2x2x1
jax: 0.10.0
libtpu: 0.0.40
codegen_flags: <defaults>
</compile_context>

<pallas_src>
import functools

import jax
import jax.numpy as jnp
from jax import lax
from jax.experimental import pallas as pl
from jax.experimental.pallas import tpu as pltpu


# ------------------------------ device queries -------------------------------

def _tpu_vmem_capacity_bytes():
    """Physical VMEM per TensorCore (v5e/v6e: 128 MiB, v7x: 64 MiB)."""
    try:
        return int(pltpu.get_tpu_info().vmem_capacity_bytes)
    except Exception:
        return 64 * 1024 * 1024          # conservative fallback = v7x


def _elem_dtype_for_device():
    """bf16 element-wise hinge math on v6e/v7x (packed-bf16 VALU); f32 on v5e/v4."""
    try:
        kind = jax.devices()[0].device_kind.lower()
    except Exception:
        return jnp.float32
    if ("v6" in kind) or ("v7" in kind) or ("7x" in kind):
        return jnp.bfloat16
    return jnp.float32


# ------------------------------- Pallas kernel -------------------------------

def _desc_loss_kernel(d0_ref, d1_ref, w_ref, c_ref, out_ref, *,
                      pos_margin, neg_margin, pos_lambda, elem_dtype):
    f32 = jnp.float32
    # F.normalize denom = max(||x||, eps); x * rsqrt(max(||x||^2, eps^2)) matches
    # it exactly while keeping sqrt/divide off the VALU (EUP rsqrt slot).
    eps2 = 1e-24                         # (1e-12)**2

    d0 = d0_ref[...]                     # (TM, Cf, N) bf16
    d1 = d1_ref[...]

    # channel-wise L2 normalization; sum-of-squares accumulated in f32
    s0 = jnp.sum(jnp.square(d0.astype(f32)), axis=1, keepdims=True)
    s1 = jnp.sum(jnp.square(d1.astype(f32)), axis=1, keepdims=True)
    n0 = d0 * lax.rsqrt(jnp.maximum(s0, eps2)).astype(d0.dtype)
    n1 = d1 * lax.rsqrt(jnp.maximum(s1, eps2)).astype(d1.dtype)

    # Pairwise correlation s[b, i, k] = <desc0_i, desc1_k>, bf16 MXU / f32 acc.
    # Transposed-LHS batched contraction (contract over the channel axis); any
    # operand relayout Mosaic inserts rides the XLU slot, not the binding VALU.
    s = jnp.einsum('bcn,bcm->bnm', n0, n1, preferred_element_type=f32)
    s = jnp.maximum(s, 0.0)              # relu

    # Fused double L2 normalization via scale carrying:
    # over target cells k (axis 2) first, then over source cells i (axis 1).
    t = s * s
    r = lax.rsqrt(jnp.maximum(jnp.sum(t, axis=2, keepdims=True), eps2))            # (TM,N,1)
    c = lax.rsqrt(jnp.maximum(jnp.sum(t * (r * r), axis=1, keepdims=True), eps2))  # (TM,1,N)
    s = s * r * c

    # Ground-truth mask on the MXU: with the augmented rows
    #   w_aug[b,:,i] = [wx, wy, -0.5|w|^2 + thr2/4, 1]
    #   c_aug[:,k]   = [cx, cy, 1, -0.5|c|^2 + thr2/4]
    # score[b,i,k] = <w_aug, c_aug> = -0.5*(|c_k - w_bi|^2 - thr2), so the mask
    # is a single compare score >= 0.  f32 + HIGHEST precision: the expansion
    # cancels catastrophically near the threshold, so bf16 passes are unusable.
    w = w_ref[...]                                           # (TM, 4, N) f32
    tm = w.shape[0]
    ca = jnp.broadcast_to(c_ref[...][None], (tm,) + c_ref.shape)
    score = jnp.einsum('bxn,bxm->bnm', w, ca,
                       preferred_element_type=f32,
                       precision=lax.Precision.HIGHEST)      # (TM, N, N)

    # Folded hinge: elem = max(0, mask ? lambda*(pos_margin - s) : s - neg_margin).
    # Element-wise math in bf16 on v6e/v7x (packed VALU); reduction stays f32.
    se = s.astype(elem_dtype)
    a_pos = (jnp.asarray(pos_lambda * pos_margin, elem_dtype)
             - jnp.asarray(pos_lambda, elem_dtype) * se)
    a_neg = se - jnp.asarray(neg_margin, elem_dtype)
    elem = jnp.maximum(jnp.where(score >= 0.0, a_pos, a_neg),
                       jnp.asarray(0.0, elem_dtype))

    # per-item scalar sums -> (TM, 1, 1)
    out_ref[...] = jnp.sum(jnp.sum(elem.astype(f32), axis=2, keepdims=True),
                           axis=1, keepdims=True)


def _choose_tm(M, N, Cf, vmem_budget_bytes, tm_max=128):
    """Items per grid step: respect the VMEM budget (no >= 8 floor), and prefer
    at least two grid steps so ("parallel",) can use both v7x TensorCores."""
    per_item = (8 * N * N * 4            # ~8 live (N, N) f32 temporaries
                + 2 * (2 * Cf * N * 2)   # d0 + d1 bf16, double-buffered
                + 2 * (8 * N * 4))       # (4 -> 8 sublane-padded) warped, dbl-buf
    tm = max(1, min(tm_max, vmem_budget_bytes // max(per_item, 1)))
    tm = min(tm, M)
    if tm >= M and M > 1:
        tm = pl.cdiv(M, 2)               # exactly two grid steps
    return int(max(1, tm))


def descriptor_pair_loss_sums(d0, d1, w_aug, c_aug, *,
                              pos_margin=1.0, neg_margin=0.2, pos_lambda=0.05,
                              tm_max=128):
    """Per-item hinge-loss sums.
    d0, d1: (M, Cf, N) channel-major descriptors; w_aug: (M, 4, N); c_aug: (4, N).
    Returns (M,) f32 sums over the N x N hinge elements of each item."""
    M, Cf, N = d0.shape
    vmem_cap = _tpu_vmem_capacity_bytes()
    TM = _choose_tm(M, N, Cf, vmem_budget_bytes=int(vmem_cap * 0.5), tm_max=tm_max)
    G = pl.cdiv(M, TM)
    M_pad = G * TM

    d0 = d0.astype(jnp.bfloat16)         # halves HBM DMA + input VMEM
    d1 = d1.astype(jnp.bfloat16)
    w_aug = w_aug.astype(jnp.float32)
    c_aug = c_aug.astype(jnp.float32)
    if M_pad != M:
        # zero padding flows through the kernel NaN-free; padded rows are
        # sliced off below (no garbage-input tail step).
        pad = ((0, M_pad - M), (0, 0), (0, 0))
        d0, d1, w_aug = jnp.pad(d0, pad), jnp.pad(d1, pad), jnp.pad(w_aug, pad)

    # TODO(synk): at very large Hc*Wc even one item's N x N working set exceeds
    # v7x's 64 MiB VMEM; that regime needs an extra grid axis tiling the
    # correlation over source cells with a cross-tile column-norm accumulator.
    kernel = functools.partial(
        _desc_loss_kernel, pos_margin=pos_margin, neg_margin=neg_margin,
        pos_lambda=pos_lambda, elem_dtype=_elem_dtype_for_device())
    sums = pl.pallas_call(
        kernel,
        out_shape=jax.ShapeDtypeStruct((M_pad, 1, 1), jnp.float32),
        grid_spec=pltpu.PrefetchScalarGridSpec(
            num_scalar_prefetch=0,
            grid=(G,),
            in_specs=[
                pl.BlockSpec((TM, Cf, N), lambda g: (g, 0, 0)),
                pl.BlockSpec((TM, Cf, N), lambda g: (g, 0, 0)),
                pl.BlockSpec((TM, 4, N), lambda g: (g, 0, 0)),
                pl.BlockSpec((4, N), lambda g: (0, 0)),
            ],
            # (TM, 1, 1): the last two block dims equal the full array dims, so
            # the (8, 128) rule does not force TM to be a multiple of 8.
            out_specs=pl.BlockSpec((TM, 1, 1), lambda g: (g, 0, 0)),
        ),
        compiler_params=pltpu.CompilerParams(
            dimension_semantics=("parallel",),    # items are independent
            vmem_limit_bytes=min(int(vmem_cap * 0.9), 128 * 1024 * 1024)),
    )(d0, d1, w_aug, c_aug)
    return sums[:M, 0, 0]


# ------------------------------ JAX glue (pose math) --------------------------

def rodrigues(rvec):
    """Axis-angle (M,3) -> rotation matrices (M,3,3)."""
    theta = jnp.sqrt(jnp.sum(rvec * rvec, axis=-1, keepdims=True))       # (M,1)
    theta_safe = jnp.maximum(theta, 1e-12)
    k = rvec / theta_safe
    kx, ky, kz = k[:, 0], k[:, 1], k[:, 2]
    zero = jnp.zeros_like(kx)
    K = jnp.stack([zero, -kz, ky,
                   kz, zero, -kx,
                   -ky, kx, zero], axis=-1).reshape(-1, 3, 3)
    I = jnp.eye(3, dtype=rvec.dtype)[None]
    st = jnp.sin(theta)[..., None]
    ct = jnp.cos(theta)[..., None]
    return I + st * K + (1.0 - ct) * (K @ K)


def get_image_transform(r0, t0, r1, t1, nt, depth, K, Kinv):
    # TODO(synk): get_image_transform_tensor was not provided in the reference
    # source; the standard plane-induced homography H = K (R_rel - t_rel n^T / d) K^-1
    # is used here.
    R0 = rodrigues(r0)
    R1 = rodrigues(r1)
    Rrel = R1 @ jnp.swapaxes(R0, -1, -2)
    trel = t1[..., None] - Rrel @ t0[..., None]                 # (M,3,1)
    Hmat = Rrel - (trel @ nt) / depth[..., None]                # (M,3,3)
    return K @ Hmat @ Kinv


def scale_homography(Hm, origin_sizes, target_sizes):
    # TODO(synk): scale_homography was not provided; sizes assumed as (H, W),
    # H' = S H S^-1 with S = diag(W_t/W_o, H_t/H_o, 1).
    M = Hm.shape[0]
    sy = target_sizes[:, 0] / origin_sizes[:, 0]
    sx = target_sizes[:, 1] / origin_sizes[:, 1]
    one = jnp.ones_like(sx)
    S = jnp.zeros((M, 3, 3), Hm.dtype)
    S = S.at[:, 0, 0].set(sx).at[:, 1, 1].set(sy).at[:, 2, 2].set(one)
    Sinv = jnp.zeros((M, 3, 3), Hm.dtype)
    Sinv = Sinv.at[:, 0, 0].set(1.0 / sx).at[:, 1, 1].set(1.0 / sy).at[:, 2, 2].set(one)
    return S @ Hm @ Sinv


def warp_grid_flat_t(coords_h, Hm):
    # TODO(synk): warp_grid was not provided; standard projective warp assumed.
    # coords_h: (N,3) homogeneous pixel coords, Hm: (M,3,3) -> (M, 2, N)
    # (warped coords kept coordinate-major so the kernel block stays lane-dense).
    w = jnp.einsum('mij,nj->min', Hm, coords_h)                 # (M, 3, N)
    return w[:, :2, :] / w[:, 2:3, :]


# -------------------------- pure-JAX reference (torch-shaped) -----------------

def _ref_interval_loss(pf0, pf1, warped, sf, pos_margin, neg_margin, pos_lambda):
    eps = 1e-12
    TT, B, Cf, Hc, Wc = pf0.shape
    n0 = pf0 / jnp.maximum(jnp.linalg.norm(pf0, axis=2, keepdims=True), eps)
    n1 = pf1 / jnp.maximum(jnp.linalg.norm(pf1, axis=2, keepdims=True), eps)
    dot = jnp.einsum('tbcij,tbckl->tbijkl', n0, n1)
    dot = jnp.maximum(dot, 0.0)
    d = dot.reshape(TT, B, Hc, Wc, Hc * Wc)
    d = d / jnp.maximum(jnp.linalg.norm(d, axis=-1, keepdims=True), eps)
    d = d.reshape(TT, B, Hc * Wc, Hc, Wc)
    d = d / jnp.maximum(jnp.linalg.norm(d, axis=2, keepdims=True), eps)
    d = d.reshape(TT, B, Hc, Wc, Hc, Wc)
    pos = jnp.maximum(0.0, pos_margin - d)
    neg = jnp.maximum(0.0, d - neg_margin)
    jj, ii = jnp.meshgrid(jnp.arange(Wc), jnp.arange(Hc), indexing='xy')
    coords = jnp.stack([jj * sf, ii * sf], axis=-1).astype(jnp.float32)   # (Hc,Wc,2)
    diff = coords[None, None, None, None] - warped[:, :, :, :, None, None]
    dist = jnp.linalg.norm(diff, axis=-1)
    mask = (dist <= sf - 0.5).astype(jnp.float32)
    elem = pos_lambda * mask * pos + (1.0 - mask) * neg
    return jnp.mean(elem)


# ------------------------------ module wrapper --------------------------------

class DescriptorLossPallas:
    def __init__(self, target_size, scale_factor):
        self.target_size = target_size
        self.scale_factor = scale_factor
        self.positive_margin = 1.0
        self.negative_margin = 0.2
        self.pos_lambda = 0.05
        H, W = target_size
        assert H % scale_factor == 0 and W % scale_factor == 0
        self.Hc, self.Wc = H // scale_factor, W // scale_factor
        N = self.Hc * self.Wc
        sf = float(scale_factor)
        self.thr2 = (sf - 0.5) ** 2
        k = jnp.arange(N)
        cx = ((k % self.Wc) * sf).astype(jnp.float32)           # x = j*sf
        cy = ((k // self.Wc) * sf).astype(jnp.float32)          # y = i*sf
        ones = jnp.ones((N,), jnp.float32)
        # homogeneous (x, y, 1) cells for warping
        self.coords_h = jnp.stack([cx, cy, ones], axis=-1)      # (N, 3)
        # augmented target-coord rows consumed by the kernel's MXU mask test
        self.c_aug = jnp.stack(
            [cx, cy, ones, -0.5 * (cx * cx + cy * cy) + 0.25 * self.thr2], axis=0)

    def __call__(self, pred_features, rotation_vector, translation_vectors,
                 camera_nts, camera_depths, camera_Ks, camera_Kinvs,
                 origin_sizes, interval_list, use_pallas=True):
        T, B, C = rotation_vector.shape[:3]
        Cf, Hc, Wc = pred_features.shape[-3:]
        TC = T * C
        assert pred_features.shape[0] == TC
        assert self.Hc == Hc and self.Wc == Wc
        N = Hc * Wc
        sf = self.scale_factor
        pred_features = pred_features.astype(jnp.float32)

        def tcb(x):  # [T,B,C,...] -> [T*C, B, ...]
            perm = (0, 2, 1) + tuple(range(3, x.ndim))
            return jnp.transpose(x.astype(jnp.float32), perm).reshape((TC, B) + x.shape[3:])

        rot = tcb(rotation_vector)
        trans = tcb(translation_vectors)
        nts = tcb(camera_nts)
        deps = tcb(camera_depths)
        Ks = tcb(camera_Ks)
        Kinvs = tcb(camera_Kinvs)
        osz = tcb(origin_sizes)

        total = jnp.float32(0.0)
        for interval in interval_list:
            TT = TC - interval
            M = TT * B

            def take0(x):
                return x[:TT].reshape((M,) + x.shape[2:])

            def take1(x):
                return x[interval:].reshape((M,) + x.shape[2:])

            r0, t0 = take0(rot), take0(trans)
            r1, t1 = take1(rot), take1(trans)
            nt0, dep0 = take0(nts), take0(deps)
            K0, Kinv0, os0 = take0(Ks), take0(Kinvs), take0(osz)
            tsz = jnp.tile(jnp.asarray(self.target_size, jnp.float32)[None], (M, 1))

            H01 = get_image_transform(r0, t0, r1, t1, nt0, dep0, K0, Kinv0)
            H01s = scale_homography(H01, os0, tsz)
            warped_t = warp_grid_flat_t(self.coords_h, H01s)     # (M, 2, N)

            if use_pallas:
                # channel-major (M, Cf, N) straight from NCHW — no host transpose
                f0 = pred_features[:TT].reshape(M, Cf, N)
                f1 = pred_features[interval:].reshape(M, Cf, N)
                wx, wy = warped_t[:, 0, :], warped_t[:, 1, :]
                w_aug = jnp.stack(
                    [wx, wy, -0.5 * (wx * wx + wy * wy) + 0.25 * self.thr2,
                     jnp.ones_like(wx)], axis=1)                 # (M, 4, N)
                sums = descriptor_pair_loss_sums(
                    f0, f1, w_aug, self.c_aug,
                    pos_margin=self.positive_margin,
                    neg_margin=self.negative_margin,
                    pos_lambda=self.pos_lambda)
                total = total + jnp.sum(sums) / (M * N * N)
            else:
                pf0 = pred_features[:TT]                         # (TT,B,Cf,Hc,Wc)
                pf1 = pred_features[interval:]
                warped_r = jnp.transpose(warped_t, (0, 2, 1)).reshape(TT, B, Hc, Wc, 2)
                total = total + _ref_interval_loss(
                    pf0, pf1, warped_r, sf, self.positive_margin,
                    self.negative_margin, self.pos_lambda)
        return total / len(interval_list)


# ---------------------------------- main --------------------------------------

if __name__ == "__main__":
    key = jax.random.PRNGKey(0)
    T, B, C = 2, 2, 2          # C = pose "channel" count per time step
    Cf = 32                    # descriptor channels
    target_size = (32, 32)
    sf = 4
    Hc, Wc = target_size[0] // sf, target_size[1] // sf
    TC = T * C

    ks = jax.random.split(key, 4)
    pred_features = jax.random.normal(ks[0], (TC, B, Cf, Hc, Wc), jnp.float32)
    rotation_vector = 0.05 * jax.random.normal(ks[1], (T, B, C, 3), jnp.float32)
    translation_vectors = 0.1 * jax.random.normal(ks[2], (T, B, C, 3), jnp.float32)
    camera_nts = jnp.tile(jnp.array([0.0, 0.0, 1.0], jnp.float32).reshape(1, 1, 1, 1, 3),
                          (T, B, C, 1, 1))
    camera_depths = 4.0 + jax.random.uniform(ks[3], (T, B, C, 1), jnp.float32)
    Kmat = jnp.array([[60.0, 0.0, 32.0],
                      [0.0, 60.0, 32.0],
                      [0.0, 0.0, 1.0]], jnp.float32)
    camera_Ks = jnp.tile(Kmat.reshape(1, 1, 1, 3, 3), (T, B, C, 1, 1))
    camera_Kinvs = jnp.tile(jnp.linalg.inv(Kmat).reshape(1, 1, 1, 3, 3), (T, B, C, 1, 1))
    origin_sizes = jnp.tile(jnp.array([64.0, 64.0], jnp.float32).reshape(1, 1, 1, 2),
                            (T, B, C, 1))
    interval_list = [1, 2]

    loss_mod = DescriptorLossPallas(target_size, sf)
    loss = loss_mod(pred_features, rotation_vector, translation_vectors,
                    camera_nts, camera_depths, camera_Ks, camera_Kinvs,
                    origin_sizes, interval_list, use_pallas=True)
    loss = jax.block_until_ready(loss)

    ref = loss_mod(pred_features, rotation_vector, translation_vectors,
                   camera_nts, camera_depths, camera_Ks, camera_Kinvs,
                   origin_sizes, interval_list, use_pallas=False)
    ref = jax.block_until_ready(ref)

    lv, rv = float(loss), float(ref)
    assert jnp.isfinite(loss), "non-finite loss"
    # bf16 MXU correlation + bf16 hinge math give ~0.1-0.3% deviation vs the
    # f32 reference; 1% relative tolerance still catches structural bugs.
    assert abs(lv - rv) <= 1e-2 * abs(rv) + 1e-6, (lv, rv)
    print("KERNEL_OK")
</pallas_src>

<mosaic_0001>
module attributes {stable_mosaic.version = 11 : i64} {
  func.func @_desc_loss_kernel(%arg0: i32, %arg1: memref<3x32x64xbf16, #tpu.memory_space<vmem>>, %arg2: memref<3x32x64xbf16, #tpu.memory_space<vmem>>, %arg3: memref<3x4x64xf32, #tpu.memory_space<vmem>>, %arg4: memref<4x64xf32, #tpu.memory_space<vmem>>, %arg5: memref<3x1x1xf32, #tpu.memory_space<vmem>>) attributes {dimension_semantics = [#tpu.dimension_semantics<parallel>], iteration_bounds = array<i64: 2>, scalar_prefetch = 0 : i64, scratch_operands = 0 : i64, tpu.core_type = #tpu.core_type<tc>, window_params = [{transform_indices = @transform_0, window_bounds = array<i64: 3, 32, 64>}, {transform_indices = @transform_1, window_bounds = array<i64: 3, 32, 64>}, {transform_indices = @transform_2, window_bounds = array<i64: 3, 4, 64>}, {pipeline_mode = #tpu.pipeline_mode<synchronous>, transform_indices = @transform_3, window_bounds = array<i64: 4, 64>}, {transform_indices = @transform_4, window_bounds = array<i64: 3, 1, 1>}]} {
    %c0 = arith.constant 0 : index
    %c0_0 = arith.constant 0 : index
    %c0_1 = arith.constant 0 : index
    %0 = vector.load %arg1[%c0, %c0_0, %c0_1] : memref<3x32x64xbf16, #tpu.memory_space<vmem>>, vector<3x32x64xbf16>
    %c0_2 = arith.constant 0 : index
    %c0_3 = arith.constant 0 : index
    %c0_4 = arith.constant 0 : index
    %1 = vector.load %arg2[%c0_2, %c0_3, %c0_4] : memref<3x32x64xbf16, #tpu.memory_space<vmem>>, vector<3x32x64xbf16>
    %2 = arith.extf %0 : vector<3x32x64xbf16> to vector<3x32x64xf32>
    %3 = arith.mulf %2, %2 : vector<3x32x64xf32>
    %cst = arith.constant dense<0.000000e+00> : vector<3x64xf32>
    %4 = vector.multi_reduction <add>, %3, %cst [1] : vector<3x32x64xf32> to vector<3x64xf32>
    %5 = vector.shape_cast %4 : vector<3x64xf32> to vector<3x1x64xf32>
    %6 = arith.extf %1 : vector<3x32x64xbf16> to vector<3x32x64xf32>
    %7 = arith.mulf %6, %6 : vector<3x32x64xf32>
    %cst_5 = arith.constant dense<0.000000e+00> : vector<3x64xf32>
    %8 = vector.multi_reduction <add>, %7, %cst_5 [1] : vector<3x32x64xf32> to vector<3x64xf32>
    %9 = vector.shape_cast %8 : vector<3x64xf32> to vector<3x1x64xf32>
    %cst_6 = arith.constant 1.000000e-24 : f32
    %10 = vector.broadcast %cst_6 : f32 to vector<3x1x64xf32>
    %11 = arith.maximumf %5, %10 : vector<3x1x64xf32>
    %12 = math.rsqrt %11 : vector<3x1x64xf32>
    %13 = arith.truncf %12 : vector<3x1x64xf32> to vector<3x1x64xbf16>
    %14 = vector.broadcast %13 : vector<3x1x64xbf16> to vector<3x32x64xbf16>
    %15 = arith.mulf %0, %14 : vector<3x32x64xbf16>
    %cst_7 = arith.constant 1.000000e-24 : f32
    %16 = vector.broadcast %cst_7 : f32 to vector<3x1x64xf32>
    %17 = arith.maximumf %9, %16 : vector<3x1x64xf32>
    %18 = math.rsqrt %17 : vector<3x1x64xf32>
    %19 = arith.truncf %18 : vector<3x1x64xf32> to vector<3x1x64xbf16>
    %20 = vector.broadcast %19 : vector<3x1x64xbf16> to vector<3x32x64xbf16>
    %21 = arith.mulf %1, %20 : vector<3x32x64xbf16>
    "tpu.trace_start"() <{level = 10 : i32, message = "bcn,bcm->bnm"}> : () -> ()
    %cst_8 = arith.constant dense<0.000000e+00> : vector<3x64x64xf32>
    %22 = tpu.matmul %15, %21, %cst_8 {dimension_numbers = #tpu.dot_dimension_numbers<[1], [1], [2], [2], [0, 0, 0, 2, 1, 2], [0], [0]>} : vector<3x32x64xbf16>, vector<3x32x64xbf16>, vector<3x64x64xf32> -> vector<3x64x64xf32>
    "tpu.trace_stop"() : () -> ()
    %cst_9 = arith.constant 0.000000e+00 : f32
    %23 = vector.broadcast %cst_9 : f32 to vector<3x64x64xf32>
    %24 = arith.maximumf %22, %23 : vector<3x64x64xf32>
    %25 = arith.mulf %24, %24 : vector<3x64x64xf32>
    %cst_10 = arith.constant dense<0.000000e+00> : vector<3x64xf32>
    %26 = vector.multi_reduction <add>, %25, %cst_10 [2] : vector<3x64x64xf32> to vector<3x64xf32>
    %27 = vector.shape_cast %26 : vector<3x64xf32> to vector<3x64x1xf32>
    %cst_11 = arith.constant 1.000000e-24 : f32
    %28 = vector.broadcast %cst_11 : f32 to vector<3x64x1xf32>
    %29 = arith.maximumf %27, %28 : vector<3x64x1xf32>
    %30 = math.rsqrt %29 : vector<3x64x1xf32>
    %31 = arith.mulf %30, %30 : vector<3x64x1xf32>
    %32 = vector.broadcast %31 : vector<3x64x1xf32> to vector<3x64x64xf32>
    %33 = arith.mulf %25, %32 : vector<3x64x64xf32>
    %cst_12 = arith.constant dense<0.000000e+00> : vector<3x64xf32>
    %34 = vector.multi_reduction <add>, %33, %cst_12 [1] : vector<3x64x64xf32> to vector<3x64xf32>
    %35 = vector.shape_cast %34 : vector<3x64xf32> to vector<3x1x64xf32>
    %cst_13 = arith.constant 1.000000e-24 : f32
    %36 = vector.broadcast %cst_13 : f32 to vector<3x1x64xf32>
    %37 = arith.maximumf %35, %36 : vector<3x1x64xf32>
    %38 = math.rsqrt %37 : vector<3x1x64xf32>
    %39 = vector.broadcast %30 : vector<3x64x1xf32> to vector<3x64x64xf32>
    %40 = arith.mulf %24, %39 : vector<3x64x64xf32>
    %41 = vector.broadcast %38 : vector<3x1x64xf32> to vector<3x64x64xf32>
    %42 = arith.mulf %40, %41 : vector<3x64x64xf32>
    %c0_14 = arith.constant 0 : index
    %c0_15 = arith.constant 0 : index
    %c0_16 = arith.constant 0 : index
    %43 = vector.load %arg3[%c0_14, %c0_15, %c0_16] : memref<3x4x64xf32, #tpu.memory_space<vmem>>, vector<3x4x64xf32>
    %c0_17 = arith.constant 0 : index
    %c0_18 = arith.constant 0 : index
    %44 = vector.load %arg4[%c0_17, %c0_18] : memref<4x64xf32, #tpu.memory_space<vmem>>, vector<4x64xf32>
    %45 = vector.shape_cast %44 : vector<4x64xf32> to vector<1x4x64xf32>
    %46 = vector.shape_cast %45 : vector<1x4x64xf32> to vector<1x4x64xf32>
    %47 = vector.broadcast %46 : vector<1x4x64xf32> to vector<3x4x64xf32>
    "tpu.trace_start"() <{level = 10 : i32, message = "bxn,bxm->bnm"}> : () -> ()
    %cst_19 = arith.constant dense<0.000000e+00> : vector<3x64x64xf32>
    %48 = tpu.matmul %43, %47, %cst_19 {dimension_numbers = #tpu.dot_dimension_numbers<[1], [1], [2], [2], [0, 0, 0, 2, 1, 2], [0], [0]>, precision = #tpu.contract_precision<fp32>} : vector<3x4x64xf32>, vector<3x4x64xf32>, vector<3x64x64xf32> -> vector<3x64x64xf32>
    "tpu.trace_stop"() : () -> ()
    %cst_20 = arith.constant 5.000000e-02 : f32
    %49 = vector.broadcast %cst_20 : f32 to vector<3x64x64xf32>
    %50 = arith.mulf %49, %42 : vector<3x64x64xf32>
    %cst_21 = arith.constant 5.000000e-02 : f32
    %51 = vector.broadcast %cst_21 : f32 to vector<3x64x64xf32>
    %52 = arith.subf %51, %50 : vector<3x64x64xf32>
    %cst_22 = arith.constant 2.000000e-01 : f32
    %53 = vector.broadcast %cst_22 : f32 to vector<3x64x64xf32>
    %54 = arith.subf %42, %53 : vector<3x64x64xf32>
    %cst_23 = arith.constant 0.000000e+00 : f32
    %55 = vector.broadcast %cst_23 : f32 to vector<3x64x64xf32>
    %56 = arith.cmpf oge, %48, %55 : vector<3x64x64xf32>
    %57 = arith.select %56, %52, %54 : vector<3x64x64xi1>, vector<3x64x64xf32>
    %cst_24 = arith.constant 0.000000e+00 : f32
    %58 = vector.broadcast %cst_24 : f32 to vector<3x64x64xf32>
    %59 = arith.maximumf %57, %58 : vector<3x64x64xf32>
    %cst_25 = arith.constant dense<0.000000e+00> : vector<3x64xf32>
    %60 = vector.multi_reduction <add>, %59, %cst_25 [2] : vector<3x64x64xf32> to vector<3x64xf32>
    %61 = vector.shape_cast %60 : vector<3x64xf32> to vector<3x64x1xf32>
    %cst_26 = arith.constant dense<0.000000e+00> : vector<3x1xf32>
    %62 = vector.multi_reduction <add>, %61, %cst_26 [1] : vector<3x64x1xf32> to vector<3x1xf32>
    %63 = vector.shape_cast %62 : vector<3x1xf32> to vector<3x1x1xf32>
    %c0_27 = arith.constant 0 : index
    %c0_28 = arith.constant 0 : index
    %c0_29 = arith.constant 0 : index
    %64 = vector.load %arg5[%c0_27, %c0_28, %c0_29] : memref<3x1x1xf32, #tpu.memory_space<vmem>>, vector<3x1x1xf32>
    tpu.vector_store %arg5[%c0_27, %c0_28, %c0_29], %63 {strides = array<i32>} : memref<3x1x1xf32, #tpu.memory_space<vmem>>, vector<3x1x1xf32>,
    return
  }
  func.func @transform_0(%arg0: i32) -> (i32, i32, i32) {
    %c0_i32 = arith.constant 0 : i32
    %c0_i32_0 = arith.constant 0 : i32
    %c0_i32_1 = arith.constant 0 : i32
    return %arg0, %c0_i32, %c0_i32_0 : i32, i32, i32
  }
  func.func @transform_1(%arg0: i32) -> (i32, i32, i32) {
    %c0_i32 = arith.constant 0 : i32
    %c0_i32_0 = arith.constant 0 : i32
    %c0_i32_1 = arith.constant 0 : i32
    return %arg0, %c0_i32, %c0_i32_0 : i32, i32, i32
  }
  func.func @transform_2(%arg0: i32) -> (i32, i32, i32) {
    %c0_i32 = arith.constant 0 : i32
    %c0_i32_0 = arith.constant 0 : i32
    %c0_i32_1 = arith.constant 0 : i32
    return %arg0, %c0_i32, %c0_i32_0 : i32, i32, i32
  }
  func.func @transform_3(%arg0: i32) -> (i32, i32) {
    %c0_i32 = arith.constant 0 : i32
    %c0_i32_0 = arith.constant 0 : i32
    %c0_i32_1 = arith.constant 0 : i32
    return %c0_i32, %c0_i32_0 : i32, i32
  }
  func.func @transform_4(%arg0: i32) -> (i32, i32, i32) {
    %c0_i32 = arith.constant 0 : i32
    %c0_i32_0 = arith.constant 0 : i32
    %c0_i32_1 = arith.constant 0 : i32
    return %arg0, %c0_i32, %c0_i32_0 : i32, i32, i32
  }
}

</mosaic_0001>

<llo_original>
// kernel: tpu_custom_call.1
$region0: #{tpu_custom_call.1}
  #allocation0 [shape = 'u32[]', space=smem, size = 0x4, offset = 0x4, fixed_abs, tag = 'smem constant byte address 0x4 - core index']
  #allocation1 [shape = 'u32[144,128]{1,0:T(1,128)}', space=vmem, size = 0x12000, scoped, tag = 'internal scratch']
  %s0 = inlined_call_operand.hbm [shape: bf16[6,32,64], index: 0, kind: input, shape index: {}]
  %s1 = inlined_call_operand.hbm [shape: bf16[6,32,64], index: 1, kind: input, shape index: {}]
  %s2 = inlined_call_operand.hbm [shape: f32[6,4,64], index: 2, kind: input, shape index: {}]
  %s3 = inlined_call_operand.vmem [shape: f32[4,64], index: 3, kind: input, shape index: {}]
  %s4 = inlined_call_operand.vmem [shape: f32[6,1,1], index: 4, kind: output, shape index: {}]
  %s5 = sld [smem:[#allocation0]]
  $region61: #{tpu_custom_call.1} parent=0
    _
  %s7 = ssub.s32 1, %s5
  %s8 = scalar_select 0, %s7, %s5
  $region1: #{tpu_custom_call.1} parent=0
    #allocation2 [shape = 'u8[49152]{0}', space=vmem, size = 0xc000, scoped, tag = 'input window, operand 0']
    #allocation3 [shape = 's32[2]{0}', space=sflag, size = 0x8, scoped, tag = 'scoped memory for tpu_custom_call.1']
    #allocation4 [shape = 'u8[49152]{0}', space=vmem, size = 0xc000, scoped, tag = 'input window, operand 1']
    #allocation5 [shape = 's32[2]{0}', space=sflag, size = 0x8, scoped, tag = 'scoped memory for tpu_custom_call.1']
    #allocation6 [shape = 'u8[12288]{0}', space=vmem, size = 0x3000, scoped, tag = 'input window, operand 2']
    %9 = vsyncpa [#allocation3], 0
    %s10 = scalar_lea.sflag [#allocation3], 1
    %11 = vsyncpa %s10, 0
    %12 = vsyncpa [#allocation5], 0
    %s13 = scalar_lea.sflag [#allocation5], 1
    %14 = vsyncpa %s13, 0
    loop: start=0, step=1, limit=4
    $region2: #{tpu_custom_call.1} parent=1 // loop_pre_header
      _
    $region3: #{tpu_custom_call.1} parent=1 // loop_header
      %s16 = sphi 0, %s20
      %p17 = scmp.ge.s32.totalorder %s16, 4
      %s26 = sphi 0, %s28
      %s29 = sphi 0, %s26
      %s30 = sphi 0, %s29
      %s46 = sphi 0, %s30
      %s52 = sphi 0, %s54
      %s55 = sphi 0, %s52
      %s56 = sphi 0, %s55
      %s72 = sphi 0, %s56
      %s78 = sphi 0, %s80
      %s81 = sphi 0, %s78
      %s82 = sphi 0, %s81
      %s98 = sphi 0, %s82
      %s102 = sphi 0, %s102
      %s104 = sphi 0, %s102
      %s105 = sphi 0, %s104
      %s119 = sphi 0, %s105
      %s125 = sphi 0, %s127
      %s128 = sphi 0, %s125
      %s129 = sphi 0, %s128
      %s145 = sphi 0, %s129
    $region4: #{tpu_custom_call.1} parent=1 // loop_header_branch
      %19 = sbr.rel (%p17) target = $region8
    $region5: #{tpu_custom_call.1} parent=1 // loop_body
      %s21 = ssub.s32 %s16, 1
      %s22 = ssub.s32 %s16, 2
      %s23 = sadd.s32 %s16, 1
      %s24 = ssub.s32 %s16, %s23
      %p25 = scmp.eq.s32.totalorder %s24, 0
      %s27 = sadd.s32 %s26, 1
      %s28 = scalar_select %p25, %s26, %s27
      %p31 = pneg %p25
      %p32 = scmp.eq.s32.totalorder %s16, 1
      %p33 = por %p31, %p32
      %p34 = scmp.ne.s32.totalorder %s26, %s29
      %p35 = scmp.eq.s32.totalorder %s16, 0
      %p36 = por %p34, %p35
      %p37 = scmp.ne.s32.totalorder %s26, %s29
      %p38 = scmp.eq.s32.totalorder %s21, 1
      %p39 = por %p37, %p38
      %p40 = scmp.ne.s32.totalorder %s29, %s30
      %p41 = scmp.eq.s32.totalorder %s21, 0
      %p42 = por %p40, %p41
      %p43 = scmp.ne.s32.totalorder %s29, %s30
      %p44 = scmp.eq.s32.totalorder %s22, 1
      %p45 = por %p43, %p44
      %p47 = scmp.ne.s32.totalorder %s30, %s46
      %p48 = scmp.eq.s32.totalorder %s22, 0
      %p49 = por %p47, %p48
      %s50 = ssub.s32 %s16, %s23
      %p51 = scmp.eq.s32.totalorder %s50, 0
      %s53 = sadd.s32 %s52, 1
      %s54 = scalar_select %p51, %s52, %s53
      %p57 = pneg %p51
      %p58 = scmp.eq.s32.totalorder %s16, 1
      %p59 = por %p57, %p58
      %p60 = scmp.ne.s32.totalorder %s52, %s55
      %p61 = scmp.eq.s32.totalorder %s16, 0
      %p62 = por %p60, %p61
      %p63 = scmp.ne.s32.totalorder %s52, %s55
      %p64 = scmp.eq.s32.totalorder %s21, 1
      %p65 = por %p63, %p64
      %p66 = scmp.ne.s32.totalorder %s55, %s56
      %p67 = scmp.eq.s32.totalorder %s21, 0
      %p68 = por %p66, %p67
      %p69 = scmp.ne.s32.totalorder %s55, %s56
      %p70 = scmp.eq.s32.totalorder %s22, 1
      %p71 = por %p69, %p70
      %p73 = scmp.ne.s32.totalorder %s56, %s72
      %p74 = scmp.eq.s32.totalorder %s22, 0
      %p75 = por %p73, %p74
      %s76 = ssub.s32 %s16, %s23
      %p77 = scmp.eq.s32.totalorder %s76, 0
      %s79 = sadd.s32 %s78, 1
      %s80 = scalar_select %p77, %s78, %s79
      %p83 = pneg %p77
      %p84 = scmp.eq.s32.totalorder %s16, 1
      %p85 = por %p83, %p84
      %p86 = scmp.ne.s32.totalorder %s78, %s81
      %p87 = scmp.eq.s32.totalorder %s16, 0
      %p88 = por %p86, %p87
      %p89 = scmp.ne.s32.totalorder %s78, %s81
      %p90 = scmp.eq.s32.totalorder %s21, 1
      %p91 = por %p89, %p90
      %p92 = scmp.ne.s32.totalorder %s81, %s82
      %p93 = scmp.eq.s32.totalorder %s21, 0
      %p94 = por %p92, %p93
      %p95 = scmp.ne.s32.totalorder %s81, %s82
      %p96 = scmp.eq.s32.totalorder %s22, 1
      %p97 = por %p95, %p96
      %p99 = scmp.ne.s32.totalorder %s82, %s98
      %p100 = scmp.eq.s32.totalorder %s22, 0
      %p101 = por %p99, %p100
      %s103 = sadd.s32 %s102, 1
      %p106 = scmp.eq.s32.totalorder %s16, 1
      %p107 = scmp.ne.s32.totalorder %s102, %s104
      %p108 = scmp.eq.s32.totalorder %s16, 0
      %p109 = por %p107, %p108
      %p110 = scmp.ne.s32.totalorder %s102, %s104
      %p111 = scmp.eq.s32.totalorder %s21, 1
      %p112 = por %p110, %p111
      %p113 = scmp.ne.s32.totalorder %s104, %s105
      %p114 = scmp.eq.s32.totalorder %s21, 0
      %p115 = por %p113, %p114
      %p116 = scmp.ne.s32.totalorder %s104, %s105
      %p117 = scmp.eq.s32.totalorder %s22, 1
      %p118 = por %p116, %p117
      %p120 = scmp.ne.s32.totalorder %s105, %s119
      %p121 = scmp.eq.s32.totalorder %s22, 0
      %p122 = por %p120, %p121
      %s123 = ssub.s32 %s16, %s23
      %p124 = scmp.eq.s32.totalorder %s123, 0
      %s126 = sadd.s32 %s125, 1
      %s127 = scalar_select %p124, %s125, %s126
      %p130 = pneg %p124
      %p131 = scmp.eq.s32.totalorder %s16, 1
      %p132 = por %p130, %p131
      %p133 = scmp.ne.s32.totalorder %s125, %s128
      %p134 = scmp.eq.s32.totalorder %s16, 0
      %p135 = por %p133, %p134
      %p136 = scmp.ne.s32.totalorder %s125, %s128
      %p137 = scmp.eq.s32.totalorder %s21, 1
      %p138 = por %p136, %p137
      %p139 = scmp.ne.s32.totalorder %s128, %s129
      %p140 = scmp.eq.s32.totalorder %s21, 0
      %p141 = por %p139, %p140
      %p142 = scmp.ne.s32.totalorder %s128, %s129
      %p143 = scmp.eq.s32.totalorder %s22, 1
      %p144 = por %p142, %p143
      %p146 = scmp.ne.s32.totalorder %s129, %s145
      %p147 = scmp.eq.s32.totalorder %s22, 0
      %p148 = por %p146, %p147
      %p149 = scmp.le.s32.totalorder 1, %s16
      %p150 = scmp.lt.s32.totalorder %s16, 3
      %p151 = pnand %p149, %p150
      %p152 = pneg %p151
      // Predicated region
      $region9: #{tpu_custom_call.1} parent=5 // pred_check
        _
      $region10: #{tpu_custom_call.1} parent=5 // pred_check_branch
        %154 = sbr.rel (%p151) target = $region12
      $region11: #{tpu_custom_call.1} parent=5 // pred_region
        %s155 = ssub.s32 %s16, 1
        // Predicated region
        $region13: #{tpu_custom_call.1} parent=11 // pred_check
          %p156 = pneg %p115
        $region14: #{tpu_custom_call.1} parent=11 // pred_check_branch
          %158 = sbr.rel (%p156) target = $region16
        $region15: #{tpu_custom_call.1} parent=11 // pred_region
          _
        $region16: #{tpu_custom_call.1} parent=11 // pred_fallthru
          _
      $region12: #{tpu_custom_call.1} parent=5 // pred_fallthru
        _
      %p159 = scmp.lt.s32.totalorder %s16, 2
      // Predicated region
      $region17: #{tpu_custom_call.1} parent=5 // pred_check
        %p160 = pneg %p159
      $region18: #{tpu_custom_call.1} parent=5 // pred_check_branch
        %162 = sbr.rel (%p160) target = $region20
      $region19: #{tpu_custom_call.1} parent=5 // pred_region
        // Predicated region
        $region21: #{tpu_custom_call.1} parent=19 // pred_check
          %p163 = pneg %p36
        $region22: #{tpu_custom_call.1} parent=19 // pred_check_branch
          %165 = sbr.rel (%p163) target = $region24
        $region23: #{tpu_custom_call.1} parent=19 // pred_region
          %s166 = sand.u32 %s26, 1
          %s167 = scalar_lea.sflag [#allocation3], %s166
          %s168 = sand.u32 %s26, 1
          %s169 = smul.addr %s168, 48
          %s170 = scalar_lea.vmem [#allocation2], %s169
          %s171 = smul.u32 3, %s16
          %s173 = ssub.s32 768, 768
          %174 = vsyncadd %s167, %s173
          %s175 = smul.addr %s171, 4
          %s176 = smul.addr %s175, 64
          %s177 = scalar_lea.hbm %s0, %s176
          %s178 = sshll.u32 %s170, 4
          %s179 = int_to_ptr.vmem [resolvable:$true] %s178
          %184 = dma.hbm_to_vmem [thread:$0]  %s177, 768, %s179, %s167, 64, 64, 4
        $region24: #{tpu_custom_call.1} parent=19 // pred_fallthru
          _
        // Predicated region
        $region25: #{tpu_custom_call.1} parent=19 // pred_check
          %p185 = pneg %p62
        $region26: #{tpu_custom_call.1} parent=19 // pred_check_branch
          %187 = sbr.rel (%p185) target = $region28
        $region27: #{tpu_custom_call.1} parent=19 // pred_region
          %s188 = sand.u32 %s16, 1
          %s189 = scalar_lea.sflag [#allocation5], %s188
          %s190 = sand.u32 %s52, 1
          %s191 = smul.addr %s190, 48
          %s192 = scalar_lea.vmem [#allocation4], %s191
          %s193 = smul.u32 3, %s16
          %s195 = ssub.s32 768, 768
          %196 = vsyncadd %s189, %s195
          %s197 = smul.addr %s193, 4
          %s198 = smul.addr %s197, 64
          %s199 = scalar_lea.hbm %s1, %s198
          %s200 = sshll.u32 %s192, 4
          %s201 = int_to_ptr.vmem [resolvable:$true] %s200
          %206 = dma.hbm_to_vmem [thread:$0]  %s199, 768, %s201, %s189, 64, 64, 4
        $region28: #{tpu_custom_call.1} parent=19 // pred_fallthru
          _
        // Predicated region
        $region29: #{tpu_custom_call.1} parent=19 // pred_check
          %p207 = pneg %p88
        $region30: #{tpu_custom_call.1} parent=19 // pred_check_branch
          %209 = sbr.rel (%p207) target = $region32
        $region31: #{tpu_custom_call.1} parent=19 // pred_region
          %s210 = sand.u32 %s16, 1
          %s211 = scalar_lea.sflag [#allocation5], %s210
          %s212 = sand.u32 %s78, 1
          %s213 = smul.addr %s212, 12
          %s214 = scalar_lea.vmem [#allocation6], %s213
          %s215 = smul.u32 3, %s16
          %s217 = ssub.s32 192, 192
          %218 = vsyncadd %s211, %s217
          %s219 = smul.addr %s215, 64
          %s220 = scalar_lea.hbm %s2, %s219
          %s221 = sshll.u32 %s214, 4
          %s222 = int_to_ptr.vmem [resolvable:$true] %s221
          %227 = dma.hbm_to_vmem [thread:$0]  %s220, 192, %s222, %s211, 64, 64, 4
        $region32: #{tpu_custom_call.1} parent=19 // pred_fallthru
          _
      $region20: #{tpu_custom_call.1} parent=5 // pred_fallthru
        _
      %p228 = scmp.le.s32.totalorder 1, %s16
      %p229 = scmp.lt.s32.totalorder %s16, 3
      %p230 = pnand %p228, %p229
      %p231 = pneg %p230
      // Predicated region
      $region33: #{tpu_custom_call.1} parent=5 // pred_check
        _
      $region34: #{tpu_custom_call.1} parent=5 // pred_check_branch
        %233 = sbr.rel (%p230) target = $region36
      $region35: #{tpu_custom_call.1} parent=5 // pred_region
        %s234 = ssub.s32 %s16, 1
        %s235 = sand.u32 %s29, 1
        %s236 = scalar_lea.sflag [#allocation3], %s235
        %s237 = sand.u32 %s29, 1
        %s238 = smul.addr %s237, 48
        %s239 = scalar_lea.vmem [#allocation2], %s238
        // Predicated region
        $region37: #{tpu_custom_call.1} parent=35 // pred_check
          %p240 = pneg %p42
        $region38: #{tpu_custom_call.1} parent=35 // pred_check_branch
          %242 = sbr.rel (%p240) target = $region40
        $region39: #{tpu_custom_call.1} parent=35 // pred_region
          %243 = dma.done %s236, 768
        $region40: #{tpu_custom_call.1} parent=35 // pred_fallthru
          _
        %s244 = sand.u32 %s21, 1
        %s245 = scalar_lea.sflag [#allocation5], %s244
        %s246 = sand.u32 %s55, 1
        %s247 = smul.addr %s246, 48
        %s248 = scalar_lea.vmem [#allocation4], %s247
        // Predicated region
        $region41: #{tpu_custom_call.1} parent=35 // pred_check
          %p249 = pneg %p68
        $region42: #{tpu_custom_call.1} parent=35 // pred_check_branch
          %251 = sbr.rel (%p249) target = $region44
        $region43: #{tpu_custom_call.1} parent=35 // pred_region
          %252 = dma.done %s245, 768
        $region44: #{tpu_custom_call.1} parent=35 // pred_fallthru
          _
        %s253 = sand.u32 %s21, 1
        %s254 = scalar_lea.sflag [#allocation5], %s253
        %s255 = sand.u32 %s81, 1
        %s256 = smul.addr %s255, 12
        %s257 = scalar_lea.vmem [#allocation6], %s256
        // Predicated region
        $region45: #{tpu_custom_call.1} parent=35 // pred_check
          %p258 = pneg %p94
        $region46: #{tpu_custom_call.1} parent=35 // pred_check_branch
          %260 = sbr.rel (%p258) target = $region48
        $region47: #{tpu_custom_call.1} parent=35 // pred_region
          %261 = dma.done %s254, 192
        $region48: #{tpu_custom_call.1} parent=35 // pred_fallthru
          _
        %s262 = sand.u32 %s29, 1
        %s263 = scalar_lea.sflag [#allocation3], %s262
        %s264 = sand.u32 %s29, 1
        %s265 = smul.addr %s264, 48
        %s266 = scalar_lea.vmem [#allocation2], %s265
        %p267 = pneg %p42
        %p268 = pneg %p39
        %s269 = sand.u32 %s21, 1
        %s270 = scalar_lea.sflag [#allocation5], %s269
        %s271 = sand.u32 %s55, 1
        %s272 = smul.addr %s271, 48
        %s273 = scalar_lea.vmem [#allocation4], %s272
        %p274 = pneg %p68
        %p275 = pneg %p65
        %s276 = sand.u32 %s21, 1
        %s277 = scalar_lea.sflag [#allocation5], %s276
        %s278 = sand.u32 %s81, 1
        %s279 = smul.addr %s278, 12
        %s280 = scalar_lea.vmem [#allocation6], %s279
        %p281 = pneg %p94
        %p282 = pneg %p91
        %p283 = pneg %p115
        %p284 = pneg %p112
        %p285 = pneg %p141
        %p286 = pneg %p138
        %s287 = smul.u32 3, %s21
        %p288 = scmp.lt.s32.totalorder %s287, 5
        %s289 = scalar_select %p288, %s287, 5
        %s290 = scalar_lea.vmem %s4, %s289
        %s291 = smul.u32 3, %s21
        %s292 = smul.u32 3, %s21
        %s293 = smul.u32 3, %s21
        %s294 = smul.u32 3, %s21
        %p295 = scmp.lt.s32.totalorder %s294, 5
        %s296 = scalar_select %p295, %s294, 5
        %s297 = scalar_lea.vmem %s4, %s296
        %s298 = smul.u32 3, %s21
        %v300 = vld [vmem:[%s239] sm:$0xf]
        %v301 = vld [vmem:[%s239 + $0x4] sm:$0xf]
        %v302 = vld [vmem:[%s239 + $0x8] sm:$0xf]
        %v303 = vld [vmem:[%s239 + $0xc] sm:$0xf]
        %v304 = vld [vmem:[%s239 + $0x10] sm:$0xf]
        %v305 = vld [vmem:[%s239 + $0x14] sm:$0xf]
        %v306 = vld [vmem:[%s239 + $0x18] sm:$0xf]
        %v307 = vld [vmem:[%s239 + $0x1c] sm:$0xf]
        %v308 = vld [vmem:[%s239 + $0x20] sm:$0xf]
        %v309 = vld [vmem:[%s239 + $0x24] sm:$0xf]
        %v310 = vld [vmem:[%s239 + $0x28] sm:$0xf]
        %v311 = vld [vmem:[%s239 + $0x2c] sm:$0xf]
        %v312 = vld [vmem:[%s248] sm:$0xf]
        %v313 = vld [vmem:[%s248 + $0x4] sm:$0xf]
        %v314 = vld [vmem:[%s248 + $0x8] sm:$0xf]
        %v315 = vld [vmem:[%s248 + $0xc] sm:$0xf]
        %v316 = vld [vmem:[%s248 + $0x10] sm:$0xf]
        %v317 = vld [vmem:[%s248 + $0x14] sm:$0xf]
        %v318 = vld [vmem:[%s248 + $0x18] sm:$0xf]
        %v319 = vld [vmem:[%s248 + $0x1c] sm:$0xf]
        %v320 = vld [vmem:[%s248 + $0x20] sm:$0xf]
        %v321 = vld [vmem:[%s248 + $0x24] sm:$0xf]
        %v322 = vld [vmem:[%s248 + $0x28] sm:$0xf]
        %v323 = vld [vmem:[%s248 + $0x2c] sm:$0xf]
        %v324 = vunpack.c.l.bf16 %v300
        %v325 = vunpack.c.l.bf16 %v301
        %v326 = vunpack.c.l.bf16 %v302
        %v327 = vunpack.c.l.bf16 %v303
        %v328 = vunpack.c.l.bf16 %v304
        %v329 = vunpack.c.l.bf16 %v305
        %v330 = vunpack.c.l.bf16 %v306
        %v331 = vunpack.c.l.bf16 %v307
        %v332 = vunpack.c.l.bf16 %v308
        %v333 = vunpack.c.l.bf16 %v309
        %v334 = vunpack.c.l.bf16 %v310
        %v335 = vunpack.c.l.bf16 %v311
        %v336 = vmul.f32 %v324, %v324
        %v337 = vmul.f32 %v325, %v325
        %v338 = vmul.f32 %v326, %v326
        %v339 = vmul.f32 %v327, %v327
        %v340 = vmul.f32 %v328, %v328
        %v341 = vmul.f32 %v329, %v329
        %v342 = vmul.f32 %v330, %v330
        %v343 = vmul.f32 %v331, %v331
        %v344 = vmul.f32 %v332, %v332
        %v345 = vmul.f32 %v333, %v333
        %v346 = vmul.f32 %v334, %v334
        %v347 = vmul.f32 %v335, %v335
        %vm348 = vcmask 523264
        %v349 = vsel %vm348, %v336, 0.0
        %v350 = vsel %vm348, %v337, 0.0
        %v351 = vadd.f32 %v349, %v350
        %v352 = vsel %vm348, %v338, 0.0
        %v353 = vadd.f32 %v351, %v352
        %v354 = vsel %vm348, %v339, 0.0
        %v355 = vadd.f32 %v353, %v354
        %v356 = vrot.slane %v355, 4
        %v357 = vadd.f32 %v355, %v356
        %v358 = vrot.slane %v357, 2
        %v359 = vadd.f32 %v357, %v358
        %v360 = vrot.slane %v359, 1
        %v361 = vadd.f32 %v359, %v360
        %v362 = vsel %vm348, %v340, 0.0
        %v363 = vsel %vm348, %v341, 0.0
        %v364 = vadd.f32 %v362, %v363
        %v365 = vsel %vm348, %v342, 0.0
        %v366 = vadd.f32 %v364, %v365
        %v367 = vsel %vm348, %v343, 0.0
        %v368 = vadd.f32 %v366, %v367
        %v369 = vrot.slane %v368, 4
        %v370 = vadd.f32 %v368, %v369
        %v371 = vrot.slane %v370, 2
        %v372 = vadd.f32 %v370, %v371
        %v373 = vrot.slane %v372, 1
        %v374 = vadd.f32 %v372, %v373
        %v375 = vsel %vm348, %v344, 0.0
        %v376 = vsel %vm348, %v345, 0.0
        %v377 = vadd.f32 %v375, %v376
        %v378 = vsel %vm348, %v346, 0.0
        %v379 = vadd.f32 %v377, %v378
        %v380 = vsel %vm348, %v347, 0.0
        %v381 = vadd.f32 %v379, %v380
        %v382 = vrot.slane %v381, 4
        %v383 = vadd.f32 %v381, %v382
        %v384 = vrot.slane %v383, 2
        %v385 = vadd.f32 %v383, %v384
        %v386 = vrot.slane %v385, 1
        %v387 = vadd.f32 %v385, %v386
        %v388 = vunpack.c.l.bf16 %v312
        %v389 = vunpack.c.l.bf16 %v313
        %v390 = vunpack.c.l.bf16 %v314
        %v391 = vunpack.c.l.bf16 %v315
        %v392 = vunpack.c.l.bf16 %v316
        %v393 = vunpack.c.l.bf16 %v317
        %v394 = vunpack.c.l.bf16 %v318
        %v395 = vunpack.c.l.bf16 %v319
        %v396 = vunpack.c.l.bf16 %v320
        %v397 = vunpack.c.l.bf16 %v321
        %v398 = vunpack.c.l.bf16 %v322
        %v399 = vunpack.c.l.bf16 %v323
        %v400 = vmul.f32 %v388, %v388
        %v401 = vmul.f32 %v389, %v389
        %v402 = vmul.f32 %v390, %v390
        %v403 = vmul.f32 %v391, %v391
        %v404 = vmul.f32 %v392, %v392
        %v405 = vmul.f32 %v393, %v393
        %v406 = vmul.f32 %v394, %v394
        %v407 = vmul.f32 %v395, %v395
        %v408 = vmul.f32 %v396, %v396
        %v409 = vmul.f32 %v397, %v397
        %v410 = vmul.f32 %v398, %v398
        %v411 = vmul.f32 %v399, %v399
        %v412 = vsel %vm348, %v400, 0.0
        %v413 = vsel %vm348, %v401, 0.0
        %v414 = vadd.f32 %v412, %v413
        %v415 = vsel %vm348, %v402, 0.0
        %v416 = vadd.f32 %v414, %v415
        %v417 = vsel %vm348, %v403, 0.0
        %v418 = vadd.f32 %v416, %v417
        %v419 = vrot.slane %v418, 4
        %v420 = vadd.f32 %v418, %v419
        %v421 = vrot.slane %v420, 2
        %v422 = vadd.f32 %v420, %v421
        %v423 = vrot.slane %v422, 1
        %v424 = vadd.f32 %v422, %v423
        %v425 = vsel %vm348, %v404, 0.0
        %v426 = vsel %vm348, %v405, 0.0
        %v427 = vadd.f32 %v425, %v426
        %v428 = vsel %vm348, %v406, 0.0
        %v429 = vadd.f32 %v427, %v428
        %v430 = vsel %vm348, %v407, 0.0
        %v431 = vadd.f32 %v429, %v430
        %v432 = vrot.slane %v431, 4
        %v433 = vadd.f32 %v431, %v432
        %v434 = vrot.slane %v433, 2
        %v435 = vadd.f32 %v433, %v434
        %v436 = vrot.slane %v435, 1
        %v437 = vadd.f32 %v435, %v436
        %v438 = vsel %vm348, %v408, 0.0
        %v439 = vsel %vm348, %v409, 0.0
        %v440 = vadd.f32 %v438, %v439
        %v441 = vsel %vm348, %v410, 0.0
        %v442 = vadd.f32 %v440, %v441
        %v443 = vsel %vm348, %v411, 0.0
        %v444 = vadd.f32 %v442, %v443
        %v445 = vrot.slane %v444, 4
        %v446 = vadd.f32 %v444, %v445
        %v447 = vrot.slane %v446, 2
        %v448 = vadd.f32 %v446, %v447
        %v449 = vrot.slane %v448, 1
        %v450 = vadd.f32 %v448, %v449
        %v451 = vmax.f32 %v361, 1e-24
        %v452 = vmax.f32 %v374, 1e-24
        %v453 = vmax.f32 %v387, 1e-24
        %v454 = vrsqrt.pop %v451
        %v455 = vrsqrt.pop %v452
        %v456 = vrsqrt.pop %v453
        %v457 = vpack.c.bf16 %v454, %v454
        %v458 = vpack.c.bf16 %v455, %v455
        %v459 = vpack.c.bf16 %v456, %v456
        %v463 = vunpack.c.l.b16 %v457
        %v464 = vunpack.c.l.b16 %v458
        %v465 = vunpack.c.l.b16 %v459
        %v466 = vpack.c.b16 %v463, %v463
        %v467 = vpack.c.b16 %v464, %v464
        %v468 = vpack.c.b16 %v465, %v465
        %v472 = vmul.bf16 %v300, %v466
        %v473 = vmul.bf16 %v301, %v466
        %v474 = vmul.bf16 %v302, %v466
        %v475 = vmul.bf16 %v303, %v466
        %v476 = vmul.bf16 %v304, %v467
        %v477 = vmul.bf16 %v305, %v467
        %v478 = vmul.bf16 %v306, %v467
        %v479 = vmul.bf16 %v307, %v467
        %v480 = vmul.bf16 %v308, %v468
        %v481 = vmul.bf16 %v309, %v468
        %v482 = vmul.bf16 %v310, %v468
        %v483 = vmul.bf16 %v311, %v468
        %v484 = vmax.f32 %v424, 1e-24
        %v485 = vmax.f32 %v437, 1e-24
        %v486 = vmax.f32 %v450, 1e-24
        %v487 = vrsqrt.pop %v484
        %v488 = vrsqrt.pop %v485
        %v489 = vrsqrt.pop %v486
        %v490 = vpack.c.bf16 %v487, %v487
        %v491 = vpack.c.bf16 %v488, %v488
        %v492 = vpack.c.bf16 %v489, %v489
        %v496 = vunpack.c.l.b16 %v490
        %v497 = vunpack.c.l.b16 %v491
        %v498 = vunpack.c.l.b16 %v492
        %v499 = vpack.c.b16 %v496, %v496
        %v500 = vpack.c.b16 %v497, %v497
        %v501 = vpack.c.b16 %v498, %v498
        %v505 = vmul.bf16 %v312, %v499
        %v506 = vmul.bf16 %v313, %v499
        %v507 = vmul.bf16 %v314, %v499
        %v508 = vmul.bf16 %v315, %v499
        %v509 = vmul.bf16 %v316, %v500
        %v510 = vmul.bf16 %v317, %v500
        %v511 = vmul.bf16 %v318, %v500
        %v512 = vmul.bf16 %v319, %v500
        %v513 = vmul.bf16 %v320, %v501
        %v514 = vmul.bf16 %v321, %v501
        %v515 = vmul.bf16 %v322, %v501
        %v516 = vmul.bf16 %v323, %v501
        %v521 = vunpack.c.l.b16 %v472
        %v522 = vunpack.c.l.b16 %v473
        %v523 = vunpack.c.l.b16 %v474
        %v524 = vunpack.c.l.b16 %v475
        %v525 = vpack.c.b16 %v522, %v521
        %v526 = vpack.c.b16 %v524, %v523
        %529 = vxpose.xlu0.c.b16.start [1/8] %v525, 128
        %530 = vxpose.xlu0.c.b16.cont [2/8] %v526, 128
        %531 = vxpose.xlu0.c.b16.cont [3/8] 0, 128
        %532 = vxpose.xlu0.c.b16.cont [4/8] 0, 128
        %533 = vxpose.xlu0.c.b16.cont [5/8] 0, 128
        %534 = vxpose.xlu0.c.b16.cont [6/8] 0, 128
        %535 = vxpose.xlu0.c.b16.cont [7/8] 0, 128
        %536 = vxpose.xlu0.c.b16.end [8/8] 0, 128
        %v537 = vpop.trf.xlu0
        %v538 = vpop.trf.xlu0
        %v539 = vpop.trf.xlu0
        %v540 = vpop.trf.xlu0
        %v541 = vpop.trf.xlu0
        %v542 = vpop.trf.xlu0
        %v543 = vpop.trf.xlu0
        %v544 = vpop.trf.xlu0
        %v549 = vunpack.c.l.b16 %v505
        %v550 = vunpack.c.l.b16 %v506
        %v551 = vunpack.c.l.b16 %v507
        %v552 = vunpack.c.l.b16 %v508
        %v553 = vpack.c.b16 %v550, %v549
        %v554 = vpack.c.b16 %v552, %v551
        %vm557 = vcmask 261120
        %v559 = vsel %vm557, %v537, 0
        %v562 = vsel %vm557, %v538, 0
        %v565 = vsel %vm557, %v539, 0
        %v568 = vsel %vm557, %v540, 0
        %570 = vmatprep.subr.bf16.mxu0 0
        %571 = vmatpush1.bf16.msra.mxu0 0
        %572 = vmatprep.subr.bf16.mxu0 0
        %573 = vmatpush1.bf16.msra.mxu0 0
        %574 = vmatprep.subr.bf16.mxu0 0
        %575 = vmatpush1.bf16.msra.mxu0 0
        %576 = vmatprep.subr.bf16.mxu0 0
        %577 = vmatpush1.bf16.msra.mxu0 0
        %578 = vmatprep.subr.bf16.mxu0 0
        %579 = vmatpush1.bf16.msra.mxu0 0
        %580 = vmatprep.subr.bf16.mxu0 0
        %581 = vmatpush1.bf16.msra.mxu0 0
        %582 = vmatprep.subr.bf16.mxu0 0
        %583 = vmatpush1.bf16.msra.mxu0 %v554
        %584 = vmatprep.subr.bf16.mxu0 0
        %585 = vmatpush1.bf16.msra.mxu0 %v553
        %586 = vmatprep.subr.bf16.mxu0 0
        %587 = vmatpush2.bf16.msra.mxu0 0
        %588 = vmatprep.subr.bf16.mxu0 0
        %589 = vmatpush2.bf16.msra.mxu0 0
        %590 = vmatprep.subr.bf16.mxu0 0
        %591 = vmatpush2.bf16.msra.mxu0 0
        %592 = vmatprep.subr.bf16.mxu0 0
        %593 = vmatpush2.bf16.msra.mxu0 0
        %594 = vmatprep.subr.bf16.mxu0 0
        %595 = vmatpush2.bf16.msra.mxu0 0
        %596 = vmatprep.subr.bf16.mxu0 0
        %597 = vmatpush2.bf16.msra.mxu0 0
        %598 = vmatprep.subr.bf16.mxu0 0
        %599 = vmatpush2.bf16.msra.mxu0 0
        %600 = vmatprep.subr.bf16.mxu0 0
        %601 = vmatpush2.bf16.msra.mxu0 0
        %602 = vmatprep.mubr.bf16.mxu0 0
        %603 = vmatmul.mubr.bf16.gmra.mxu0 %v559
        %v604 = vpop.f32.mrf.mxu0
        %v605 = vadd.f32 0.0, %v604
        %v606 = vpop.f32.mrf.mxu0
        %v607 = vpop.f32.mrf.mxu0
        %v608 = vadd.f32 0.0, %v607
        %v609 = vpop.f32.mrf.mxu0
        %610 = vmatprep.mubr.bf16.mxu0 0
        %611 = vmatmul.mubr.bf16.gmra.mxu0 %v562
        %v612 = vpop.f32.mrf.mxu0
        %v613 = vadd.f32 0.0, %v612
        %v614 = vpop.f32.mrf.mxu0
        %v615 = vpop.f32.mrf.mxu0
        %v616 = vadd.f32 0.0, %v615
        %v617 = vpop.f32.mrf.mxu0
        %618 = vmatprep.mubr.bf16.mxu0 0
        %619 = vmatmul.mubr.bf16.gmra.mxu0 %v565
        %v620 = vpop.f32.mrf.mxu0
        %v621 = vadd.f32 0.0, %v620
        %v622 = vpop.f32.mrf.mxu0
        %v623 = vpop.f32.mrf.mxu0
        %v624 = vadd.f32 0.0, %v623
        %v625 = vpop.f32.mrf.mxu0
        %626 = vmatprep.mubr.bf16.mxu0 0
        %627 = vmatmul.mubr.bf16.gmra.mxu0 %v568
        %v628 = vpop.f32.mrf.mxu0
        %v629 = vadd.f32 0.0, %v628
        %v630 = vpop.f32.mrf.mxu0
        %v631 = vpop.f32.mrf.mxu0
        %v632 = vadd.f32 0.0, %v631
        %v633 = vpop.f32.mrf.mxu0
        %634 = vdwg.mxu0
        %v639 = vunpack.c.l.b16 %v476
        %v640 = vunpack.c.l.b16 %v477
        %v641 = vunpack.c.l.b16 %v478
        %v642 = vunpack.c.l.b16 %v479
        %v643 = vpack.c.b16 %v640, %v639
        %v644 = vpack.c.b16 %v642, %v641
        %647 = vxpose.xlu0.c.b16.start [1/8] %v643, 128
        %648 = vxpose.xlu0.c.b16.cont [2/8] %v644, 128
        %649 = vxpose.xlu0.c.b16.cont [3/8] 0, 128
        %650 = vxpose.xlu0.c.b16.cont [4/8] 0, 128
        %651 = vxpose.xlu0.c.b16.cont [5/8] 0, 128
        %652 = vxpose.xlu0.c.b16.cont [6/8] 0, 128
        %653 = vxpose.xlu0.c.b16.cont [7/8] 0, 128
        %654 = vxpose.xlu0.c.b16.end [8/8] 0, 128
        %v655 = vpop.trf.xlu0
        %v656 = vpop.trf.xlu0
        %v657 = vpop.trf.xlu0
        %v658 = vpop.trf.xlu0
        %v659 = vpop.trf.xlu0
        %v660 = vpop.trf.xlu0
        %v661 = vpop.trf.xlu0
        %v662 = vpop.trf.xlu0
        %v667 = vunpack.c.l.b16 %v509
        %v668 = vunpack.c.l.b16 %v510
        %v669 = vunpack.c.l.b16 %v511
        %v670 = vunpack.c.l.b16 %v512
        %v671 = vpack.c.b16 %v668, %v667
        %v672 = vpack.c.b16 %v670, %v669
        %v676 = vsel %vm557, %v655, 0
        %v679 = vsel %vm557, %v656, 0
        %v682 = vsel %vm557, %v657, 0
        %v685 = vsel %vm557, %v658, 0
        %687 = vmatprep.subr.bf16.mxu0 0
        %688 = vmatpush1.bf16.msra.mxu0 0
        %689 = vmatprep.subr.bf16.mxu0 0
        %690 = vmatpush1.bf16.msra.mxu0 0
        %691 = vmatprep.subr.bf16.mxu0 0
        %692 = vmatpush1.bf16.msra.mxu0 0
        %693 = vmatprep.subr.bf16.mxu0 0
        %694 = vmatpush1.bf16.msra.mxu0 0
        %695 = vmatprep.subr.bf16.mxu0 0
        %696 = vmatpush1.bf16.msra.mxu0 0
        %697 = vmatprep.subr.bf16.mxu0 0
        %698 = vmatpush1.bf16.msra.mxu0 0
        %699 = vmatprep.subr.bf16.mxu0 0
        %700 = vmatpush1.bf16.msra.mxu0 %v672
        %701 = vmatprep.subr.bf16.mxu0 0
        %702 = vmatpush1.bf16.msra.mxu0 %v671
        %703 = vmatprep.subr.bf16.mxu0 0
        %704 = vmatpush2.bf16.msra.mxu0 0
        %705 = vmatprep.subr.bf16.mxu0 0
        %706 = vmatpush2.bf16.msra.mxu0 0
        %707 = vmatprep.subr.bf16.mxu0 0
        %708 = vmatpush2.bf16.msra.mxu0 0
        %709 = vmatprep.subr.bf16.mxu0 0
        %710 = vmatpush2.bf16.msra.mxu0 0
        %711 = vmatprep.subr.bf16.mxu0 0
        %712 = vmatpush2.bf16.msra.mxu0 0
        %713 = vmatprep.subr.bf16.mxu0 0
        %714 = vmatpush2.bf16.msra.mxu0 0
        %715 = vmatprep.subr.bf16.mxu0 0
        %716 = vmatpush2.bf16.msra.mxu0 0
        %717 = vmatprep.subr.bf16.mxu0 0
        %718 = vmatpush2.bf16.msra.mxu0 0
        %719 = vmatprep.mubr.bf16.mxu0 0
        %720 = vmatmul.mubr.bf16.gmra.mxu0 %v676
        %v721 = vpop.f32.mrf.mxu0
        %v722 = vadd.f32 0.0, %v721
        %v723 = vpop.f32.mrf.mxu0
        %v724 = vpop.f32.mrf.mxu0
        %v725 = vadd.f32 0.0, %v724
        %v726 = vpop.f32.mrf.mxu0
        %727 = vmatprep.mubr.bf16.mxu0 0
        %728 = vmatmul.mubr.bf16.gmra.mxu0 %v679
        %v729 = vpop.f32.mrf.mxu0
        %v730 = vadd.f32 0.0, %v729
        %v731 = vpop.f32.mrf.mxu0
        %v732 = vpop.f32.mrf.mxu0
        %v733 = vadd.f32 0.0, %v732
        %v734 = vpop.f32.mrf.mxu0
        %735 = vmatprep.mubr.bf16.mxu0 0
        %736 = vmatmul.mubr.bf16.gmra.mxu0 %v682
        %v737 = vpop.f32.mrf.mxu0
        %v738 = vadd.f32 0.0, %v737
        %v739 = vpop.f32.mrf.mxu0
        %v740 = vpop.f32.mrf.mxu0
        %v741 = vadd.f32 0.0, %v740
        %v742 = vpop.f32.mrf.mxu0
        %743 = vmatprep.mubr.bf16.mxu0 0
        %744 = vmatmul.mubr.bf16.gmra.mxu0 %v685
        %v745 = vpop.f32.mrf.mxu0
        %v746 = vadd.f32 0.0, %v745
        %v747 = vpop.f32.mrf.mxu0
        %v748 = vpop.f32.mrf.mxu0
        %v749 = vadd.f32 0.0, %v748
        %v750 = vpop.f32.mrf.mxu0
        %751 = vdwg.mxu0
        %v756 = vunpack.c.l.b16 %v480
        %v757 = vunpack.c.l.b16 %v481
        %v758 = vunpack.c.l.b16 %v482
        %v759 = vunpack.c.l.b16 %v483
        %v760 = vpack.c.b16 %v757, %v756
        %v761 = vpack.c.b16 %v759, %v758
        %764 = vxpose.xlu0.c.b16.start [1/8] %v760, 128
        %765 = vxpose.xlu0.c.b16.cont [2/8] %v761, 128
        %766 = vxpose.xlu0.c.b16.cont [3/8] 0, 128
        %767 = vxpose.xlu0.c.b16.cont [4/8] 0, 128
        %768 = vxpose.xlu0.c.b16.cont [5/8] 0, 128
        %769 = vxpose.xlu0.c.b16.cont [6/8] 0, 128
        %770 = vxpose.xlu0.c.b16.cont [7/8] 0, 128
        %771 = vxpose.xlu0.c.b16.end [8/8] 0, 128
        %v772 = vpop.trf.xlu0
        %v773 = vpop.trf.xlu0
        %v774 = vpop.trf.xlu0
        %v775 = vpop.trf.xlu0
        %v776 = vpop.trf.xlu0
        %v777 = vpop.trf.xlu0
        %v778 = vpop.trf.xlu0
        %v779 = vpop.trf.xlu0
        %v784 = vunpack.c.l.b16 %v513
        %v785 = vunpack.c.l.b16 %v514
        %v786 = vunpack.c.l.b16 %v515
        %v787 = vunpack.c.l.b16 %v516
        %v788 = vpack.c.b16 %v785, %v784
        %v789 = vpack.c.b16 %v787, %v786
        %v793 = vsel %vm557, %v772, 0
        %v796 = vsel %vm557, %v773, 0
        %v799 = vsel %vm557, %v774, 0
        %v802 = vsel %vm557, %v775, 0
        %804 = vmatprep.subr.bf16.mxu0 0
        %805 = vmatpush1.bf16.msra.mxu0 0
        %806 = vmatprep.subr.bf16.mxu0 0
        %807 = vmatpush1.bf16.msra.mxu0 0
        %808 = vmatprep.subr.bf16.mxu0 0
        %809 = vmatpush1.bf16.msra.mxu0 0
        %810 = vmatprep.subr.bf16.mxu0 0
        %811 = vmatpush1.bf16.msra.mxu0 0
        %812 = vmatprep.subr.bf16.mxu0 0
        %813 = vmatpush1.bf16.msra.mxu0 0
        %814 = vmatprep.subr.bf16.mxu0 0
        %815 = vmatpush1.bf16.msra.mxu0 0
        %816 = vmatprep.subr.bf16.mxu0 0
        %817 = vmatpush1.bf16.msra.mxu0 %v789
        %818 = vmatprep.subr.bf16.mxu0 0
        %819 = vmatpush1.bf16.msra.mxu0 %v788
        %820 = vmatprep.subr.bf16.mxu0 0
        %821 = vmatpush2.bf16.msra.mxu0 0
        %822 = vmatprep.subr.bf16.mxu0 0
        %823 = vmatpush2.bf16.msra.mxu0 0
        %824 = vmatprep.subr.bf16.mxu0 0
        %825 = vmatpush2.bf16.msra.mxu0 0
        %826 = vmatprep.subr.bf16.mxu0 0
        %827 = vmatpush2.bf16.msra.mxu0 0
        %828 = vmatprep.subr.bf16.mxu0 0
        %829 = vmatpush2.bf16.msra.mxu0 0
        %830 = vmatprep.subr.bf16.mxu0 0
        %831 = vmatpush2.bf16.msra.mxu0 0
        %832 = vmatprep.subr.bf16.mxu0 0
        %833 = vmatpush2.bf16.msra.mxu0 0
        %834 = vmatprep.subr.bf16.mxu0 0
        %835 = vmatpush2.bf16.msra.mxu0 0
        %836 = vmatprep.mubr.bf16.mxu0 0
        %837 = vmatmul.mubr.bf16.gmra.mxu0 %v793
        %v838 = vpop.f32.mrf.mxu0
        %v839 = vadd.f32 0.0, %v838
        %v840 = vpop.f32.mrf.mxu0
        %v841 = vpop.f32.mrf.mxu0
        %v842 = vadd.f32 0.0, %v841
        %v843 = vpop.f32.mrf.mxu0
        %844 = vmatprep.mubr.bf16.mxu0 0
        %845 = vmatmul.mubr.bf16.gmra.mxu0 %v796
        %v846 = vpop.f32.mrf.mxu0
        %v847 = vadd.f32 0.0, %v846
        %v848 = vpop.f32.mrf.mxu0
        %v849 = vpop.f32.mrf.mxu0
        %v850 = vadd.f32 0.0, %v849
        %v851 = vpop.f32.mrf.mxu0
        %852 = vmatprep.mubr.bf16.mxu0 0
        %853 = vmatmul.mubr.bf16.gmra.mxu0 %v799
        %v854 = vpop.f32.mrf.mxu0
        %v855 = vadd.f32 0.0, %v854
        %v856 = vpop.f32.mrf.mxu0
        %v857 = vpop.f32.mrf.mxu0
        %v858 = vadd.f32 0.0, %v857
        %v859 = vpop.f32.mrf.mxu0
        %860 = vmatprep.mubr.bf16.mxu0 0
        %861 = vmatmul.mubr.bf16.gmra.mxu0 %v802
        %v862 = vpop.f32.mrf.mxu0
        %v863 = vadd.f32 0.0, %v862
        %v864 = vpop.f32.mrf.mxu0
        %v865 = vpop.f32.mrf.mxu0
        %v866 = vadd.f32 0.0, %v865
        %v867 = vpop.f32.mrf.mxu0
        %868 = vdwg.mxu0
        %v869 = vmax.f32 %v605, 0.0
        %v870 = vmax.f32 %v608, 0.0
        %v871 = vmax.f32 %v613, 0.0
        %v872 = vmax.f32 %v616, 0.0
        %v873 = vmax.f32 %v621, 0.0
        %v874 = vmax.f32 %v624, 0.0
        %v875 = vmax.f32 %v629, 0.0
        %v876 = vmax.f32 %v632, 0.0
        %v877 = vmax.f32 %v722, 0.0
        %v878 = vmax.f32 %v725, 0.0
        %v879 = vmax.f32 %v730, 0.0
        %v880 = vmax.f32 %v733, 0.0
        %v881 = vmax.f32 %v738, 0.0
        %v882 = vmax.f32 %v741, 0.0
        %v883 = vmax.f32 %v746, 0.0
        %v884 = vmax.f32 %v749, 0.0
        %v885 = vmax.f32 %v839, 0.0
        %v886 = vmax.f32 %v842, 0.0
        %v887 = vmax.f32 %v847, 0.0
        %v888 = vmax.f32 %v850, 0.0
        %v889 = vmax.f32 %v855, 0.0
        %v890 = vmax.f32 %v858, 0.0
        %v891 = vmax.f32 %v863, 0.0
        %v892 = vmax.f32 %v866, 0.0
        %v893 = vmul.f32 %v869, %v869
        %v894 = vmul.f32 %v870, %v870
        %v895 = vmul.f32 %v871, %v871
        %v896 = vmul.f32 %v872, %v872
        %v897 = vmul.f32 %v873, %v873
        %v898 = vmul.f32 %v874, %v874
        %v899 = vmul.f32 %v875, %v875
        %v900 = vmul.f32 %v876, %v876
        %v901 = vmul.f32 %v877, %v877
        %v902 = vmul.f32 %v878, %v878
        %v903 = vmul.f32 %v879, %v879
        %v904 = vmul.f32 %v880, %v880
        %v905 = vmul.f32 %v881, %v881
        %v906 = vmul.f32 %v882, %v882
        %v907 = vmul.f32 %v883, %v883
        %v908 = vmul.f32 %v884, %v884
        %v909 = vmul.f32 %v885, %v885
        %v910 = vmul.f32 %v886, %v886
        %v911 = vmul.f32 %v887, %v887
        %v912 = vmul.f32 %v888, %v888
        %v913 = vmul.f32 %v889, %v889
        %v914 = vmul.f32 %v890, %v890
        %v915 = vmul.f32 %v891, %v891
        %v916 = vmul.f32 %v892, %v892
        %v917 = vsel %vm348, %v893, 0.0
        %918 = vadd.xlane.f32.xlu0 %v917
        %v919 = vpop.xlane.xlu0 %918
        %v920 = vsel %vm348, %v894, 0.0
        %921 = vadd.xlane.f32.xlu0 %v920
        %v922 = vpop.xlane.xlu0 %921
        %v923 = vsel %vm348, %v895, 0.0
        %924 = vadd.xlane.f32.xlu0 %v923
        %v925 = vpop.xlane.xlu0 %924
        %v926 = vsel %vm348, %v896, 0.0
        %927 = vadd.xlane.f32.xlu0 %v926
        %v928 = vpop.xlane.xlu0 %927
        %v929 = vsel %vm348, %v897, 0.0
        %930 = vadd.xlane.f32.xlu0 %v929
        %v931 = vpop.xlane.xlu0 %930
        %v932 = vsel %vm348, %v898, 0.0
        %933 = vadd.xlane.f32.xlu0 %v932
        %v934 = vpop.xlane.xlu0 %933
        %v935 = vsel %vm348, %v899, 0.0
        %936 = vadd.xlane.f32.xlu0 %v935
        %v937 = vpop.xlane.xlu0 %936
        %v938 = vsel %vm348, %v900, 0.0
        %939 = vadd.xlane.f32.xlu0 %v938
        %v940 = vpop.xlane.xlu0 %939
        %v941 = vsel %vm348, %v901, 0.0
        %942 = vadd.xlane.f32.xlu0 %v941
        %v943 = vpop.xlane.xlu0 %942
        %v944 = vsel %vm348, %v902, 0.0
        %945 = vadd.xlane.f32.xlu0 %v944
        %v946 = vpop.xlane.xlu0 %945
        %v947 = vsel %vm348, %v903, 0.0
        %948 = vadd.xlane.f32.xlu0 %v947
        %v949 = vpop.xlane.xlu0 %948
        %v950 = vsel %vm348, %v904, 0.0
        %951 = vadd.xlane.f32.xlu0 %v950
        %v952 = vpop.xlane.xlu0 %951
        %v953 = vsel %vm348, %v905, 0.0
        %954 = vadd.xlane.f32.xlu0 %v953
        %v955 = vpop.xlane.xlu0 %954
        %v956 = vsel %vm348, %v906, 0.0
        %957 = vadd.xlane.f32.xlu0 %v956
        %v958 = vpop.xlane.xlu0 %957
        %v959 = vsel %vm348, %v907, 0.0
        %960 = vadd.xlane.f32.xlu0 %v959
        %v961 = vpop.xlane.xlu0 %960
        %v962 = vsel %vm348, %v908, 0.0
        %963 = vadd.xlane.f32.xlu0 %v962
        %v964 = vpop.xlane.xlu0 %963
        %v965 = vsel %vm348, %v909, 0.0
        %966 = vadd.xlane.f32.xlu0 %v965
        %v967 = vpop.xlane.xlu0 %966
        %v968 = vsel %vm348, %v910, 0.0
        %969 = vadd.xlane.f32.xlu0 %v968
        %v970 = vpop.xlane.xlu0 %969
        %v971 = vsel %vm348, %v911, 0.0
        %972 = vadd.xlane.f32.xlu0 %v971
        %v973 = vpop.xlane.xlu0 %972
        %v974 = vsel %vm348, %v912, 0.0
        %975 = vadd.xlane.f32.xlu0 %v974
        %v976 = vpop.xlane.xlu0 %975
        %v977 = vsel %vm348, %v913, 0.0
        %978 = vadd.xlane.f32.xlu0 %v977
        %v979 = vpop.xlane.xlu0 %978
        %v980 = vsel %vm348, %v914, 0.0
        %981 = vadd.xlane.f32.xlu0 %v980
        %v982 = vpop.xlane.xlu0 %981
        %v983 = vsel %vm348, %v915, 0.0
        %984 = vadd.xlane.f32.xlu0 %v983
        %v985 = vpop.xlane.xlu0 %984
        %v986 = vsel %vm348, %v916, 0.0
        %987 = vadd.xlane.f32.xlu0 %v986
        %v988 = vpop.xlane.xlu0 %987
        %v989 = vmax.f32 %v919, 1e-24
        %v990 = vmax.f32 %v922, 1e-24
        %v991 = vmax.f32 %v925, 1e-24
        %v992 = vmax.f32 %v928, 1e-24
        %v993 = vmax.f32 %v931, 1e-24
        %v994 = vmax.f32 %v934, 1e-24
        %v995 = vmax.f32 %v937, 1e-24
        %v996 = vmax.f32 %v940, 1e-24
        %v997 = vmax.f32 %v943, 1e-24
        %v998 = vmax.f32 %v946, 1e-24
        %v999 = vmax.f32 %v949, 1e-24
        %v1000 = vmax.f32 %v952, 1e-24
        %v1001 = vmax.f32 %v955, 1e-24
        %v1002 = vmax.f32 %v958, 1e-24
        %v1003 = vmax.f32 %v961, 1e-24
        %v1004 = vmax.f32 %v964, 1e-24
        %v1005 = vmax.f32 %v967, 1e-24
        %v1006 = vmax.f32 %v970, 1e-24
        %v1007 = vmax.f32 %v973, 1e-24
        %v1008 = vmax.f32 %v976, 1e-24
        %v1009 = vmax.f32 %v979, 1e-24
        %v1010 = vmax.f32 %v982, 1e-24
        %v1011 = vmax.f32 %v985, 1e-24
        %v1012 = vmax.f32 %v988, 1e-24
        %v1013 = vrsqrt.pop %v989
        %v1014 = vrsqrt.pop %v990
        %v1015 = vrsqrt.pop %v991
        %v1016 = vrsqrt.pop %v992
        %v1017 = vrsqrt.pop %v993
        %v1018 = vrsqrt.pop %v994
        %v1019 = vrsqrt.pop %v995
        %v1020 = vrsqrt.pop %v996
        %v1021 = vrsqrt.pop %v997
        %v1022 = vrsqrt.pop %v998
        %v1023 = vrsqrt.pop %v999
        %v1024 = vrsqrt.pop %v1000
        %v1025 = vrsqrt.pop %v1001
        %v1026 = vrsqrt.pop %v1002
        %v1027 = vrsqrt.pop %v1003
        %v1028 = vrsqrt.pop %v1004
        %v1029 = vrsqrt.pop %v1005
        %v1030 = vrsqrt.pop %v1006
        %v1031 = vrsqrt.pop %v1007
        %v1032 = vrsqrt.pop %v1008
        %v1033 = vrsqrt.pop %v1009
        %v1034 = vrsqrt.pop %v1010
        %v1035 = vrsqrt.pop %v1011
        %v1036 = vrsqrt.pop %v1012
        %v1037 = vmul.f32 %v1013, %v1013
        %v1038 = vmul.f32 %v1014, %v1014
        %v1039 = vmul.f32 %v1015, %v1015
        %v1040 = vmul.f32 %v1016, %v1016
        %v1041 = vmul.f32 %v1017, %v1017
        %v1042 = vmul.f32 %v1018, %v1018
        %v1043 = vmul.f32 %v1019, %v1019
        %v1044 = vmul.f32 %v1020, %v1020
        %v1045 = vmul.f32 %v1021, %v1021
        %v1046 = vmul.f32 %v1022, %v1022
        %v1047 = vmul.f32 %v1023, %v1023
        %v1048 = vmul.f32 %v1024, %v1024
        %v1049 = vmul.f32 %v1025, %v1025
        %v1050 = vmul.f32 %v1026, %v1026
        %v1051 = vmul.f32 %v1027, %v1027
        %v1052 = vmul.f32 %v1028, %v1028
        %v1053 = vmul.f32 %v1029, %v1029
        %v1054 = vmul.f32 %v1030, %v1030
        %v1055 = vmul.f32 %v1031, %v1031
        %v1056 = vmul.f32 %v1032, %v1032
        %v1057 = vmul.f32 %v1033, %v1033
        %v1058 = vmul.f32 %v1034, %v1034
        %v1059 = vmul.f32 %v1035, %v1035
        %v1060 = vmul.f32 %v1036, %v1036
        %v1061 = vmul.f32 %v893, %v1037
        %v1062 = vmul.f32 %v894, %v1038
        %v1063 = vmul.f32 %v895, %v1039
        %v1064 = vmul.f32 %v896, %v1040
        %v1065 = vmul.f32 %v897, %v1041
        %v1066 = vmul.f32 %v898, %v1042
        %v1067 = vmul.f32 %v899, %v1043
        %v1068 = vmul.f32 %v900, %v1044
        %v1069 = vmul.f32 %v901, %v1045
        %v1070 = vmul.f32 %v902, %v1046
        %v1071 = vmul.f32 %v903, %v1047
        %v1072 = vmul.f32 %v904, %v1048
        %v1073 = vmul.f32 %v905, %v1049
        %v1074 = vmul.f32 %v906, %v1050
        %v1075 = vmul.f32 %v907, %v1051
        %v1076 = vmul.f32 %v908, %v1052
        %v1077 = vmul.f32 %v909, %v1053
        %v1078 = vmul.f32 %v910, %v1054
        %v1079 = vmul.f32 %v911, %v1055
        %v1080 = vmul.f32 %v912, %v1056
        %v1081 = vmul.f32 %v913, %v1057
        %v1082 = vmul.f32 %v914, %v1058
        %v1083 = vmul.f32 %v915, %v1059
        %v1084 = vmul.f32 %v916, %v1060
        %v1085 = vsel %vm348, %v1061, 0.0
        %v1086 = vsel %vm348, %v1062, 0.0
        %v1087 = vadd.f32 %v1085, %v1086
        %v1088 = vsel %vm348, %v1063, 0.0
        %v1089 = vadd.f32 %v1087, %v1088
        %v1090 = vsel %vm348, %v1064, 0.0
        %v1091 = vadd.f32 %v1089, %v1090
        %v1092 = vsel %vm348, %v1065, 0.0
        %v1093 = vadd.f32 %v1091, %v1092
        %v1094 = vsel %vm348, %v1066, 0.0
        %v1095 = vadd.f32 %v1093, %v1094
        %v1096 = vsel %vm348, %v1067, 0.0
        %v1097 = vadd.f32 %v1095, %v1096
        %v1098 = vsel %vm348, %v1068, 0.0
        %v1099 = vadd.f32 %v1097, %v1098
        %v1100 = vrot.slane %v1099, 4
        %v1101 = vadd.f32 %v1099, %v1100
        %v1102 = vrot.slane %v1101, 2
        %v1103 = vadd.f32 %v1101, %v1102
        %v1104 = vrot.slane %v1103, 1
        %v1105 = vadd.f32 %v1103, %v1104
        %v1106 = vsel %vm348, %v1069, 0.0
        %v1107 = vsel %vm348, %v1070, 0.0
        %v1108 = vadd.f32 %v1106, %v1107
        %v1109 = vsel %vm348, %v1071, 0.0
        %v1110 = vadd.f32 %v1108, %v1109
        %v1111 = vsel %vm348, %v1072, 0.0
        %v1112 = vadd.f32 %v1110, %v1111
        %v1113 = vsel %vm348, %v1073, 0.0
        %v1114 = vadd.f32 %v1112, %v1113
        %v1115 = vsel %vm348, %v1074, 0.0
        %v1116 = vadd.f32 %v1114, %v1115
        %v1117 = vsel %vm348, %v1075, 0.0
        %v1118 = vadd.f32 %v1116, %v1117
        %v1119 = vsel %vm348, %v1076, 0.0
        %v1120 = vadd.f32 %v1118, %v1119
        %v1121 = vrot.slane %v1120, 4
        %v1122 = vadd.f32 %v1120, %v1121
        %v1123 = vrot.slane %v1122, 2
        %v1124 = vadd.f32 %v1122, %v1123
        %v1125 = vrot.slane %v1124, 1
        %v1126 = vadd.f32 %v1124, %v1125
        %v1127 = vsel %vm348, %v1077, 0.0
        %v1128 = vsel %vm348, %v1078, 0.0
        %v1129 = vadd.f32 %v1127, %v1128
        %v1130 = vsel %vm348, %v1079, 0.0
        %v1131 = vadd.f32 %v1129, %v1130
        %v1132 = vsel %vm348, %v1080, 0.0
        %v1133 = vadd.f32 %v1131, %v1132
        %v1134 = vsel %vm348, %v1081, 0.0
        %v1135 = vadd.f32 %v1133, %v1134
        %v1136 = vsel %vm348, %v1082, 0.0
        %v1137 = vadd.f32 %v1135, %v1136
        %v1138 = vsel %vm348, %v1083, 0.0
        %v1139 = vadd.f32 %v1137, %v1138
        %v1140 = vsel %vm348, %v1084, 0.0
        %v1141 = vadd.f32 %v1139, %v1140
        %v1142 = vrot.slane %v1141, 4
        %v1143 = vadd.f32 %v1141, %v1142
        %v1144 = vrot.slane %v1143, 2
        %v1145 = vadd.f32 %v1143, %v1144
        %v1146 = vrot.slane %v1145, 1
        %v1147 = vadd.f32 %v1145, %v1146
        %v1148 = vmax.f32 %v1105, 1e-24
        %v1149 = vmax.f32 %v1126, 1e-24
        %v1150 = vmax.f32 %v1147, 1e-24
        %v1151 = vrsqrt.pop %v1148
        %v1152 = vrsqrt.pop %v1149
        %v1153 = vrsqrt.pop %v1150
        %v1154 = vmul.f32 %v869, %v1013
        %v1155 = vmul.f32 %v870, %v1014
        %v1156 = vmul.f32 %v871, %v1015
        %v1157 = vmul.f32 %v872, %v1016
        %v1158 = vmul.f32 %v873, %v1017
        %v1159 = vmul.f32 %v874, %v1018
        %v1160 = vmul.f32 %v875, %v1019
        %v1161 = vmul.f32 %v876, %v1020
        %v1162 = vmul.f32 %v877, %v1021
        %v1163 = vmul.f32 %v878, %v1022
        %v1164 = vmul.f32 %v879, %v1023
        %v1165 = vmul.f32 %v880, %v1024
        %v1166 = vmul.f32 %v881, %v1025
        %v1167 = vmul.f32 %v882, %v1026
        %v1168 = vmul.f32 %v883, %v1027
        %v1169 = vmul.f32 %v884, %v1028
        %v1170 = vmul.f32 %v885, %v1029
        %v1171 = vmul.f32 %v886, %v1030
        %v1172 = vmul.f32 %v887, %v1031
        %v1173 = vmul.f32 %v888, %v1032
        %v1174 = vmul.f32 %v889, %v1033
        %v1175 = vmul.f32 %v890, %v1034
        %v1176 = vmul.f32 %v891, %v1035
        %v1177 = vmul.f32 %v892, %v1036
        %v1178 = vmul.f32 %v1154, %v1151
        %v1179 = vmul.f32 %v1155, %v1151
        %v1180 = vmul.f32 %v1156, %v1151
        %v1181 = vmul.f32 %v1157, %v1151
        %v1182 = vmul.f32 %v1158, %v1151
        %v1183 = vmul.f32 %v1159, %v1151
        %v1184 = vmul.f32 %v1160, %v1151
        %v1185 = vmul.f32 %v1161, %v1151
        %v1186 = vmul.f32 %v1162, %v1152
        %v1187 = vmul.f32 %v1163, %v1152
        %v1188 = vmul.f32 %v1164, %v1152
        %v1189 = vmul.f32 %v1165, %v1152
        %v1190 = vmul.f32 %v1166, %v1152
        %v1191 = vmul.f32 %v1167, %v1152
        %v1192 = vmul.f32 %v1168, %v1152
        %v1193 = vmul.f32 %v1169, %v1152
        %v1194 = vmul.f32 %v1170, %v1153
        %v1195 = vmul.f32 %v1171, %v1153
        %v1196 = vmul.f32 %v1172, %v1153
        %v1197 = vmul.f32 %v1173, %v1153
        %v1198 = vmul.f32 %v1174, %v1153
        %v1199 = vmul.f32 %v1175, %v1153
        %v1200 = vmul.f32 %v1176, %v1153
        %v1201 = vmul.f32 %v1177, %v1153
        %v1202 = vld [vmem:[%s257] sm:$0xf]
        %v1203 = vld [vmem:[%s257 + $0x4] sm:$0xf]
        %v1204 = vld [vmem:[%s257 + $0x8] sm:$0xf]
        %v1205 = vld [vmem:[%s3] sm:$0xf]
        %1206 = vxpose.xlu0.b32.start [1/16] %v1202, 128
        %1207 = vxpose.xlu0.b32.cont [2/16] 0.0, 128
        %1208 = vxpose.xlu0.b32.cont [3/16] 0.0, 128
        %1209 = vxpose.xlu0.b32.cont [4/16] 0.0, 128
        %1210 = vxpose.xlu0.b32.cont [5/16] 0.0, 128
        %1211 = vxpose.xlu0.b32.cont [6/16] 0.0, 128
        %1212 = vxpose.xlu0.b32.cont [7/16] 0.0, 128
        %1213 = vxpose.xlu0.b32.cont [8/16] 0.0, 128
        %1214 = vxpose.xlu0.b32.cont [9/16] 0.0, 128
        %1215 = vxpose.xlu0.b32.cont [10/16] 0.0, 128
        %1216 = vxpose.xlu0.b32.cont [11/16] 0.0, 128
        %1217 = vxpose.xlu0.b32.cont [12/16] 0.0, 128
        %1218 = vxpose.xlu0.b32.cont [13/16] 0.0, 128
        %1219 = vxpose.xlu0.b32.cont [14/16] 0.0, 128
        %1220 = vxpose.xlu0.b32.cont [15/16] 0.0, 128
        %1221 = vxpose.xlu0.b32.end [16/16] 0.0, 128
        %v1222 = vpop.trf.xlu0
        %v1223 = vpop.trf.xlu0
        %v1224 = vpop.trf.xlu0
        %v1225 = vpop.trf.xlu0
        %v1226 = vpop.trf.xlu0
        %v1227 = vpop.trf.xlu0
        %v1228 = vpop.trf.xlu0
        %v1229 = vpop.trf.xlu0
        %v1230 = vpop.trf.xlu0
        %v1231 = vpop.trf.xlu0
        %v1232 = vpop.trf.xlu0
        %v1233 = vpop.trf.xlu0
        %v1234 = vpop.trf.xlu0
        %v1235 = vpop.trf.xlu0
        %v1236 = vpop.trf.xlu0
        %v1237 = vpop.trf.xlu0
        %vm1238 = vcmask 31744
        %v1240 = vsel %vm1238, %v1222, 0
        %v1243 = vsel %vm1238, %v1223, 0
        %v1246 = vsel %vm1238, %v1224, 0
        %v1249 = vsel %vm1238, %v1225, 0
        %v1252 = vsel %vm1238, %v1226, 0
        %v1255 = vsel %vm1238, %v1227, 0
        %v1258 = vsel %vm1238, %v1228, 0
        %v1261 = vsel %vm1238, %v1229, 0
        %vm1263 = vcmask 1043456
        %v1265 = vsel %vm1263, %v1205, 0
        %1267 = vmatprep.subr.mxu0 0.0
        %1268 = vmatpush1.msra.mxu0 0.0
        %1269 = vmatprep.subr.mxu0 0.0
        %1270 = vmatpush1.msra.mxu0 0.0
        %1271 = vmatprep.subr.mxu0 0.0
        %1272 = vmatpush1.msra.mxu0 0.0
        %1273 = vmatprep.subr.mxu0 0.0
        %1274 = vmatpush1.msra.mxu0 0.0
        %1275 = vmatprep.subr.mxu0 0.0
        %1276 = vmatpush1.msra.mxu0 0.0
        %1277 = vmatprep.subr.mxu0 0.0
        %1278 = vmatpush1.msra.mxu0 0.0
        %1279 = vmatprep.subr.mxu0 0.0
        %1280 = vmatpush1.msra.mxu0 0.0
        %1281 = vmatprep.subr.mxu0 0.0
        %1282 = vmatpush1.msra.mxu0 0.0
        %1283 = vmatprep.subr.mxu0 0.0
        %1284 = vmatpush1.msra.mxu0 0.0
        %1285 = vmatprep.subr.mxu0 0.0
        %1286 = vmatpush1.msra.mxu0 0.0
        %1287 = vmatprep.subr.mxu0 0.0
        %1288 = vmatpush1.msra.mxu0 0.0
        %1289 = vmatprep.subr.mxu0 0.0
        %1290 = vmatpush1.msra.mxu0 0.0
        %1291 = vmatprep.subr.mxu0 0.0
        %1292 = vmatpush1.msra.mxu0 0.0
        %1293 = vmatprep.subr.mxu0 0.0
        %1294 = vmatpush1.msra.mxu0 0.0
        %1295 = vmatprep.subr.mxu0 0.0
        %1296 = vmatpush1.msra.mxu0 0.0
        %1297 = vmatprep.subr.mxu0 0.0
        %v1298 = vand.u32 %v1265, 4294901760
        %1299 = vmatpush1.msra.mxu0 %v1298
        %1300 = vmatprep.subr.mxu0 0.0
        %1301 = vmatpush2.msra.mxu0 0.0
        %1302 = vmatprep.subr.mxu0 0.0
        %1303 = vmatpush2.msra.mxu0 0.0
        %1304 = vmatprep.subr.mxu0 0.0
        %1305 = vmatpush2.msra.mxu0 0.0
        %1306 = vmatprep.subr.mxu0 0.0
        %1307 = vmatpush2.msra.mxu0 0.0
        %1308 = vmatprep.subr.mxu0 0.0
        %1309 = vmatpush2.msra.mxu0 0.0
        %1310 = vmatprep.subr.mxu0 0.0
        %1311 = vmatpush2.msra.mxu0 0.0
        %1312 = vmatprep.subr.mxu0 0.0
        %1313 = vmatpush2.msra.mxu0 0.0
        %1314 = vmatprep.subr.mxu0 0.0
        %1315 = vmatpush2.msra.mxu0 0.0
        %1316 = vmatprep.subr.mxu0 0.0
        %1317 = vmatpush2.msra.mxu0 0.0
        %1318 = vmatprep.subr.mxu0 0.0
        %1319 = vmatpush2.msra.mxu0 0.0
        %1320 = vmatprep.subr.mxu0 0.0
        %1321 = vmatpush2.msra.mxu0 0.0
        %1322 = vmatprep.subr.mxu0 0.0
        %1323 = vmatpush2.msra.mxu0 0.0
        %1324 = vmatprep.subr.mxu0 0.0
        %1325 = vmatpush2.msra.mxu0 0.0
        %1326 = vmatprep.subr.mxu0 0.0
        %1327 = vmatpush2.msra.mxu0 0.0
        %1328 = vmatprep.subr.mxu0 0.0
        %1329 = vmatpush2.msra.mxu0 0.0
        %1330 = vmatprep.subr.mxu0 0.0
        %1331 = vmatpush2.msra.mxu0 0.0
        %1332 = vmatprep.mubr.f32.mxu0 0.0
        %v1333 = vand.u32 %v1240, 4294901760
        %v1334 = vsub.f32 %v1240, %v1333
        %v1335 = vand.u32 %v1334, 4294901760
        %v1336 = vsub.f32 %v1334, %v1335
        %v1337 = vand.u32 %v1336, 4294901760
        %1338 = vmatmul.mubr.f32.gmra.mxu0 %v1337
        %v1339 = vpop.f32.mrf.mxu0
        %v1340 = vadd.f32 0.0, %v1339
        %v1341 = vpop.f32.mrf.mxu0
        %1342 = vmatprep.mubr.f32.mxu0 0.0
        %v1343 = vand.u32 %v1243, 4294901760
        %v1344 = vsub.f32 %v1243, %v1343
        %v1345 = vand.u32 %v1344, 4294901760
        %v1346 = vsub.f32 %v1344, %v1345
        %v1347 = vand.u32 %v1346, 4294901760
        %1348 = vmatmul.mubr.f32.gmra.mxu0 %v1347
        %v1349 = vpop.f32.mrf.mxu0
        %v1350 = vadd.f32 0.0, %v1349
        %v1351 = vpop.f32.mrf.mxu0
        %1352 = vmatprep.mubr.f32.mxu0 0.0
        %v1353 = vand.u32 %v1246, 4294901760
        %v1354 = vsub.f32 %v1246, %v1353
        %v1355 = vand.u32 %v1354, 4294901760
        %v1356 = vsub.f32 %v1354, %v1355
        %v1357 = vand.u32 %v1356, 4294901760
        %1358 = vmatmul.mubr.f32.gmra.mxu0 %v1357
        %v1359 = vpop.f32.mrf.mxu0
        %v1360 = vadd.f32 0.0, %v1359
        %v1361 = vpop.f32.mrf.mxu0
        %1362 = vmatprep.mubr.f32.mxu0 0.0
        %v1363 = vand.u32 %v1249, 4294901760
        %v1364 = vsub.f32 %v1249, %v1363
        %v1365 = vand.u32 %v1364, 4294901760
        %v1366 = vsub.f32 %v1364, %v1365
        %v1367 = vand.u32 %v1366, 4294901760
        %1368 = vmatmul.mubr.f32.gmra.mxu0 %v1367
        %v1369 = vpop.f32.mrf.mxu0
        %v1370 = vadd.f32 0.0, %v1369
        %v1371 = vpop.f32.mrf.mxu0
        %1372 = vmatprep.mubr.f32.mxu0 0.0
        %v1373 = vand.u32 %v1252, 4294901760
        %v1374 = vsub.f32 %v1252, %v1373
        %v1375 = vand.u32 %v1374, 4294901760
        %v1376 = vsub.f32 %v1374, %v1375
        %v1377 = vand.u32 %v1376, 4294901760
        %1378 = vmatmul.mubr.f32.gmra.mxu0 %v1377
        %v1379 = vpop.f32.mrf.mxu0
        %v1380 = vadd.f32 0.0, %v1379
        %v1381 = vpop.f32.mrf.mxu0
        %1382 = vmatprep.mubr.f32.mxu0 0.0
        %v1383 = vand.u32 %v1255, 4294901760
        %v1384 = vsub.f32 %v1255, %v1383
        %v1385 = vand.u32 %v1384, 4294901760
        %v1386 = vsub.f32 %v1384, %v1385
        %v1387 = vand.u32 %v1386, 4294901760
        %1388 = vmatmul.mubr.f32.gmra.mxu0 %v1387
        %v1389 = vpop.f32.mrf.mxu0
        %v1390 = vadd.f32 0.0, %v1389
        %v1391 = vpop.f32.mrf.mxu0
        %1392 = vmatprep.mubr.f32.mxu0 0.0
        %v1393 = vand.u32 %v1258, 4294901760
        %v1394 = vsub.f32 %v1258, %v1393
        %v1395 = vand.u32 %v1394, 4294901760
        %v1396 = vsub.f32 %v1394, %v1395
        %v1397 = vand.u32 %v1396, 4294901760
        %1398 = vmatmul.mubr.f32.gmra.mxu0 %v1397
        %v1399 = vpop.f32.mrf.mxu0
        %v1400 = vadd.f32 0.0, %v1399
        %v1401 = vpop.f32.mrf.mxu0
        %1402 = vmatprep.mubr.f32.mxu0 0.0
        %v1403 = vand.u32 %v1261, 4294901760
        %v1404 = vsub.f32 %v1261, %v1403
        %v1405 = vand.u32 %v1404, 4294901760
        %v1406 = vsub.f32 %v1404, %v1405
        %v1407 = vand.u32 %v1406, 4294901760
        %1408 = vmatmul.mubr.f32.gmra.mxu0 %v1407
        %v1409 = vpop.f32.mrf.mxu0
        %v1410 = vadd.f32 0.0, %v1409
        %v1411 = vpop.f32.mrf.mxu0
        %1412 = vdwg.mxu0
        %1413 = vmatprep.subr.mxu0 0.0
        %1414 = vmatpush1.msra.mxu0 0.0
        %1415 = vmatprep.subr.mxu0 0.0
        %1416 = vmatpush1.msra.mxu0 0.0
        %1417 = vmatprep.subr.mxu0 0.0
        %1418 = vmatpush1.msra.mxu0 0.0
        %1419 = vmatprep.subr.mxu0 0.0
        %1420 = vmatpush1.msra.mxu0 0.0
        %1421 = vmatprep.subr.mxu0 0.0
        %1422 = vmatpush1.msra.mxu0 0.0
        %1423 = vmatprep.subr.mxu0 0.0
        %1424 = vmatpush1.msra.mxu0 0.0
        %1425 = vmatprep.subr.mxu0 0.0
        %1426 = vmatpush1.msra.mxu0 0.0
        %1427 = vmatprep.subr.mxu0 0.0
        %1428 = vmatpush1.msra.mxu0 0.0
        %1429 = vmatprep.subr.mxu0 0.0
        %1430 = vmatpush1.msra.mxu0 0.0
        %1431 = vmatprep.subr.mxu0 0.0
        %1432 = vmatpush1.msra.mxu0 0.0
        %1433 = vmatprep.subr.mxu0 0.0
        %1434 = vmatpush1.msra.mxu0 0.0
        %1435 = vmatprep.subr.mxu0 0.0
        %1436 = vmatpush1.msra.mxu0 0.0
        %1437 = vmatprep.subr.mxu0 0.0
        %1438 = vmatpush1.msra.mxu0 0.0
        %1439 = vmatprep.subr.mxu0 0.0
        %1440 = vmatpush1.msra.mxu0 0.0
        %1441 = vmatprep.subr.mxu0 0.0
        %1442 = vmatpush1.msra.mxu0 0.0
        %1443 = vmatprep.subr.mxu0 0.0
        %v1444 = vand.u32 %v1265, 4294901760
        %v1445 = vsub.f32 %v1265, %v1444
        %v1446 = vand.u32 %v1445, 4294901760
        %v1447 = vsub.f32 %v1445, %v1446
        %v1448 = vand.u32 %v1447, 4294901760
        %1449 = vmatpush1.msra.mxu0 %v1448
        %1450 = vmatprep.subr.mxu0 0.0
        %1451 = vmatpush2.msra.mxu0 0.0
        %1452 = vmatprep.subr.mxu0 0.0
        %1453 = vmatpush2.msra.mxu0 0.0
        %1454 = vmatprep.subr.mxu0 0.0
        %1455 = vmatpush2.msra.mxu0 0.0
        %1456 = vmatprep.subr.mxu0 0.0
        %1457 = vmatpush2.msra.mxu0 0.0
        %1458 = vmatprep.subr.mxu0 0.0
        %1459 = vmatpush2.msra.mxu0 0.0
        %1460 = vmatprep.subr.mxu0 0.0
        %1461 = vmatpush2.msra.mxu0 0.0
        %1462 = vmatprep.subr.mxu0 0.0
        %1463 = vmatpush2.msra.mxu0 0.0
        %1464 = vmatprep.subr.mxu0 0.0
        %1465 = vmatpush2.msra.mxu0 0.0
        %1466 = vmatprep.subr.mxu0 0.0
        %1467 = vmatpush2.msra.mxu0 0.0
        %1468 = vmatprep.subr.mxu0 0.0
        %1469 = vmatpush2.msra.mxu0 0.0
        %1470 = vmatprep.subr.mxu0 0.0
        %1471 = vmatpush2.msra.mxu0 0.0
        %1472 = vmatprep.subr.mxu0 0.0
        %1473 = vmatpush2.msra.mxu0 0.0
        %1474 = vmatprep.subr.mxu0 0.0
        %1475 = vmatpush2.msra.mxu0 0.0
        %1476 = vmatprep.subr.mxu0 0.0
        %1477 = vmatpush2.msra.mxu0 0.0
        %1478 = vmatprep.subr.mxu0 0.0
        %1479 = vmatpush2.msra.mxu0 0.0
        %1480 = vmatprep.subr.mxu0 0.0
        %1481 = vmatpush2.msra.mxu0 0.0
        %1482 = vmatprep.mubr.f32.mxu0 0.0
        %v1483 = vand.u32 %v1240, 4294901760
        %1484 = vmatmul.mubr.f32.gmra.mxu0 %v1483
        %v1485 = vpop.f32.mrf.mxu0
        %v1486 = vadd.f32 %v1340, %v1485
        %v1487 = vpop.f32.mrf.mxu0
        %1488 = vmatprep.mubr.f32.mxu0 0.0
        %v1489 = vand.u32 %v1243, 4294901760
        %1490 = vmatmul.mubr.f32.gmra.mxu0 %v1489
        %v1491 = vpop.f32.mrf.mxu0
        %v1492 = vadd.f32 %v1350, %v1491
        %v1493 = vpop.f32.mrf.mxu0
        %1494 = vmatprep.mubr.f32.mxu0 0.0
        %v1495 = vand.u32 %v1246, 4294901760
        %1496 = vmatmul.mubr.f32.gmra.mxu0 %v1495
        %v1497 = vpop.f32.mrf.mxu0
        %v1498 = vadd.f32 %v1360, %v1497
        %v1499 = vpop.f32.mrf.mxu0
        %1500 = vmatprep.mubr.f32.mxu0 0.0
        %v1501 = vand.u32 %v1249, 4294901760
        %1502 = vmatmul.mubr.f32.gmra.mxu0 %v1501
        %v1503 = vpop.f32.mrf.mxu0
        %v1504 = vadd.f32 %v1370, %v1503
        %v1505 = vpop.f32.mrf.mxu0
        %1506 = vmatprep.mubr.f32.mxu0 0.0
        %v1507 = vand.u32 %v1252, 4294901760
        %1508 = vmatmul.mubr.f32.gmra.mxu0 %v1507
        %v1509 = vpop.f32.mrf.mxu0
        %v1510 = vadd.f32 %v1380, %v1509
        %v1511 = vpop.f32.mrf.mxu0
        %1512 = vmatprep.mubr.f32.mxu0 0.0
        %v1513 = vand.u32 %v1255, 4294901760
        %1514 = vmatmul.mubr.f32.gmra.mxu0 %v1513
        %v1515 = vpop.f32.mrf.mxu0
        %v1516 = vadd.f32 %v1390, %v1515
        %v1517 = vpop.f32.mrf.mxu0
        %1518 = vmatprep.mubr.f32.mxu0 0.0
        %v1519 = vand.u32 %v1258, 4294901760
        %1520 = vmatmul.mubr.f32.gmra.mxu0 %v1519
        %v1521 = vpop.f32.mrf.mxu0
        %v1522 = vadd.f32 %v1400, %v1521
        %v1523 = vpop.f32.mrf.mxu0
        %1524 = vmatprep.mubr.f32.mxu0 0.0
        %v1525 = vand.u32 %v1261, 4294901760
        %1526 = vmatmul.mubr.f32.gmra.mxu0 %v1525
        %v1527 = vpop.f32.mrf.mxu0
        %v1528 = vadd.f32 %v1410, %v1527
        %v1529 = vpop.f32.mrf.mxu0
        %1530 = vdwg.mxu0
        %1531 = vmatprep.subr.mxu0 0.0
        %1532 = vmatpush1.msra.mxu0 0.0
        %1533 = vmatprep.subr.mxu0 0.0
        %1534 = vmatpush1.msra.mxu0 0.0
        %1535 = vmatprep.subr.mxu0 0.0
        %1536 = vmatpush1.msra.mxu0 0.0
        %1537 = vmatprep.subr.mxu0 0.0
        %1538 = vmatpush1.msra.mxu0 0.0
        %1539 = vmatprep.subr.mxu0 0.0
        %1540 = vmatpush1.msra.mxu0 0.0
        %1541 = vmatprep.subr.mxu0 0.0
        %1542 = vmatpush1.msra.mxu0 0.0
        %1543 = vmatprep.subr.mxu0 0.0
        %1544 = vmatpush1.msra.mxu0 0.0
        %1545 = vmatprep.subr.mxu0 0.0
        %1546 = vmatpush1.msra.mxu0 0.0
        %1547 = vmatprep.subr.mxu0 0.0
        %1548 = vmatpush1.msra.mxu0 0.0
        %1549 = vmatprep.subr.mxu0 0.0
        %1550 = vmatpush1.msra.mxu0 0.0
        %1551 = vmatprep.subr.mxu0 0.0
        %1552 = vmatpush1.msra.mxu0 0.0
        %1553 = vmatprep.subr.mxu0 0.0
        %1554 = vmatpush1.msra.mxu0 0.0
        %1555 = vmatprep.subr.mxu0 0.0
        %1556 = vmatpush1.msra.mxu0 0.0
        %1557 = vmatprep.subr.mxu0 0.0
        %1558 = vmatpush1.msra.mxu0 0.0
        %1559 = vmatprep.subr.mxu0 0.0
        %1560 = vmatpush1.msra.mxu0 0.0
        %1561 = vmatprep.subr.mxu0 0.0
        %v1562 = vand.u32 %v1265, 4294901760
        %v1563 = vsub.f32 %v1265, %v1562
        %1564 = vmatpush1.msra.mxu0 %v1563
        %1565 = vmatprep.subr.mxu0 0.0
        %1566 = vmatpush2.msra.mxu0 0.0
        %1567 = vmatprep.subr.mxu0 0.0
        %1568 = vmatpush2.msra.mxu0 0.0
        %1569 = vmatprep.subr.mxu0 0.0
        %1570 = vmatpush2.msra.mxu0 0.0
        %1571 = vmatprep.subr.mxu0 0.0
        %1572 = vmatpush2.msra.mxu0 0.0
        %1573 = vmatprep.subr.mxu0 0.0
        %1574 = vmatpush2.msra.mxu0 0.0
        %1575 = vmatprep.subr.mxu0 0.0
        %1576 = vmatpush2.msra.mxu0 0.0
        %1577 = vmatprep.subr.mxu0 0.0
        %1578 = vmatpush2.msra.mxu0 0.0
        %1579 = vmatprep.subr.mxu0 0.0
        %1580 = vmatpush2.msra.mxu0 0.0
        %1581 = vmatprep.subr.mxu0 0.0
        %1582 = vmatpush2.msra.mxu0 0.0
        %1583 = vmatprep.subr.mxu0 0.0
        %1584 = vmatpush2.msra.mxu0 0.0
        %1585 = vmatprep.subr.mxu0 0.0
        %1586 = vmatpush2.msra.mxu0 0.0
        %1587 = vmatprep.subr.mxu0 0.0
        %1588 = vmatpush2.msra.mxu0 0.0
        %1589 = vmatprep.subr.mxu0 0.0
        %1590 = vmatpush2.msra.mxu0 0.0
        %1591 = vmatprep.subr.mxu0 0.0
        %1592 = vmatpush2.msra.mxu0 0.0
        %1593 = vmatprep.subr.mxu0 0.0
        %1594 = vmatpush2.msra.mxu0 0.0
        %1595 = vmatprep.subr.mxu0 0.0
        %1596 = vmatpush2.msra.mxu0 0.0
        %1597 = vmatprep.mubr.f32.mxu0 0.0
        %v1598 = vand.u32 %v1240, 4294901760
        %v1599 = vsub.f32 %v1240, %v1598
        %1600 = vmatmul.mubr.f32.gmra.mxu0 %v1599
        %v1601 = vpop.f32.mrf.mxu0
        %v1602 = vadd.f32 %v1486, %v1601
        %v1603 = vpop.f32.mrf.mxu0
        %1604 = vmatprep.mubr.f32.mxu0 0.0
        %v1605 = vand.u32 %v1243, 4294901760
        %v1606 = vsub.f32 %v1243, %v1605
        %1607 = vmatmul.mubr.f32.gmra.mxu0 %v1606
        %v1608 = vpop.f32.mrf.mxu0
        %v1609 = vadd.f32 %v1492, %v1608
        %v1610 = vpop.f32.mrf.mxu0
        %1611 = vmatprep.mubr.f32.mxu0 0.0
        %v1612 = vand.u32 %v1246, 4294901760
        %v1613 = vsub.f32 %v1246, %v1612
        %1614 = vmatmul.mubr.f32.gmra.mxu0 %v1613
        %v1615 = vpop.f32.mrf.mxu0
        %v1616 = vadd.f32 %v1498, %v1615
        %v1617 = vpop.f32.mrf.mxu0
        %1618 = vmatprep.mubr.f32.mxu0 0.0
        %v1619 = vand.u32 %v1249, 4294901760
        %v1620 = vsub.f32 %v1249, %v1619
        %1621 = vmatmul.mubr.f32.gmra.mxu0 %v1620
        %v1622 = vpop.f32.mrf.mxu0
        %v1623 = vadd.f32 %v1504, %v1622
        %v1624 = vpop.f32.mrf.mxu0
        %1625 = vmatprep.mubr.f32.mxu0 0.0
        %v1626 = vand.u32 %v1252, 4294901760
        %v1627 = vsub.f32 %v1252, %v1626
        %1628 = vmatmul.mubr.f32.gmra.mxu0 %v1627
        %v1629 = vpop.f32.mrf.mxu0
        %v1630 = vadd.f32 %v1510, %v1629
        %v1631 = vpop.f32.mrf.mxu0
        %1632 = vmatprep.mubr.f32.mxu0 0.0
        %v1633 = vand.u32 %v1255, 4294901760
        %v1634 = vsub.f32 %v1255, %v1633
        %1635 = vmatmul.mubr.f32.gmra.mxu0 %v1634
        %v1636 = vpop.f32.mrf.mxu0
        %v1637 = vadd.f32 %v1516, %v1636
        %v1638 = vpop.f32.mrf.mxu0
        %1639 = vmatprep.mubr.f32.mxu0 0.0
        %v1640 = vand.u32 %v1258, 4294901760
        %v1641 = vsub.f32 %v1258, %v1640
        %1642 = vmatmul.mubr.f32.gmra.mxu0 %v1641
        %v1643 = vpop.f32.mrf.mxu0
        %v1644 = vadd.f32 %v1522, %v1643
        %v1645 = vpop.f32.mrf.mxu0
        %1646 = vmatprep.mubr.f32.mxu0 0.0
        %v1647 = vand.u32 %v1261, 4294901760
        %v1648 = vsub.f32 %v1261, %v1647
        %1649 = vmatmul.mubr.f32.gmra.mxu0 %v1648
        %v1650 = vpop.f32.mrf.mxu0
        %v1651 = vadd.f32 %v1528, %v1650
        %v1652 = vpop.f32.mrf.mxu0
        %1653 = vdwg.mxu0
        %1654 = vmatprep.subr.mxu0 0.0
        %1655 = vmatpush1.msra.mxu0 0.0
        %1656 = vmatprep.subr.mxu0 0.0
        %1657 = vmatpush1.msra.mxu0 0.0
        %1658 = vmatprep.subr.mxu0 0.0
        %1659 = vmatpush1.msra.mxu0 0.0
        %1660 = vmatprep.subr.mxu0 0.0
        %1661 = vmatpush1.msra.mxu0 0.0
        %1662 = vmatprep.subr.mxu0 0.0
        %1663 = vmatpush1.msra.mxu0 0.0
        %1664 = vmatprep.subr.mxu0 0.0
        %1665 = vmatpush1.msra.mxu0 0.0
        %1666 = vmatprep.subr.mxu0 0.0
        %1667 = vmatpush1.msra.mxu0 0.0
        %1668 = vmatprep.subr.mxu0 0.0
        %1669 = vmatpush1.msra.mxu0 0.0
        %1670 = vmatprep.subr.mxu0 0.0
        %1671 = vmatpush1.msra.mxu0 0.0
        %1672 = vmatprep.subr.mxu0 0.0
        %1673 = vmatpush1.msra.mxu0 0.0
        %1674 = vmatprep.subr.mxu0 0.0
        %1675 = vmatpush1.msra.mxu0 0.0
        %1676 = vmatprep.subr.mxu0 0.0
        %1677 = vmatpush1.msra.mxu0 0.0
        %1678 = vmatprep.subr.mxu0 0.0
        %1679 = vmatpush1.msra.mxu0 0.0
        %1680 = vmatprep.subr.mxu0 0.0
        %1681 = vmatpush1.msra.mxu0 0.0
        %1682 = vmatprep.subr.mxu0 0.0
        %1683 = vmatpush1.msra.mxu0 0.0
        %1684 = vmatprep.subr.mxu0 0.0
        %v1685 = vand.u32 %v1265, 4294901760
        %1686 = vmatpush1.msra.mxu0 %v1685
        %1687 = vmatprep.subr.mxu0 0.0
        %1688 = vmatpush2.msra.mxu0 0.0
        %1689 = vmatprep.subr.mxu0 0.0
        %1690 = vmatpush2.msra.mxu0 0.0
        %1691 = vmatprep.subr.mxu0 0.0
        %1692 = vmatpush2.msra.mxu0 0.0
        %1693 = vmatprep.subr.mxu0 0.0
        %1694 = vmatpush2.msra.mxu0 0.0
        %1695 = vmatprep.subr.mxu0 0.0
        %1696 = vmatpush2.msra.mxu0 0.0
        %1697 = vmatprep.subr.mxu0 0.0
        %1698 = vmatpush2.msra.mxu0 0.0
        %1699 = vmatprep.subr.mxu0 0.0
        %1700 = vmatpush2.msra.mxu0 0.0
        %1701 = vmatprep.subr.mxu0 0.0
        %1702 = vmatpush2.msra.mxu0 0.0
        %1703 = vmatprep.subr.mxu0 0.0
        %1704 = vmatpush2.msra.mxu0 0.0
        %1705 = vmatprep.subr.mxu0 0.0
        %1706 = vmatpush2.msra.mxu0 0.0
        %1707 = vmatprep.subr.mxu0 0.0
        %1708 = vmatpush2.msra.mxu0 0.0
        %1709 = vmatprep.subr.mxu0 0.0
        %1710 = vmatpush2.msra.mxu0 0.0
        %1711 = vmatprep.subr.mxu0 0.0
        %1712 = vmatpush2.msra.mxu0 0.0
        %1713 = vmatprep.subr.mxu0 0.0
        %1714 = vmatpush2.msra.mxu0 0.0
        %1715 = vmatprep.subr.mxu0 0.0
        %1716 = vmatpush2.msra.mxu0 0.0
        %1717 = vmatprep.subr.mxu0 0.0
        %1718 = vmatpush2.msra.mxu0 0.0
        %1719 = vmatprep.mubr.f32.mxu0 0.0
        %v1720 = vand.u32 %v1240, 4294901760
        %v1721 = vsub.f32 %v1240, %v1720
        %v1722 = vand.u32 %v1721, 4294901760
        %1723 = vmatmul.mubr.f32.gmra.mxu0 %v1722
        %v1724 = vpop.f32.mrf.mxu0
        %v1725 = vadd.f32 %v1602, %v1724
        %v1726 = vpop.f32.mrf.mxu0
        %1727 = vmatprep.mubr.f32.mxu0 0.0
        %v1728 = vand.u32 %v1243, 4294901760
        %v1729 = vsub.f32 %v1243, %v1728
        %v1730 = vand.u32 %v1729, 4294901760
        %1731 = vmatmul.mubr.f32.gmra.mxu0 %v1730
        %v1732 = vpop.f32.mrf.mxu0
        %v1733 = vadd.f32 %v1609, %v1732
        %v1734 = vpop.f32.mrf.mxu0
        %1735 = vmatprep.mubr.f32.mxu0 0.0
        %v1736 = vand.u32 %v1246, 4294901760
        %v1737 = vsub.f32 %v1246, %v1736
        %v1738 = vand.u32 %v1737, 4294901760
        %1739 = vmatmul.mubr.f32.gmra.mxu0 %v1738
        %v1740 = vpop.f32.mrf.mxu0
        %v1741 = vadd.f32 %v1616, %v1740
        %v1742 = vpop.f32.mrf.mxu0
        %1743 = vmatprep.mubr.f32.mxu0 0.0
        %v1744 = vand.u32 %v1249, 4294901760
        %v1745 = vsub.f32 %v1249, %v1744
        %v1746 = vand.u32 %v1745, 4294901760
        %1747 = vmatmul.mubr.f32.gmra.mxu0 %v1746
        %v1748 = vpop.f32.mrf.mxu0
        %v1749 = vadd.f32 %v1623, %v1748
        %v1750 = vpop.f32.mrf.mxu0
        %1751 = vmatprep.mubr.f32.mxu0 0.0
        %v1752 = vand.u32 %v1252, 4294901760
        %v1753 = vsub.f32 %v1252, %v1752
        %v1754 = vand.u32 %v1753, 4294901760
        %1755 = vmatmul.mubr.f32.gmra.mxu0 %v1754
        %v1756 = vpop.f32.mrf.mxu0
        %v1757 = vadd.f32 %v1630, %v1756
        %v1758 = vpop.f32.mrf.mxu0
        %1759 = vmatprep.mubr.f32.mxu0 0.0
        %v1760 = vand.u32 %v1255, 4294901760
        %v1761 = vsub.f32 %v1255, %v1760
        %v1762 = vand.u32 %v1761, 4294901760
        %1763 = vmatmul.mubr.f32.gmra.mxu0 %v1762
        %v1764 = vpop.f32.mrf.mxu0
        %v1765 = vadd.f32 %v1637, %v1764
        %v1766 = vpop.f32.mrf.mxu0
        %1767 = vmatprep.mubr.f32.mxu0 0.0
        %v1768 = vand.u32 %v1258, 4294901760
        %v1769 = vsub.f32 %v1258, %v1768
        %v1770 = vand.u32 %v1769, 4294901760
        %1771 = vmatmul.mubr.f32.gmra.mxu0 %v1770
        %v1772 = vpop.f32.mrf.mxu0
        %v1773 = vadd.f32 %v1644, %v1772
        %v1774 = vpop.f32.mrf.mxu0
        %1775 = vmatprep.mubr.f32.mxu0 0.0
        %v1776 = vand.u32 %v1261, 4294901760
        %v1777 = vsub.f32 %v1261, %v1776
        %v1778 = vand.u32 %v1777, 4294901760
        %1779 = vmatmul.mubr.f32.gmra.mxu0 %v1778
        %v1780 = vpop.f32.mrf.mxu0
        %v1781 = vadd.f32 %v1651, %v1780
        %v1782 = vpop.f32.mrf.mxu0
        %1783 = vdwg.mxu0
        %1784 = vmatprep.subr.mxu0 0.0
        %1785 = vmatpush1.msra.mxu0 0.0
        %1786 = vmatprep.subr.mxu0 0.0
        %1787 = vmatpush1.msra.mxu0 0.0
        %1788 = vmatprep.subr.mxu0 0.0
        %1789 = vmatpush1.msra.mxu0 0.0
        %1790 = vmatprep.subr.mxu0 0.0
        %1791 = vmatpush1.msra.mxu0 0.0
        %1792 = vmatprep.subr.mxu0 0.0
        %1793 = vmatpush1.msra.mxu0 0.0
        %1794 = vmatprep.subr.mxu0 0.0
        %1795 = vmatpush1.msra.mxu0 0.0
        %1796 = vmatprep.subr.mxu0 0.0
        %1797 = vmatpush1.msra.mxu0 0.0
        %1798 = vmatprep.subr.mxu0 0.0
        %1799 = vmatpush1.msra.mxu0 0.0
        %1800 = vmatprep.subr.mxu0 0.0
        %1801 = vmatpush1.msra.mxu0 0.0
        %1802 = vmatprep.subr.mxu0 0.0
        %1803 = vmatpush1.msra.mxu0 0.0
        %1804 = vmatprep.subr.mxu0 0.0
        %1805 = vmatpush1.msra.mxu0 0.0
        %1806 = vmatprep.subr.mxu0 0.0
        %1807 = vmatpush1.msra.mxu0 0.0
        %1808 = vmatprep.subr.mxu0 0.0
        %1809 = vmatpush1.msra.mxu0 0.0
        %1810 = vmatprep.subr.mxu0 0.0
        %1811 = vmatpush1.msra.mxu0 0.0
        %1812 = vmatprep.subr.mxu0 0.0
        %1813 = vmatpush1.msra.mxu0 0.0
        %1814 = vmatprep.subr.mxu0 0.0
        %v1815 = vand.u32 %v1265, 4294901760
        %v1816 = vsub.f32 %v1265, %v1815
        %v1817 = vand.u32 %v1816, 4294901760
        %1818 = vmatpush1.msra.mxu0 %v1817
        %1819 = vmatprep.subr.mxu0 0.0
        %1820 = vmatpush2.msra.mxu0 0.0
        %1821 = vmatprep.subr.mxu0 0.0
        %1822 = vmatpush2.msra.mxu0 0.0
        %1823 = vmatprep.subr.mxu0 0.0
        %1824 = vmatpush2.msra.mxu0 0.0
        %1825 = vmatprep.subr.mxu0 0.0
        %1826 = vmatpush2.msra.mxu0 0.0
        %1827 = vmatprep.subr.mxu0 0.0
        %1828 = vmatpush2.msra.mxu0 0.0
        %1829 = vmatprep.subr.mxu0 0.0
        %1830 = vmatpush2.msra.mxu0 0.0
        %1831 = vmatprep.subr.mxu0 0.0
        %1832 = vmatpush2.msra.mxu0 0.0
        %1833 = vmatprep.subr.mxu0 0.0
        %1834 = vmatpush2.msra.mxu0 0.0
        %1835 = vmatprep.subr.mxu0 0.0
        %1836 = vmatpush2.msra.mxu0 0.0
        %1837 = vmatprep.subr.mxu0 0.0
        %1838 = vmatpush2.msra.mxu0 0.0
        %1839 = vmatprep.subr.mxu0 0.0
        %1840 = vmatpush2.msra.mxu0 0.0
        %1841 = vmatprep.subr.mxu0 0.0
        %1842 = vmatpush2.msra.mxu0 0.0
        %1843 = vmatprep.subr.mxu0 0.0
        %1844 = vmatpush2.msra.mxu0 0.0
        %1845 = vmatprep.subr.mxu0 0.0
        %1846 = vmatpush2.msra.mxu0 0.0
        %1847 = vmatprep.subr.mxu0 0.0
        %1848 = vmatpush2.msra.mxu0 0.0
        %1849 = vmatprep.subr.mxu0 0.0
        %1850 = vmatpush2.msra.mxu0 0.0
        %1851 = vmatprep.mubr.f32.mxu0 0.0
        %v1852 = vand.u32 %v1240, 4294901760
        %1853 = vmatmul.mubr.f32.gmra.mxu0 %v1852
        %v1854 = vpop.f32.mrf.mxu0
        %v1855 = vadd.f32 %v1725, %v1854
        %v1856 = vpop.f32.mrf.mxu0
        %1857 = vmatprep.mubr.f32.mxu0 0.0
        %v1858 = vand.u32 %v1243, 4294901760
        %1859 = vmatmul.mubr.f32.gmra.mxu0 %v1858
        %v1860 = vpop.f32.mrf.mxu0
        %v1861 = vadd.f32 %v1733, %v1860
        %v1862 = vpop.f32.mrf.mxu0
        %1863 = vmatprep.mubr.f32.mxu0 0.0
        %v1864 = vand.u32 %v1246, 4294901760
        %1865 = vmatmul.mubr.f32.gmra.mxu0 %v1864
        %v1866 = vpop.f32.mrf.mxu0
        %v1867 = vadd.f32 %v1741, %v1866
        %v1868 = vpop.f32.mrf.mxu0
        %1869 = vmatprep.mubr.f32.mxu0 0.0
        %v1870 = vand.u32 %v1249, 4294901760
        %1871 = vmatmul.mubr.f32.gmra.mxu0 %v1870
        %v1872 = vpop.f32.mrf.mxu0
        %v1873 = vadd.f32 %v1749, %v1872
        %v1874 = vpop.f32.mrf.mxu0
        %1875 = vmatprep.mubr.f32.mxu0 0.0
        %v1876 = vand.u32 %v1252, 4294901760
        %1877 = vmatmul.mubr.f32.gmra.mxu0 %v1876
        %v1878 = vpop.f32.mrf.mxu0
        %v1879 = vadd.f32 %v1757, %v1878
        %v1880 = vpop.f32.mrf.mxu0
        %1881 = vmatprep.mubr.f32.mxu0 0.0
        %v1882 = vand.u32 %v1255, 4294901760
        %1883 = vmatmul.mubr.f32.gmra.mxu0 %v1882
        %v1884 = vpop.f32.mrf.mxu0
        %v1885 = vadd.f32 %v1765, %v1884
        %v1886 = vpop.f32.mrf.mxu0
        %1887 = vmatprep.mubr.f32.mxu0 0.0
        %v1888 = vand.u32 %v1258, 4294901760
        %1889 = vmatmul.mubr.f32.gmra.mxu0 %v1888
        %v1890 = vpop.f32.mrf.mxu0
        %v1891 = vadd.f32 %v1773, %v1890
        %v1892 = vpop.f32.mrf.mxu0
        %1893 = vmatprep.mubr.f32.mxu0 0.0
        %v1894 = vand.u32 %v1261, 4294901760
        %1895 = vmatmul.mubr.f32.gmra.mxu0 %v1894
        %v1896 = vpop.f32.mrf.mxu0
        %v1897 = vadd.f32 %v1781, %v1896
        %v1898 = vpop.f32.mrf.mxu0
        %1899 = vdwg.mxu0
        %1900 = vmatprep.subr.mxu0 0.0
        %1901 = vmatpush1.msra.mxu0 0.0
        %1902 = vmatprep.subr.mxu0 0.0
        %1903 = vmatpush1.msra.mxu0 0.0
        %1904 = vmatprep.subr.mxu0 0.0
        %1905 = vmatpush1.msra.mxu0 0.0
        %1906 = vmatprep.subr.mxu0 0.0
        %1907 = vmatpush1.msra.mxu0 0.0
        %1908 = vmatprep.subr.mxu0 0.0
        %1909 = vmatpush1.msra.mxu0 0.0
        %1910 = vmatprep.subr.mxu0 0.0
        %1911 = vmatpush1.msra.mxu0 0.0
        %1912 = vmatprep.subr.mxu0 0.0
        %1913 = vmatpush1.msra.mxu0 0.0
        %1914 = vmatprep.subr.mxu0 0.0
        %1915 = vmatpush1.msra.mxu0 0.0
        %1916 = vmatprep.subr.mxu0 0.0
        %1917 = vmatpush1.msra.mxu0 0.0
        %1918 = vmatprep.subr.mxu0 0.0
        %1919 = vmatpush1.msra.mxu0 0.0
        %1920 = vmatprep.subr.mxu0 0.0
        %1921 = vmatpush1.msra.mxu0 0.0
        %1922 = vmatprep.subr.mxu0 0.0
        %1923 = vmatpush1.msra.mxu0 0.0
        %1924 = vmatprep.subr.mxu0 0.0
        %1925 = vmatpush1.msra.mxu0 0.0
        %1926 = vmatprep.subr.mxu0 0.0
        %1927 = vmatpush1.msra.mxu0 0.0
        %1928 = vmatprep.subr.mxu0 0.0
        %1929 = vmatpush1.msra.mxu0 0.0
        %1930 = vmatprep.subr.mxu0 0.0
        %v1931 = vand.u32 %v1265, 4294901760
        %1932 = vmatpush1.msra.mxu0 %v1931
        %1933 = vmatprep.subr.mxu0 0.0
        %1934 = vmatpush2.msra.mxu0 0.0
        %1935 = vmatprep.subr.mxu0 0.0
        %1936 = vmatpush2.msra.mxu0 0.0
        %1937 = vmatprep.subr.mxu0 0.0
        %1938 = vmatpush2.msra.mxu0 0.0
        %1939 = vmatprep.subr.mxu0 0.0
        %1940 = vmatpush2.msra.mxu0 0.0
        %1941 = vmatprep.subr.mxu0 0.0
        %1942 = vmatpush2.msra.mxu0 0.0
        %1943 = vmatprep.subr.mxu0 0.0
        %1944 = vmatpush2.msra.mxu0 0.0
        %1945 = vmatprep.subr.mxu0 0.0
        %1946 = vmatpush2.msra.mxu0 0.0
        %1947 = vmatprep.subr.mxu0 0.0
        %1948 = vmatpush2.msra.mxu0 0.0
        %1949 = vmatprep.subr.mxu0 0.0
        %1950 = vmatpush2.msra.mxu0 0.0
        %1951 = vmatprep.subr.mxu0 0.0
        %1952 = vmatpush2.msra.mxu0 0.0
        %1953 = vmatprep.subr.mxu0 0.0
        %1954 = vmatpush2.msra.mxu0 0.0
        %1955 = vmatprep.subr.mxu0 0.0
        %1956 = vmatpush2.msra.mxu0 0.0
        %1957 = vmatprep.subr.mxu0 0.0
        %1958 = vmatpush2.msra.mxu0 0.0
        %1959 = vmatprep.subr.mxu0 0.0
        %1960 = vmatpush2.msra.mxu0 0.0
        %1961 = vmatprep.subr.mxu0 0.0
        %1962 = vmatpush2.msra.mxu0 0.0
        %1963 = vmatprep.subr.mxu0 0.0
        %1964 = vmatpush2.msra.mxu0 0.0
        %1965 = vmatprep.mubr.f32.mxu0 0.0
        %v1966 = vand.u32 %v1240, 4294901760
        %1967 = vmatmul.mubr.f32.gmra.mxu0 %v1966
        %v1968 = vpop.f32.mrf.mxu0
        %v1969 = vadd.f32 %v1855, %v1968
        %v1970 = vpop.f32.mrf.mxu0
        %1971 = vmatprep.mubr.f32.mxu0 0.0
        %v1972 = vand.u32 %v1243, 4294901760
        %1973 = vmatmul.mubr.f32.gmra.mxu0 %v1972
        %v1974 = vpop.f32.mrf.mxu0
        %v1975 = vadd.f32 %v1861, %v1974
        %v1976 = vpop.f32.mrf.mxu0
        %1977 = vmatprep.mubr.f32.mxu0 0.0
        %v1978 = vand.u32 %v1246, 4294901760
        %1979 = vmatmul.mubr.f32.gmra.mxu0 %v1978
        %v1980 = vpop.f32.mrf.mxu0
        %v1981 = vadd.f32 %v1867, %v1980
        %v1982 = vpop.f32.mrf.mxu0
        %1983 = vmatprep.mubr.f32.mxu0 0.0
        %v1984 = vand.u32 %v1249, 4294901760
        %1985 = vmatmul.mubr.f32.gmra.mxu0 %v1984
        %v1986 = vpop.f32.mrf.mxu0
        %v1987 = vadd.f32 %v1873, %v1986
        %v1988 = vpop.f32.mrf.mxu0
        %1989 = vmatprep.mubr.f32.mxu0 0.0
        %v1990 = vand.u32 %v1252, 4294901760
        %1991 = vmatmul.mubr.f32.gmra.mxu0 %v1990
        %v1992 = vpop.f32.mrf.mxu0
        %v1993 = vadd.f32 %v1879, %v1992
        %v1994 = vpop.f32.mrf.mxu0
        %1995 = vmatprep.mubr.f32.mxu0 0.0
        %v1996 = vand.u32 %v1255, 4294901760
        %1997 = vmatmul.mubr.f32.gmra.mxu0 %v1996
        %v1998 = vpop.f32.mrf.mxu0
        %v1999 = vadd.f32 %v1885, %v1998
        %v2000 = vpop.f32.mrf.mxu0
        %2001 = vmatprep.mubr.f32.mxu0 0.0
        %v2002 = vand.u32 %v1258, 4294901760
        %2003 = vmatmul.mubr.f32.gmra.mxu0 %v2002
        %v2004 = vpop.f32.mrf.mxu0
        %v2005 = vadd.f32 %v1891, %v2004
        %v2006 = vpop.f32.mrf.mxu0
        %2007 = vmatprep.mubr.f32.mxu0 0.0
        %v2008 = vand.u32 %v1261, 4294901760
        %2009 = vmatmul.mubr.f32.gmra.mxu0 %v2008
        %v2010 = vpop.f32.mrf.mxu0
        %v2011 = vadd.f32 %v1897, %v2010
        %v2012 = vpop.f32.mrf.mxu0
        %2013 = vdwg.mxu0
        %2014 = vxpose.xlu0.b32.start [1/16] %v1203, 128
        %2015 = vxpose.xlu0.b32.cont [2/16] 0.0, 128
        %2016 = vxpose.xlu0.b32.cont [3/16] 0.0, 128
        %2017 = vxpose.xlu0.b32.cont [4/16] 0.0, 128
        %2018 = vxpose.xlu0.b32.cont [5/16] 0.0, 128
        %2019 = vxpose.xlu0.b32.cont [6/16] 0.0, 128
        %2020 = vxpose.xlu0.b32.cont [7/16] 0.0, 128
        %2021 = vxpose.xlu0.b32.cont [8/16] 0.0, 128
        %2022 = vxpose.xlu0.b32.cont [9/16] 0.0, 128
        %2023 = vxpose.xlu0.b32.cont [10/16] 0.0, 128
        %2024 = vxpose.xlu0.b32.cont [11/16] 0.0, 128
        %2025 = vxpose.xlu0.b32.cont [12/16] 0.0, 128
        %2026 = vxpose.xlu0.b32.cont [13/16] 0.0, 128
        %2027 = vxpose.xlu0.b32.cont [14/16] 0.0, 128
        %2028 = vxpose.xlu0.b32.cont [15/16] 0.0, 128
        %2029 = vxpose.xlu0.b32.end [16/16] 0.0, 128
        %v2030 = vpop.trf.xlu0
        %v2031 = vpop.trf.xlu0
        %v2032 = vpop.trf.xlu0
        %v2033 = vpop.trf.xlu0
        %v2034 = vpop.trf.xlu0
        %v2035 = vpop.trf.xlu0
        %v2036 = vpop.trf.xlu0
        %v2037 = vpop.trf.xlu0
        %v2038 = vpop.trf.xlu0
        %v2039 = vpop.trf.xlu0
        %v2040 = vpop.trf.xlu0
        %v2041 = vpop.trf.xlu0
        %v2042 = vpop.trf.xlu0
        %v2043 = vpop.trf.xlu0
        %v2044 = vpop.trf.xlu0
        %v2045 = vpop.trf.xlu0
        %v2047 = vsel %vm1238, %v2030, 0
        %v2050 = vsel %vm1238, %v2031, 0
        %v2053 = vsel %vm1238, %v2032, 0
        %v2056 = vsel %vm1238, %v2033, 0
        %v2059 = vsel %vm1238, %v2034, 0
        %v2062 = vsel %vm1238, %v2035, 0
        %v2065 = vsel %vm1238, %v2036, 0
        %v2068 = vsel %vm1238, %v2037, 0
        %2070 = vmatprep.subr.mxu0 0.0
        %2071 = vmatpush1.msra.mxu0 0.0
        %2072 = vmatprep.subr.mxu0 0.0
        %2073 = vmatpush1.msra.mxu0 0.0
        %2074 = vmatprep.subr.mxu0 0.0
        %2075 = vmatpush1.msra.mxu0 0.0
        %2076 = vmatprep.subr.mxu0 0.0
        %2077 = vmatpush1.msra.mxu0 0.0
        %2078 = vmatprep.subr.mxu0 0.0
        %2079 = vmatpush1.msra.mxu0 0.0
        %2080 = vmatprep.subr.mxu0 0.0
        %2081 = vmatpush1.msra.mxu0 0.0
        %2082 = vmatprep.subr.mxu0 0.0
        %2083 = vmatpush1.msra.mxu0 0.0
        %2084 = vmatprep.subr.mxu0 0.0
        %2085 = vmatpush1.msra.mxu0 0.0
        %2086 = vmatprep.subr.mxu0 0.0
        %2087 = vmatpush1.msra.mxu0 0.0
        %2088 = vmatprep.subr.mxu0 0.0
        %2089 = vmatpush1.msra.mxu0 0.0
        %2090 = vmatprep.subr.mxu0 0.0
        %2091 = vmatpush1.msra.mxu0 0.0
        %2092 = vmatprep.subr.mxu0 0.0
        %2093 = vmatpush1.msra.mxu0 0.0
        %2094 = vmatprep.subr.mxu0 0.0
        %2095 = vmatpush1.msra.mxu0 0.0
        %2096 = vmatprep.subr.mxu0 0.0
        %2097 = vmatpush1.msra.mxu0 0.0
        %2098 = vmatprep.subr.mxu0 0.0
        %2099 = vmatpush1.msra.mxu0 0.0
        %2100 = vmatprep.subr.mxu0 0.0
        %v2101 = vand.u32 %v1265, 4294901760
        %2102 = vmatpush1.msra.mxu0 %v2101
        %2103 = vmatprep.subr.mxu0 0.0
        %2104 = vmatpush2.msra.mxu0 0.0
        %2105 = vmatprep.subr.mxu0 0.0
        %2106 = vmatpush2.msra.mxu0 0.0
        %2107 = vmatprep.subr.mxu0 0.0
        %2108 = vmatpush2.msra.mxu0 0.0
        %2109 = vmatprep.subr.mxu0 0.0
        %2110 = vmatpush2.msra.mxu0 0.0
        %2111 = vmatprep.subr.mxu0 0.0
        %2112 = vmatpush2.msra.mxu0 0.0
        %2113 = vmatprep.subr.mxu0 0.0
        %2114 = vmatpush2.msra.mxu0 0.0
        %2115 = vmatprep.subr.mxu0 0.0
        %2116 = vmatpush2.msra.mxu0 0.0
        %2117 = vmatprep.subr.mxu0 0.0
        %2118 = vmatpush2.msra.mxu0 0.0
        %2119 = vmatprep.subr.mxu0 0.0
        %2120 = vmatpush2.msra.mxu0 0.0
        %2121 = vmatprep.subr.mxu0 0.0
        %2122 = vmatpush2.msra.mxu0 0.0
        %2123 = vmatprep.subr.mxu0 0.0
        %2124 = vmatpush2.msra.mxu0 0.0
        %2125 = vmatprep.subr.mxu0 0.0
        %2126 = vmatpush2.msra.mxu0 0.0
        %2127 = vmatprep.subr.mxu0 0.0
        %2128 = vmatpush2.msra.mxu0 0.0
        %2129 = vmatprep.subr.mxu0 0.0
        %2130 = vmatpush2.msra.mxu0 0.0
        %2131 = vmatprep.subr.mxu0 0.0
        %2132 = vmatpush2.msra.mxu0 0.0
        %2133 = vmatprep.subr.mxu0 0.0
        %2134 = vmatpush2.msra.mxu0 0.0
        %2135 = vmatprep.mubr.f32.mxu0 0.0
        %v2136 = vand.u32 %v2047, 4294901760
        %v2137 = vsub.f32 %v2047, %v2136
        %v2138 = vand.u32 %v2137, 4294901760
        %v2139 = vsub.f32 %v2137, %v2138
        %v2140 = vand.u32 %v2139, 4294901760
        %2141 = vmatmul.mubr.f32.gmra.mxu0 %v2140
        %v2142 = vpop.f32.mrf.mxu0
        %v2143 = vadd.f32 0.0, %v2142
        %v2144 = vpop.f32.mrf.mxu0
        %2145 = vmatprep.mubr.f32.mxu0 0.0
        %v2146 = vand.u32 %v2050, 4294901760
        %v2147 = vsub.f32 %v2050, %v2146
        %v2148 = vand.u32 %v2147, 4294901760
        %v2149 = vsub.f32 %v2147, %v2148
        %v2150 = vand.u32 %v2149, 4294901760
        %2151 = vmatmul.mubr.f32.gmra.mxu0 %v2150
        %v2152 = vpop.f32.mrf.mxu0
        %v2153 = vadd.f32 0.0, %v2152
        %v2154 = vpop.f32.mrf.mxu0
        %2155 = vmatprep.mubr.f32.mxu0 0.0
        %v2156 = vand.u32 %v2053, 4294901760
        %v2157 = vsub.f32 %v2053, %v2156
        %v2158 = vand.u32 %v2157, 4294901760
        %v2159 = vsub.f32 %v2157, %v2158
        %v2160 = vand.u32 %v2159, 4294901760
        %2161 = vmatmul.mubr.f32.gmra.mxu0 %v2160
        %v2162 = vpop.f32.mrf.mxu0
        %v2163 = vadd.f32 0.0, %v2162
        %v2164 = vpop.f32.mrf.mxu0
        %2165 = vmatprep.mubr.f32.mxu0 0.0
        %v2166 = vand.u32 %v2056, 4294901760
        %v2167 = vsub.f32 %v2056, %v2166
        %v2168 = vand.u32 %v2167, 4294901760
        %v2169 = vsub.f32 %v2167, %v2168
        %v2170 = vand.u32 %v2169, 4294901760
        %2171 = vmatmul.mubr.f32.gmra.mxu0 %v2170
        %v2172 = vpop.f32.mrf.mxu0
        %v2173 = vadd.f32 0.0, %v2172
        %v2174 = vpop.f32.mrf.mxu0
        %2175 = vmatprep.mubr.f32.mxu0 0.0
        %v2176 = vand.u32 %v2059, 4294901760
        %v2177 = vsub.f32 %v2059, %v2176
        %v2178 = vand.u32 %v2177, 4294901760
        %v2179 = vsub.f32 %v2177, %v2178
        %v2180 = vand.u32 %v2179, 4294901760
        %2181 = vmatmul.mubr.f32.gmra.mxu0 %v2180
        %v2182 = vpop.f32.mrf.mxu0
        %v2183 = vadd.f32 0.0, %v2182
        %v2184 = vpop.f32.mrf.mxu0
        %2185 = vmatprep.mubr.f32.mxu0 0.0
        %v2186 = vand.u32 %v2062, 4294901760
        %v2187 = vsub.f32 %v2062, %v2186
        %v2188 = vand.u32 %v2187, 4294901760
        %v2189 = vsub.f32 %v2187, %v2188
        %v2190 = vand.u32 %v2189, 4294901760
        %2191 = vmatmul.mubr.f32.gmra.mxu0 %v2190
        %v2192 = vpop.f32.mrf.mxu0
        %v2193 = vadd.f32 0.0, %v2192
        %v2194 = vpop.f32.mrf.mxu0
        %2195 = vmatprep.mubr.f32.mxu0 0.0
        %v2196 = vand.u32 %v2065, 4294901760
        %v2197 = vsub.f32 %v2065, %v2196
        %v2198 = vand.u32 %v2197, 4294901760
        %v2199 = vsub.f32 %v2197, %v2198
        %v2200 = vand.u32 %v2199, 4294901760
        %2201 = vmatmul.mubr.f32.gmra.mxu0 %v2200
        %v2202 = vpop.f32.mrf.mxu0
        %v2203 = vadd.f32 0.0, %v2202
        %v2204 = vpop.f32.mrf.mxu0
        %2205 = vmatprep.mubr.f32.mxu0 0.0
        %v2206 = vand.u32 %v2068, 4294901760
        %v2207 = vsub.f32 %v2068, %v2206
        %v2208 = vand.u32 %v2207, 4294901760
        %v2209 = vsub.f32 %v2207, %v2208
        %v2210 = vand.u32 %v2209, 4294901760
        %2211 = vmatmul.mubr.f32.gmra.mxu0 %v2210
        %v2212 = vpop.f32.mrf.mxu0
        %v2213 = vadd.f32 0.0, %v2212
        %v2214 = vpop.f32.mrf.mxu0
        %2215 = vdwg.mxu0
        %2216 = vmatprep.subr.mxu0 0.0
        %2217 = vmatpush1.msra.mxu0 0.0
        %2218 = vmatprep.subr.mxu0 0.0
        %2219 = vmatpush1.msra.mxu0 0.0
        %2220 = vmatprep.subr.mxu0 0.0
        %2221 = vmatpush1.msra.mxu0 0.0
        %2222 = vmatprep.subr.mxu0 0.0
        %2223 = vmatpush1.msra.mxu0 0.0
        %2224 = vmatprep.subr.mxu0 0.0
        %2225 = vmatpush1.msra.mxu0 0.0
        %2226 = vmatprep.subr.mxu0 0.0
        %2227 = vmatpush1.msra.mxu0 0.0
        %2228 = vmatprep.subr.mxu0 0.0
        %2229 = vmatpush1.msra.mxu0 0.0
        %2230 = vmatprep.subr.mxu0 0.0
        %2231 = vmatpush1.msra.mxu0 0.0
        %2232 = vmatprep.subr.mxu0 0.0
        %2233 = vmatpush1.msra.mxu0 0.0
        %2234 = vmatprep.subr.mxu0 0.0
        %2235 = vmatpush1.msra.mxu0 0.0
        %2236 = vmatprep.subr.mxu0 0.0
        %2237 = vmatpush1.msra.mxu0 0.0
        %2238 = vmatprep.subr.mxu0 0.0
        %2239 = vmatpush1.msra.mxu0 0.0
        %2240 = vmatprep.subr.mxu0 0.0
        %2241 = vmatpush1.msra.mxu0 0.0
        %2242 = vmatprep.subr.mxu0 0.0
        %2243 = vmatpush1.msra.mxu0 0.0
        %2244 = vmatprep.subr.mxu0 0.0
        %2245 = vmatpush1.msra.mxu0 0.0
        %2246 = vmatprep.subr.mxu0 0.0
        %v2247 = vand.u32 %v1265, 4294901760
        %v2248 = vsub.f32 %v1265, %v2247
        %v2249 = vand.u32 %v2248, 4294901760
        %v2250 = vsub.f32 %v2248, %v2249
        %v2251 = vand.u32 %v2250, 4294901760
        %2252 = vmatpush1.msra.mxu0 %v2251
        %2253 = vmatprep.subr.mxu0 0.0
        %2254 = vmatpush2.msra.mxu0 0.0
        %2255 = vmatprep.subr.mxu0 0.0
        %2256 = vmatpush2.msra.mxu0 0.0
        %2257 = vmatprep.subr.mxu0 0.0
        %2258 = vmatpush2.msra.mxu0 0.0
        %2259 = vmatprep.subr.mxu0 0.0
        %2260 = vmatpush2.msra.mxu0 0.0
        %2261 = vmatprep.subr.mxu0 0.0
        %2262 = vmatpush2.msra.mxu0 0.0
        %2263 = vmatprep.subr.mxu0 0.0
        %2264 = vmatpush2.msra.mxu0 0.0
        %2265 = vmatprep.subr.mxu0 0.0
        %2266 = vmatpush2.msra.mxu0 0.0
        %2267 = vmatprep.subr.mxu0 0.0
        %2268 = vmatpush2.msra.mxu0 0.0
        %2269 = vmatprep.subr.mxu0 0.0
        %2270 = vmatpush2.msra.mxu0 0.0
        %2271 = vmatprep.subr.mxu0 0.0
        %2272 = vmatpush2.msra.mxu0 0.0
        %2273 = vmatprep.subr.mxu0 0.0
        %2274 = vmatpush2.msra.mxu0 0.0
        %2275 = vmatprep.subr.mxu0 0.0
        %2276 = vmatpush2.msra.mxu0 0.0
        %2277 = vmatprep.subr.mxu0 0.0
        %2278 = vmatpush2.msra.mxu0 0.0
        %2279 = vmatprep.subr.mxu0 0.0
        %2280 = vmatpush2.msra.mxu0 0.0
        %2281 = vmatprep.subr.mxu0 0.0
        %2282 = vmatpush2.msra.mxu0 0.0
        %2283 = vmatprep.subr.mxu0 0.0
        %2284 = vmatpush2.msra.mxu0 0.0
        %2285 = vmatprep.mubr.f32.mxu0 0.0
        %v2286 = vand.u32 %v2047, 4294901760
        %2287 = vmatmul.mubr.f32.gmra.mxu0 %v2286
        %v2288 = vpop.f32.mrf.mxu0
        %v2289 = vadd.f32 %v2143, %v2288
        %v2290 = vpop.f32.mrf.mxu0
        %2291 = vmatprep.mubr.f32.mxu0 0.0
        %v2292 = vand.u32 %v2050, 4294901760
        %2293 = vmatmul.mubr.f32.gmra.mxu0 %v2292
        %v2294 = vpop.f32.mrf.mxu0
        %v2295 = vadd.f32 %v2153, %v2294
        %v2296 = vpop.f32.mrf.mxu0
        %2297 = vmatprep.mubr.f32.mxu0 0.0
        %v2298 = vand.u32 %v2053, 4294901760
        %2299 = vmatmul.mubr.f32.gmra.mxu0 %v2298
        %v2300 = vpop.f32.mrf.mxu0
        %v2301 = vadd.f32 %v2163, %v2300
        %v2302 = vpop.f32.mrf.mxu0
        %2303 = vmatprep.mubr.f32.mxu0 0.0
        %v2304 = vand.u32 %v2056, 4294901760
        %2305 = vmatmul.mubr.f32.gmra.mxu0 %v2304
        %v2306 = vpop.f32.mrf.mxu0
        %v2307 = vadd.f32 %v2173, %v2306
        %v2308 = vpop.f32.mrf.mxu0
        %2309 = vmatprep.mubr.f32.mxu0 0.0
        %v2310 = vand.u32 %v2059, 4294901760
        %2311 = vmatmul.mubr.f32.gmra.mxu0 %v2310
        %v2312 = vpop.f32.mrf.mxu0
        %v2313 = vadd.f32 %v2183, %v2312
        %v2314 = vpop.f32.mrf.mxu0
        %2315 = vmatprep.mubr.f32.mxu0 0.0
        %v2316 = vand.u32 %v2062, 4294901760
        %2317 = vmatmul.mubr.f32.gmra.mxu0 %v2316
        %v2318 = vpop.f32.mrf.mxu0
        %v2319 = vadd.f32 %v2193, %v2318
        %v2320 = vpop.f32.mrf.mxu0
        %2321 = vmatprep.mubr.f32.mxu0 0.0
        %v2322 = vand.u32 %v2065, 4294901760
        %2323 = vmatmul.mubr.f32.gmra.mxu0 %v2322
        %v2324 = vpop.f32.mrf.mxu0
        %v2325 = vadd.f32 %v2203, %v2324
        %v2326 = vpop.f32.mrf.mxu0
        %2327 = vmatprep.mubr.f32.mxu0 0.0
        %v2328 = vand.u32 %v2068, 4294901760
        %2329 = vmatmul.mubr.f32.gmra.mxu0 %v2328
        %v2330 = vpop.f32.mrf.mxu0
        %v2331 = vadd.f32 %v2213, %v2330
        %v2332 = vpop.f32.mrf.mxu0
        %2333 = vdwg.mxu0
        %2334 = vmatprep.subr.mxu0 0.0
        %2335 = vmatpush1.msra.mxu0 0.0
        %2336 = vmatprep.subr.mxu0 0.0
        %2337 = vmatpush1.msra.mxu0 0.0
        %2338 = vmatprep.subr.mxu0 0.0
        %2339 = vmatpush1.msra.mxu0 0.0
        %2340 = vmatprep.subr.mxu0 0.0
        %2341 = vmatpush1.msra.mxu0 0.0
        %2342 = vmatprep.subr.mxu0 0.0
        %2343 = vmatpush1.msra.mxu0 0.0
        %2344 = vmatprep.subr.mxu0 0.0
        %2345 = vmatpush1.msra.mxu0 0.0
        %2346 = vmatprep.subr.mxu0 0.0
        %2347 = vmatpush1.msra.mxu0 0.0
        %2348 = vmatprep.subr.mxu0 0.0
        %2349 = vmatpush1.msra.mxu0 0.0
        %2350 = vmatprep.subr.mxu0 0.0
        %2351 = vmatpush1.msra.mxu0 0.0
        %2352 = vmatprep.subr.mxu0 0.0
        %2353 = vmatpush1.msra.mxu0 0.0
        %2354 = vmatprep.subr.mxu0 0.0
        %2355 = vmatpush1.msra.mxu0 0.0
        %2356 = vmatprep.subr.mxu0 0.0
        %2357 = vmatpush1.msra.mxu0 0.0
        %2358 = vmatprep.subr.mxu0 0.0
        %2359 = vmatpush1.msra.mxu0 0.0
        %2360 = vmatprep.subr.mxu0 0.0
        %2361 = vmatpush1.msra.mxu0 0.0
        %2362 = vmatprep.subr.mxu0 0.0
        %2363 = vmatpush1.msra.mxu0 0.0
        %2364 = vmatprep.subr.mxu0 0.0
        %v2365 = vand.u32 %v1265, 4294901760
        %v2366 = vsub.f32 %v1265, %v2365
        %2367 = vmatpush1.msra.mxu0 %v2366
        %2368 = vmatprep.subr.mxu0 0.0
        %2369 = vmatpush2.msra.mxu0 0.0
        %2370 = vmatprep.subr.mxu0 0.0
        %2371 = vmatpush2.msra.mxu0 0.0
        %2372 = vmatprep.subr.mxu0 0.0
        %2373 = vmatpush2.msra.mxu0 0.0
        %2374 = vmatprep.subr.mxu0 0.0
        %2375 = vmatpush2.msra.mxu0 0.0
        %2376 = vmatprep.subr.mxu0 0.0
        %2377 = vmatpush2.msra.mxu0 0.0
        %2378 = vmatprep.subr.mxu0 0.0
        %2379 = vmatpush2.msra.mxu0 0.0
        %2380 = vmatprep.subr.mxu0 0.0
        %2381 = vmatpush2.msra.mxu0 0.0
        %2382 = vmatprep.subr.mxu0 0.0
        %2383 = vmatpush2.msra.mxu0 0.0
        %2384 = vmatprep.subr.mxu0 0.0
        %2385 = vmatpush2.msra.mxu0 0.0
        %2386 = vmatprep.subr.mxu0 0.0
        %2387 = vmatpush2.msra.mxu0 0.0
        %2388 = vmatprep.subr.mxu0 0.0
        %2389 = vmatpush2.msra.mxu0 0.0
        %2390 = vmatprep.subr.mxu0 0.0
        %2391 = vmatpush2.msra.mxu0 0.0
        %2392 = vmatprep.subr.mxu0 0.0
        %2393 = vmatpush2.msra.mxu0 0.0
        %2394 = vmatprep.subr.mxu0 0.0
        %2395 = vmatpush2.msra.mxu0 0.0
        %2396 = vmatprep.subr.mxu0 0.0
        %2397 = vmatpush2.msra.mxu0 0.0
        %2398 = vmatprep.subr.mxu0 0.0
        %2399 = vmatpush2.msra.mxu0 0.0
        %2400 = vmatprep.mubr.f32.mxu0 0.0
        %v2401 = vand.u32 %v2047, 4294901760
        %v2402 = vsub.f32 %v2047, %v2401
        %2403 = vmatmul.mubr.f32.gmra.mxu0 %v2402
        %v2404 = vpop.f32.mrf.mxu0
        %v2405 = vadd.f32 %v2289, %v2404
        %v2406 = vpop.f32.mrf.mxu0
        %2407 = vmatprep.mubr.f32.mxu0 0.0
        %v2408 = vand.u32 %v2050, 4294901760
        %v2409 = vsub.f32 %v2050, %v2408
        %2410 = vmatmul.mubr.f32.gmra.mxu0 %v2409
        %v2411 = vpop.f32.mrf.mxu0
        %v2412 = vadd.f32 %v2295, %v2411
        %v2413 = vpop.f32.mrf.mxu0
        %2414 = vmatprep.mubr.f32.mxu0 0.0
        %v2415 = vand.u32 %v2053, 4294901760
        %v2416 = vsub.f32 %v2053, %v2415
        %2417 = vmatmul.mubr.f32.gmra.mxu0 %v2416
        %v2418 = vpop.f32.mrf.mxu0
        %v2419 = vadd.f32 %v2301, %v2418
        %v2420 = vpop.f32.mrf.mxu0
        %2421 = vmatprep.mubr.f32.mxu0 0.0
        %v2422 = vand.u32 %v2056, 4294901760
        %v2423 = vsub.f32 %v2056, %v2422
        %2424 = vmatmul.mubr.f32.gmra.mxu0 %v2423
        %v2425 = vpop.f32.mrf.mxu0
        %v2426 = vadd.f32 %v2307, %v2425
        %v2427 = vpop.f32.mrf.mxu0
        %2428 = vmatprep.mubr.f32.mxu0 0.0
        %v2429 = vand.u32 %v2059, 4294901760
        %v2430 = vsub.f32 %v2059, %v2429
        %2431 = vmatmul.mubr.f32.gmra.mxu0 %v2430
        %v2432 = vpop.f32.mrf.mxu0
        %v2433 = vadd.f32 %v2313, %v2432
        %v2434 = vpop.f32.mrf.mxu0
        %2435 = vmatprep.mubr.f32.mxu0 0.0
        %v2436 = vand.u32 %v2062, 4294901760
        %v2437 = vsub.f32 %v2062, %v2436
        %2438 = vmatmul.mubr.f32.gmra.mxu0 %v2437
        %v2439 = vpop.f32.mrf.mxu0
        %v2440 = vadd.f32 %v2319, %v2439
        %v2441 = vpop.f32.mrf.mxu0
        %2442 = vmatprep.mubr.f32.mxu0 0.0
        %v2443 = vand.u32 %v2065, 4294901760
        %v2444 = vsub.f32 %v2065, %v2443
        %2445 = vmatmul.mubr.f32.gmra.mxu0 %v2444
        %v2446 = vpop.f32.mrf.mxu0
        %v2447 = vadd.f32 %v2325, %v2446
        %v2448 = vpop.f32.mrf.mxu0
        %2449 = vmatprep.mubr.f32.mxu0 0.0
        %v2450 = vand.u32 %v2068, 4294901760
        %v2451 = vsub.f32 %v2068, %v2450
        %2452 = vmatmul.mubr.f32.gmra.mxu0 %v2451
        %v2453 = vpop.f32.mrf.mxu0
        %v2454 = vadd.f32 %v2331, %v2453
        %v2455 = vpop.f32.mrf.mxu0
        %2456 = vdwg.mxu0
        %2457 = vmatprep.subr.mxu0 0.0
        %2458 = vmatpush1.msra.mxu0 0.0
        %2459 = vmatprep.subr.mxu0 0.0
        %2460 = vmatpush1.msra.mxu0 0.0
        %2461 = vmatprep.subr.mxu0 0.0
        %2462 = vmatpush1.msra.mxu0 0.0
        %2463 = vmatprep.subr.mxu0 0.0
        %2464 = vmatpush1.msra.mxu0 0.0
        %2465 = vmatprep.subr.mxu0 0.0
        %2466 = vmatpush1.msra.mxu0 0.0
        %2467 = vmatprep.subr.mxu0 0.0
        %2468 = vmatpush1.msra.mxu0 0.0
        %2469 = vmatprep.subr.mxu0 0.0
        %2470 = vmatpush1.msra.mxu0 0.0
        %2471 = vmatprep.subr.mxu0 0.0
        %2472 = vmatpush1.msra.mxu0 0.0
        %2473 = vmatprep.subr.mxu0 0.0
        %2474 = vmatpush1.msra.mxu0 0.0
        %2475 = vmatprep.subr.mxu0 0.0
        %2476 = vmatpush1.msra.mxu0 0.0
        %2477 = vmatprep.subr.mxu0 0.0
        %2478 = vmatpush1.msra.mxu0 0.0
        %2479 = vmatprep.subr.mxu0 0.0
        %2480 = vmatpush1.msra.mxu0 0.0
        %2481 = vmatprep.subr.mxu0 0.0
        %2482 = vmatpush1.msra.mxu0 0.0
        %2483 = vmatprep.subr.mxu0 0.0
        %2484 = vmatpush1.msra.mxu0 0.0
        %2485 = vmatprep.subr.mxu0 0.0
        %2486 = vmatpush1.msra.mxu0 0.0
        %2487 = vmatprep.subr.mxu0 0.0
        %v2488 = vand.u32 %v1265, 4294901760
        %2489 = vmatpush1.msra.mxu0 %v2488
        %2490 = vmatprep.subr.mxu0 0.0
        %2491 = vmatpush2.msra.mxu0 0.0
        %2492 = vmatprep.subr.mxu0 0.0
        %2493 = vmatpush2.msra.mxu0 0.0
        %2494 = vmatprep.subr.mxu0 0.0
        %2495 = vmatpush2.msra.mxu0 0.0
        %2496 = vmatprep.subr.mxu0 0.0
        %2497 = vmatpush2.msra.mxu0 0.0
        %2498 = vmatprep.subr.mxu0 0.0
        %2499 = vmatpush2.msra.mxu0 0.0
        %2500 = vmatprep.subr.mxu0 0.0
        %2501 = vmatpush2.msra.mxu0 0.0
        %2502 = vmatprep.subr.mxu0 0.0
        %2503 = vmatpush2.msra.mxu0 0.0
        %2504 = vmatprep.subr.mxu0 0.0
        %2505 = vmatpush2.msra.mxu0 0.0
        %2506 = vmatprep.subr.mxu0 0.0
        %2507 = vmatpush2.msra.mxu0 0.0
        %2508 = vmatprep.subr.mxu0 0.0
        %2509 = vmatpush2.msra.mxu0 0.0
        %2510 = vmatprep.subr.mxu0 0.0
        %2511 = vmatpush2.msra.mxu0 0.0
        %2512 = vmatprep.subr.mxu0 0.0
        %2513 = vmatpush2.msra.mxu0 0.0
        %2514 = vmatprep.subr.mxu0 0.0
        %2515 = vmatpush2.msra.mxu0 0.0
        %2516 = vmatprep.subr.mxu0 0.0
        %2517 = vmatpush2.msra.mxu0 0.0
        %2518 = vmatprep.subr.mxu0 0.0
        %2519 = vmatpush2.msra.mxu0 0.0
        %2520 = vmatprep.subr.mxu0 0.0
        %2521 = vmatpush2.msra.mxu0 0.0
        %2522 = vmatprep.mubr.f32.mxu0 0.0
        %v2523 = vand.u32 %v2047, 4294901760
        %v2524 = vsub.f32 %v2047, %v2523
        %v2525 = vand.u32 %v2524, 4294901760
        %2526 = vmatmul.mubr.f32.gmra.mxu0 %v2525
        %v2527 = vpop.f32.mrf.mxu0
        %v2528 = vadd.f32 %v2405, %v2527
        %v2529 = vpop.f32.mrf.mxu0
        %2530 = vmatprep.mubr.f32.mxu0 0.0
        %v2531 = vand.u32 %v2050, 4294901760
        %v2532 = vsub.f32 %v2050, %v2531
        %v2533 = vand.u32 %v2532, 4294901760
        %2534 = vmatmul.mubr.f32.gmra.mxu0 %v2533
        %v2535 = vpop.f32.mrf.mxu0
        %v2536 = vadd.f32 %v2412, %v2535
        %v2537 = vpop.f32.mrf.mxu0
        %2538 = vmatprep.mubr.f32.mxu0 0.0
        %v2539 = vand.u32 %v2053, 4294901760
        %v2540 = vsub.f32 %v2053, %v2539
        %v2541 = vand.u32 %v2540, 4294901760
        %2542 = vmatmul.mubr.f32.gmra.mxu0 %v2541
        %v2543 = vpop.f32.mrf.mxu0
        %v2544 = vadd.f32 %v2419, %v2543
        %v2545 = vpop.f32.mrf.mxu0
        %2546 = vmatprep.mubr.f32.mxu0 0.0
        %v2547 = vand.u32 %v2056, 4294901760
        %v2548 = vsub.f32 %v2056, %v2547
        %v2549 = vand.u32 %v2548, 4294901760
        %2550 = vmatmul.mubr.f32.gmra.mxu0 %v2549
        %v2551 = vpop.f32.mrf.mxu0
        %v2552 = vadd.f32 %v2426, %v2551
        %v2553 = vpop.f32.mrf.mxu0
        %2554 = vmatprep.mubr.f32.mxu0 0.0
        %v2555 = vand.u32 %v2059, 4294901760
        %v2556 = vsub.f32 %v2059, %v2555
        %v2557 = vand.u32 %v2556, 4294901760
        %2558 = vmatmul.mubr.f32.gmra.mxu0 %v2557
        %v2559 = vpop.f32.mrf.mxu0
        %v2560 = vadd.f32 %v2433, %v2559
        %v2561 = vpop.f32.mrf.mxu0
        %2562 = vmatprep.mubr.f32.mxu0 0.0
        %v2563 = vand.u32 %v2062, 4294901760
        %v2564 = vsub.f32 %v2062, %v2563
        %v2565 = vand.u32 %v2564, 4294901760
        %2566 = vmatmul.mubr.f32.gmra.mxu0 %v2565
        %v2567 = vpop.f32.mrf.mxu0
        %v2568 = vadd.f32 %v2440, %v2567
        %v2569 = vpop.f32.mrf.mxu0
        %2570 = vmatprep.mubr.f32.mxu0 0.0
        %v2571 = vand.u32 %v2065, 4294901760
        %v2572 = vsub.f32 %v2065, %v2571
        %v2573 = vand.u32 %v2572, 4294901760
        %2574 = vmatmul.mubr.f32.gmra.mxu0 %v2573
        %v2575 = vpop.f32.mrf.mxu0
        %v2576 = vadd.f32 %v2447, %v2575
        %v2577 = vpop.f32.mrf.mxu0
        %2578 = vmatprep.mubr.f32.mxu0 0.0
        %v2579 = vand.u32 %v2068, 4294901760
        %v2580 = vsub.f32 %v2068, %v2579
        %v2581 = vand.u32 %v2580, 4294901760
        %2582 = vmatmul.mubr.f32.gmra.mxu0 %v2581
        %v2583 = vpop.f32.mrf.mxu0
        %v2584 = vadd.f32 %v2454, %v2583
        %v2585 = vpop.f32.mrf.mxu0
        %2586 = vdwg.mxu0
        %2587 = vmatprep.subr.mxu0 0.0
        %2588 = vmatpush1.msra.mxu0 0.0
        %2589 = vmatprep.subr.mxu0 0.0
        %2590 = vmatpush1.msra.mxu0 0.0
        %2591 = vmatprep.subr.mxu0 0.0
        %2592 = vmatpush1.msra.mxu0 0.0
        %2593 = vmatprep.subr.mxu0 0.0
        %2594 = vmatpush1.msra.mxu0 0.0
        %2595 = vmatprep.subr.mxu0 0.0
        %2596 = vmatpush1.msra.mxu0 0.0
        %2597 = vmatprep.subr.mxu0 0.0
        %2598 = vmatpush1.msra.mxu0 0.0
        %2599 = vmatprep.subr.mxu0 0.0
        %2600 = vmatpush1.msra.mxu0 0.0
        %2601 = vmatprep.subr.mxu0 0.0
        %2602 = vmatpush1.msra.mxu0 0.0
        %2603 = vmatprep.subr.mxu0 0.0
        %2604 = vmatpush1.msra.mxu0 0.0
        %2605 = vmatprep.subr.mxu0 0.0
        %2606 = vmatpush1.msra.mxu0 0.0
        %2607 = vmatprep.subr.mxu0 0.0
        %2608 = vmatpush1.msra.mxu0 0.0
        %2609 = vmatprep.subr.mxu0 0.0
        %2610 = vmatpush1.msra.mxu0 0.0
        %2611 = vmatprep.subr.mxu0 0.0
        %2612 = vmatpush1.msra.mxu0 0.0
        %2613 = vmatprep.subr.mxu0 0.0
        %2614 = vmatpush1.msra.mxu0 0.0
        %2615 = vmatprep.subr.mxu0 0.0
        %2616 = vmatpush1.msra.mxu0 0.0
        %2617 = vmatprep.subr.mxu0 0.0
        %v2618 = vand.u32 %v1265, 4294901760
        %v2619 = vsub.f32 %v1265, %v2618
        %v2620 = vand.u32 %v2619, 4294901760
        %2621 = vmatpush1.msra.mxu0 %v2620
        %2622 = vmatprep.subr.mxu0 0.0
        %2623 = vmatpush2.msra.mxu0 0.0
        %2624 = vmatprep.subr.mxu0 0.0
        %2625 = vmatpush2.msra.mxu0 0.0
        %2626 = vmatprep.subr.mxu0 0.0
        %2627 = vmatpush2.msra.mxu0 0.0
        %2628 = vmatprep.subr.mxu0 0.0
        %2629 = vmatpush2.msra.mxu0 0.0
        %2630 = vmatprep.subr.mxu0 0.0
        %2631 = vmatpush2.msra.mxu0 0.0
        %2632 = vmatprep.subr.mxu0 0.0
        %2633 = vmatpush2.msra.mxu0 0.0
        %2634 = vmatprep.subr.mxu0 0.0
        %2635 = vmatpush2.msra.mxu0 0.0
        %2636 = vmatprep.subr.mxu0 0.0
        %2637 = vmatpush2.msra.mxu0 0.0
        %2638 = vmatprep.subr.mxu0 0.0
        %2639 = vmatpush2.msra.mxu0 0.0
        %2640 = vmatprep.subr.mxu0 0.0
        %2641 = vmatpush2.msra.mxu0 0.0
        %2642 = vmatprep.subr.mxu0 0.0
        %2643 = vmatpush2.msra.mxu0 0.0
        %2644 = vmatprep.subr.mxu0 0.0
        %2645 = vmatpush2.msra.mxu0 0.0
        %2646 = vmatprep.subr.mxu0 0.0
        %2647 = vmatpush2.msra.mxu0 0.0
        %2648 = vmatprep.subr.mxu0 0.0
        %2649 = vmatpush2.msra.mxu0 0.0
        %2650 = vmatprep.subr.mxu0 0.0
        %2651 = vmatpush2.msra.mxu0 0.0
        %2652 = vmatprep.subr.mxu0 0.0
        %2653 = vmatpush2.msra.mxu0 0.0
        %2654 = vmatprep.mubr.f32.mxu0 0.0
        %v2655 = vand.u32 %v2047, 4294901760
        %2656 = vmatmul.mubr.f32.gmra.mxu0 %v2655
        %v2657 = vpop.f32.mrf.mxu0
        %v2658 = vadd.f32 %v2528, %v2657
        %v2659 = vpop.f32.mrf.mxu0
        %2660 = vmatprep.mubr.f32.mxu0 0.0
        %v2661 = vand.u32 %v2050, 4294901760
        %2662 = vmatmul.mubr.f32.gmra.mxu0 %v2661
        %v2663 = vpop.f32.mrf.mxu0
        %v2664 = vadd.f32 %v2536, %v2663
        %v2665 = vpop.f32.mrf.mxu0
        %2666 = vmatprep.mubr.f32.mxu0 0.0
        %v2667 = vand.u32 %v2053, 4294901760
        %2668 = vmatmul.mubr.f32.gmra.mxu0 %v2667
        %v2669 = vpop.f32.mrf.mxu0
        %v2670 = vadd.f32 %v2544, %v2669
        %v2671 = vpop.f32.mrf.mxu0
        %2672 = vmatprep.mubr.f32.mxu0 0.0
        %v2673 = vand.u32 %v2056, 4294901760
        %2674 = vmatmul.mubr.f32.gmra.mxu0 %v2673
        %v2675 = vpop.f32.mrf.mxu0
        %v2676 = vadd.f32 %v2552, %v2675
        %v2677 = vpop.f32.mrf.mxu0
        %2678 = vmatprep.mubr.f32.mxu0 0.0
        %v2679 = vand.u32 %v2059, 4294901760
        %2680 = vmatmul.mubr.f32.gmra.mxu0 %v2679
        %v2681 = vpop.f32.mrf.mxu0
        %v2682 = vadd.f32 %v2560, %v2681
        %v2683 = vpop.f32.mrf.mxu0
        %2684 = vmatprep.mubr.f32.mxu0 0.0
        %v2685 = vand.u32 %v2062, 4294901760
        %2686 = vmatmul.mubr.f32.gmra.mxu0 %v2685
        %v2687 = vpop.f32.mrf.mxu0
        %v2688 = vadd.f32 %v2568, %v2687
        %v2689 = vpop.f32.mrf.mxu0
        %2690 = vmatprep.mubr.f32.mxu0 0.0
        %v2691 = vand.u32 %v2065, 4294901760
        %2692 = vmatmul.mubr.f32.gmra.mxu0 %v2691
        %v2693 = vpop.f32.mrf.mxu0
        %v2694 = vadd.f32 %v2576, %v2693
        %v2695 = vpop.f32.mrf.mxu0
        %2696 = vmatprep.mubr.f32.mxu0 0.0
        %v2697 = vand.u32 %v2068, 4294901760
        %2698 = vmatmul.mubr.f32.gmra.mxu0 %v2697
        %v2699 = vpop.f32.mrf.mxu0
        %v2700 = vadd.f32 %v2584, %v2699
        %v2701 = vpop.f32.mrf.mxu0
        %2702 = vdwg.mxu0
        %2703 = vmatprep.subr.mxu0 0.0
        %2704 = vmatpush1.msra.mxu0 0.0
        %2705 = vmatprep.subr.mxu0 0.0
        %2706 = vmatpush1.msra.mxu0 0.0
        %2707 = vmatprep.subr.mxu0 0.0
        %2708 = vmatpush1.msra.mxu0 0.0
        %2709 = vmatprep.subr.mxu0 0.0
        %2710 = vmatpush1.msra.mxu0 0.0
        %2711 = vmatprep.subr.mxu0 0.0
        %2712 = vmatpush1.msra.mxu0 0.0
        %2713 = vmatprep.subr.mxu0 0.0
        %2714 = vmatpush1.msra.mxu0 0.0
        %2715 = vmatprep.subr.mxu0 0.0
        %2716 = vmatpush1.msra.mxu0 0.0
        %2717 = vmatprep.subr.mxu0 0.0
        %2718 = vmatpush1.msra.mxu0 0.0
        %2719 = vmatprep.subr.mxu0 0.0
        %2720 = vmatpush1.msra.mxu0 0.0
        %2721 = vmatprep.subr.mxu0 0.0
        %2722 = vmatpush1.msra.mxu0 0.0
        %2723 = vmatprep.subr.mxu0 0.0
        %2724 = vmatpush1.msra.mxu0 0.0
        %2725 = vmatprep.subr.mxu0 0.0
        %2726 = vmatpush1.msra.mxu0 0.0
        %2727 = vmatprep.subr.mxu0 0.0
        %2728 = vmatpush1.msra.mxu0 0.0
        %2729 = vmatprep.subr.mxu0 0.0
        %2730 = vmatpush1.msra.mxu0 0.0
        %2731 = vmatprep.subr.mxu0 0.0
        %2732 = vmatpush1.msra.mxu0 0.0
        %2733 = vmatprep.subr.mxu0 0.0
        %v2734 = vand.u32 %v1265, 4294901760
        %2735 = vmatpush1.msra.mxu0 %v2734
        %2736 = vmatprep.subr.mxu0 0.0
        %2737 = vmatpush2.msra.mxu0 0.0
        %2738 = vmatprep.subr.mxu0 0.0
        %2739 = vmatpush2.msra.mxu0 0.0
        %2740 = vmatprep.subr.mxu0 0.0
        %2741 = vmatpush2.msra.mxu0 0.0
        %2742 = vmatprep.subr.mxu0 0.0
        %2743 = vmatpush2.msra.mxu0 0.0
        %2744 = vmatprep.subr.mxu0 0.0
        %2745 = vmatpush2.msra.mxu0 0.0
        %2746 = vmatprep.subr.mxu0 0.0
        %2747 = vmatpush2.msra.mxu0 0.0
        %2748 = vmatprep.subr.mxu0 0.0
        %2749 = vmatpush2.msra.mxu0 0.0
        %2750 = vmatprep.subr.mxu0 0.0
        %2751 = vmatpush2.msra.mxu0 0.0
        %2752 = vmatprep.subr.mxu0 0.0
        %2753 = vmatpush2.msra.mxu0 0.0
        %2754 = vmatprep.subr.mxu0 0.0
        %2755 = vmatpush2.msra.mxu0 0.0
        %2756 = vmatprep.subr.mxu0 0.0
        %2757 = vmatpush2.msra.mxu0 0.0
        %2758 = vmatprep.subr.mxu0 0.0
        %2759 = vmatpush2.msra.mxu0 0.0
        %2760 = vmatprep.subr.mxu0 0.0
        %2761 = vmatpush2.msra.mxu0 0.0
        %2762 = vmatprep.subr.mxu0 0.0
        %2763 = vmatpush2.msra.mxu0 0.0
        %2764 = vmatprep.subr.mxu0 0.0
        %2765 = vmatpush2.msra.mxu0 0.0
        %2766 = vmatprep.subr.mxu0 0.0
        %2767 = vmatpush2.msra.mxu0 0.0
        %2768 = vmatprep.mubr.f32.mxu0 0.0
        %v2769 = vand.u32 %v2047, 4294901760
        %2770 = vmatmul.mubr.f32.gmra.mxu0 %v2769
        %v2771 = vpop.f32.mrf.mxu0
        %v2772 = vadd.f32 %v2658, %v2771
        %v2773 = vpop.f32.mrf.mxu0
        %2774 = vmatprep.mubr.f32.mxu0 0.0
        %v2775 = vand.u32 %v2050, 4294901760
        %2776 = vmatmul.mubr.f32.gmra.mxu0 %v2775
        %v2777 = vpop.f32.mrf.mxu0
        %v2778 = vadd.f32 %v2664, %v2777
        %v2779 = vpop.f32.mrf.mxu0
        %2780 = vmatprep.mubr.f32.mxu0 0.0
        %v2781 = vand.u32 %v2053, 4294901760
        %2782 = vmatmul.mubr.f32.gmra.mxu0 %v2781
        %v2783 = vpop.f32.mrf.mxu0
        %v2784 = vadd.f32 %v2670, %v2783
        %v2785 = vpop.f32.mrf.mxu0
        %2786 = vmatprep.mubr.f32.mxu0 0.0
        %v2787 = vand.u32 %v2056, 4294901760
        %2788 = vmatmul.mubr.f32.gmra.mxu0 %v2787
        %v2789 = vpop.f32.mrf.mxu0
        %v2790 = vadd.f32 %v2676, %v2789
        %v2791 = vpop.f32.mrf.mxu0
        %2792 = vmatprep.mubr.f32.mxu0 0.0
        %v2793 = vand.u32 %v2059, 4294901760
        %2794 = vmatmul.mubr.f32.gmra.mxu0 %v2793
        %v2795 = vpop.f32.mrf.mxu0
        %v2796 = vadd.f32 %v2682, %v2795
        %v2797 = vpop.f32.mrf.mxu0
        %2798 = vmatprep.mubr.f32.mxu0 0.0
        %v2799 = vand.u32 %v2062, 4294901760
        %2800 = vmatmul.mubr.f32.gmra.mxu0 %v2799
        %v2801 = vpop.f32.mrf.mxu0
        %v2802 = vadd.f32 %v2688, %v2801
        %v2803 = vpop.f32.mrf.mxu0
        %2804 = vmatprep.mubr.f32.mxu0 0.0
        %v2805 = vand.u32 %v2065, 4294901760
        %2806 = vmatmul.mubr.f32.gmra.mxu0 %v2805
        %v2807 = vpop.f32.mrf.mxu0
        %v2808 = vadd.f32 %v2694, %v2807
        %v2809 = vpop.f32.mrf.mxu0
        %2810 = vmatprep.mubr.f32.mxu0 0.0
        %v2811 = vand.u32 %v2068, 4294901760
        %2812 = vmatmul.mubr.f32.gmra.mxu0 %v2811
        %v2813 = vpop.f32.mrf.mxu0
        %v2814 = vadd.f32 %v2700, %v2813
        %v2815 = vpop.f32.mrf.mxu0
        %2816 = vdwg.mxu0
        %2817 = vxpose.xlu0.b32.start [1/16] %v1204, 128
        %2818 = vxpose.xlu0.b32.cont [2/16] 0.0, 128
        %2819 = vxpose.xlu0.b32.cont [3/16] 0.0, 128
        %2820 = vxpose.xlu0.b32.cont [4/16] 0.0, 128
        %2821 = vxpose.xlu0.b32.cont [5/16] 0.0, 128
        %2822 = vxpose.xlu0.b32.cont [6/16] 0.0, 128
        %2823 = vxpose.xlu0.b32.cont [7/16] 0.0, 128
        %2824 = vxpose.xlu0.b32.cont [8/16] 0.0, 128
        %2825 = vxpose.xlu0.b32.cont [9/16] 0.0, 128
        %2826 = vxpose.xlu0.b32.cont [10/16] 0.0, 128
        %2827 = vxpose.xlu0.b32.cont [11/16] 0.0, 128
        %2828 = vxpose.xlu0.b32.cont [12/16] 0.0, 128
        %2829 = vxpose.xlu0.b32.cont [13/16] 0.0, 128
        %2830 = vxpose.xlu0.b32.cont [14/16] 0.0, 128
        %2831 = vxpose.xlu0.b32.cont [15/16] 0.0, 128
        %2832 = vxpose.xlu0.b32.end [16/16] 0.0, 128
        %v2833 = vpop.trf.xlu0
        %v2834 = vpop.trf.xlu0
        %v2835 = vpop.trf.xlu0
        %v2836 = vpop.trf.xlu0
        %v2837 = vpop.trf.xlu0
        %v2838 = vpop.trf.xlu0
        %v2839 = vpop.trf.xlu0
        %v2840 = vpop.trf.xlu0
        %v2841 = vpop.trf.xlu0
        %v2842 = vpop.trf.xlu0
        %v2843 = vpop.trf.xlu0
        %v2844 = vpop.trf.xlu0
        %v2845 = vpop.trf.xlu0
        %v2846 = vpop.trf.xlu0
        %v2847 = vpop.trf.xlu0
        %v2848 = vpop.trf.xlu0
        %v2850 = vsel %vm1238, %v2833, 0
        %v2853 = vsel %vm1238, %v2834, 0
        %v2856 = vsel %vm1238, %v2835, 0
        %v2859 = vsel %vm1238, %v2836, 0
        %v2862 = vsel %vm1238, %v2837, 0
        %v2865 = vsel %vm1238, %v2838, 0
        %v2868 = vsel %vm1238, %v2839, 0
        %v2871 = vsel %vm1238, %v2840, 0
        %2873 = vmatprep.subr.mxu0 0.0
        %2874 = vmatpush1.msra.mxu0 0.0
        %2875 = vmatprep.subr.mxu0 0.0
        %2876 = vmatpush1.msra.mxu0 0.0
        %2877 = vmatprep.subr.mxu0 0.0
        %2878 = vmatpush1.msra.mxu0 0.0
        %2879 = vmatprep.subr.mxu0 0.0
        %2880 = vmatpush1.msra.mxu0 0.0
        %2881 = vmatprep.subr.mxu0 0.0
        %2882 = vmatpush1.msra.mxu0 0.0
        %2883 = vmatprep.subr.mxu0 0.0
        %2884 = vmatpush1.msra.mxu0 0.0
        %2885 = vmatprep.subr.mxu0 0.0
        %2886 = vmatpush1.msra.mxu0 0.0
        %2887 = vmatprep.subr.mxu0 0.0
        %2888 = vmatpush1.msra.mxu0 0.0
        %2889 = vmatprep.subr.mxu0 0.0
        %2890 = vmatpush1.msra.mxu0 0.0
        %2891 = vmatprep.subr.mxu0 0.0
        %2892 = vmatpush1.msra.mxu0 0.0
        %2893 = vmatprep.subr.mxu0 0.0
        %2894 = vmatpush1.msra.mxu0 0.0
        %2895 = vmatprep.subr.mxu0 0.0
        %2896 = vmatpush1.msra.mxu0 0.0
        %2897 = vmatprep.subr.mxu0 0.0
        %2898 = vmatpush1.msra.mxu0 0.0
        %2899 = vmatprep.subr.mxu0 0.0
        %2900 = vmatpush1.msra.mxu0 0.0
        %2901 = vmatprep.subr.mxu0 0.0
        %2902 = vmatpush1.msra.mxu0 0.0
        %2903 = vmatprep.subr.mxu0 0.0
        %v2904 = vand.u32 %v1265, 4294901760
        %2905 = vmatpush1.msra.mxu0 %v2904
        %2906 = vmatprep.subr.mxu0 0.0
        %2907 = vmatpush2.msra.mxu0 0.0
        %2908 = vmatprep.subr.mxu0 0.0
        %2909 = vmatpush2.msra.mxu0 0.0
        %2910 = vmatprep.subr.mxu0 0.0
        %2911 = vmatpush2.msra.mxu0 0.0
        %2912 = vmatprep.subr.mxu0 0.0
        %2913 = vmatpush2.msra.mxu0 0.0
        %2914 = vmatprep.subr.mxu0 0.0
        %2915 = vmatpush2.msra.mxu0 0.0
        %2916 = vmatprep.subr.mxu0 0.0
        %2917 = vmatpush2.msra.mxu0 0.0
        %2918 = vmatprep.subr.mxu0 0.0
        %2919 = vmatpush2.msra.mxu0 0.0
        %2920 = vmatprep.subr.mxu0 0.0
        %2921 = vmatpush2.msra.mxu0 0.0
        %2922 = vmatprep.subr.mxu0 0.0
        %2923 = vmatpush2.msra.mxu0 0.0
        %2924 = vmatprep.subr.mxu0 0.0
        %2925 = vmatpush2.msra.mxu0 0.0
        %2926 = vmatprep.subr.mxu0 0.0
        %2927 = vmatpush2.msra.mxu0 0.0
        %2928 = vmatprep.subr.mxu0 0.0
        %2929 = vmatpush2.msra.mxu0 0.0
        %2930 = vmatprep.subr.mxu0 0.0
        %2931 = vmatpush2.msra.mxu0 0.0
        %2932 = vmatprep.subr.mxu0 0.0
        %2933 = vmatpush2.msra.mxu0 0.0
        %2934 = vmatprep.subr.mxu0 0.0
        %2935 = vmatpush2.msra.mxu0 0.0
        %2936 = vmatprep.subr.mxu0 0.0
        %2937 = vmatpush2.msra.mxu0 0.0
        %2938 = vmatprep.mubr.f32.mxu0 0.0
        %v2939 = vand.u32 %v2850, 4294901760
        %v2940 = vsub.f32 %v2850, %v2939
        %v2941 = vand.u32 %v2940, 4294901760
        %v2942 = vsub.f32 %v2940, %v2941
        %v2943 = vand.u32 %v2942, 4294901760
        %2944 = vmatmul.mubr.f32.gmra.mxu0 %v2943
        %v2945 = vpop.f32.mrf.mxu0
        %v2946 = vadd.f32 0.0, %v2945
        %v2947 = vpop.f32.mrf.mxu0
        %2948 = vmatprep.mubr.f32.mxu0 0.0
        %v2949 = vand.u32 %v2853, 4294901760
        %v2950 = vsub.f32 %v2853, %v2949
        %v2951 = vand.u32 %v2950, 4294901760
        %v2952 = vsub.f32 %v2950, %v2951
        %v2953 = vand.u32 %v2952, 4294901760
        %2954 = vmatmul.mubr.f32.gmra.mxu0 %v2953
        %v2955 = vpop.f32.mrf.mxu0
        %v2956 = vadd.f32 0.0, %v2955
        %v2957 = vpop.f32.mrf.mxu0
        %2958 = vmatprep.mubr.f32.mxu0 0.0
        %v2959 = vand.u32 %v2856, 4294901760
        %v2960 = vsub.f32 %v2856, %v2959
        %v2961 = vand.u32 %v2960, 4294901760
        %v2962 = vsub.f32 %v2960, %v2961
        %v2963 = vand.u32 %v2962, 4294901760
        %2964 = vmatmul.mubr.f32.gmra.mxu0 %v2963
        %v2965 = vpop.f32.mrf.mxu0
        %v2966 = vadd.f32 0.0, %v2965
        %v2967 = vpop.f32.mrf.mxu0
        %2968 = vmatprep.mubr.f32.mxu0 0.0
        %v2969 = vand.u32 %v2859, 4294901760
        %v2970 = vsub.f32 %v2859, %v2969
        %v2971 = vand.u32 %v2970, 4294901760
        %v2972 = vsub.f32 %v2970, %v2971
        %v2973 = vand.u32 %v2972, 4294901760
        %2974 = vmatmul.mubr.f32.gmra.mxu0 %v2973
        %v2975 = vpop.f32.mrf.mxu0
        %v2976 = vadd.f32 0.0, %v2975
        %v2977 = vpop.f32.mrf.mxu0
        %2978 = vmatprep.mubr.f32.mxu0 0.0
        %v2979 = vand.u32 %v2862, 4294901760
        %v2980 = vsub.f32 %v2862, %v2979
        %v2981 = vand.u32 %v2980, 4294901760
        %v2982 = vsub.f32 %v2980, %v2981
        %v2983 = vand.u32 %v2982, 4294901760
        %2984 = vmatmul.mubr.f32.gmra.mxu0 %v2983
        %v2985 = vpop.f32.mrf.mxu0
        %v2986 = vadd.f32 0.0, %v2985
        %v2987 = vpop.f32.mrf.mxu0
        %2988 = vmatprep.mubr.f32.mxu0 0.0
        %v2989 = vand.u32 %v2865, 4294901760
        %v2990 = vsub.f32 %v2865, %v2989
        %v2991 = vand.u32 %v2990, 4294901760
        %v2992 = vsub.f32 %v2990, %v2991
        %v2993 = vand.u32 %v2992, 4294901760
        %2994 = vmatmul.mubr.f32.gmra.mxu0 %v2993
        %v2995 = vpop.f32.mrf.mxu0
        %v2996 = vadd.f32 0.0, %v2995
        %v2997 = vpop.f32.mrf.mxu0
        %2998 = vmatprep.mubr.f32.mxu0 0.0
        %v2999 = vand.u32 %v2868, 4294901760
        %v3000 = vsub.f32 %v2868, %v2999
        %v3001 = vand.u32 %v3000, 4294901760
        %v3002 = vsub.f32 %v3000, %v3001
        %v3003 = vand.u32 %v3002, 4294901760
        %3004 = vmatmul.mubr.f32.gmra.mxu0 %v3003
        %v3005 = vpop.f32.mrf.mxu0
        %v3006 = vadd.f32 0.0, %v3005
        %v3007 = vpop.f32.mrf.mxu0
        %3008 = vmatprep.mubr.f32.mxu0 0.0
        %v3009 = vand.u32 %v2871, 4294901760
        %v3010 = vsub.f32 %v2871, %v3009
        %v3011 = vand.u32 %v3010, 4294901760
        %v3012 = vsub.f32 %v3010, %v3011
        %v3013 = vand.u32 %v3012, 4294901760
        %3014 = vmatmul.mubr.f32.gmra.mxu0 %v3013
        %v3015 = vpop.f32.mrf.mxu0
        %v3016 = vadd.f32 0.0, %v3015
        %v3017 = vpop.f32.mrf.mxu0
        %3018 = vdwg.mxu0
        %3019 = vmatprep.subr.mxu0 0.0
        %3020 = vmatpush1.msra.mxu0 0.0
        %3021 = vmatprep.subr.mxu0 0.0
        %3022 = vmatpush1.msra.mxu0 0.0
        %3023 = vmatprep.subr.mxu0 0.0
        %3024 = vmatpush1.msra.mxu0 0.0
        %3025 = vmatprep.subr.mxu0 0.0
        %3026 = vmatpush1.msra.mxu0 0.0
        %3027 = vmatprep.subr.mxu0 0.0
        %3028 = vmatpush1.msra.mxu0 0.0
        %3029 = vmatprep.subr.mxu0 0.0
        %3030 = vmatpush1.msra.mxu0 0.0
        %3031 = vmatprep.subr.mxu0 0.0
        %3032 = vmatpush1.msra.mxu0 0.0
        %3033 = vmatprep.subr.mxu0 0.0
        %3034 = vmatpush1.msra.mxu0 0.0
        %3035 = vmatprep.subr.mxu0 0.0
        %3036 = vmatpush1.msra.mxu0 0.0
        %3037 = vmatprep.subr.mxu0 0.0
        %3038 = vmatpush1.msra.mxu0 0.0
        %3039 = vmatprep.subr.mxu0 0.0
        %3040 = vmatpush1.msra.mxu0 0.0
        %3041 = vmatprep.subr.mxu0 0.0
        %3042 = vmatpush1.msra.mxu0 0.0
        %3043 = vmatprep.subr.mxu0 0.0
        %3044 = vmatpush1.msra.mxu0 0.0
        %3045 = vmatprep.subr.mxu0 0.0
        %3046 = vmatpush1.msra.mxu0 0.0
        %3047 = vmatprep.subr.mxu0 0.0
        %3048 = vmatpush1.msra.mxu0 0.0
        %3049 = vmatprep.subr.mxu0 0.0
        %v3050 = vand.u32 %v1265, 4294901760
        %v3051 = vsub.f32 %v1265, %v3050
        %v3052 = vand.u32 %v3051, 4294901760
        %v3053 = vsub.f32 %v3051, %v3052
        %v3054 = vand.u32 %v3053, 4294901760
        %3055 = vmatpush1.msra.mxu0 %v3054
        %3056 = vmatprep.subr.mxu0 0.0
        %3057 = vmatpush2.msra.mxu0 0.0
        %3058 = vmatprep.subr.mxu0 0.0
        %3059 = vmatpush2.msra.mxu0 0.0
        %3060 = vmatprep.subr.mxu0 0.0
        %3061 = vmatpush2.msra.mxu0 0.0
        %3062 = vmatprep.subr.mxu0 0.0
        %3063 = vmatpush2.msra.mxu0 0.0
        %3064 = vmatprep.subr.mxu0 0.0
        %3065 = vmatpush2.msra.mxu0 0.0
        %3066 = vmatprep.subr.mxu0 0.0
        %3067 = vmatpush2.msra.mxu0 0.0
        %3068 = vmatprep.subr.mxu0 0.0
        %3069 = vmatpush2.msra.mxu0 0.0
        %3070 = vmatprep.subr.mxu0 0.0
        %3071 = vmatpush2.msra.mxu0 0.0
        %3072 = vmatprep.subr.mxu0 0.0
        %3073 = vmatpush2.msra.mxu0 0.0
        %3074 = vmatprep.subr.mxu0 0.0
        %3075 = vmatpush2.msra.mxu0 0.0
        %3076 = vmatprep.subr.mxu0 0.0
        %3077 = vmatpush2.msra.mxu0 0.0
        %3078 = vmatprep.subr.mxu0 0.0
        %3079 = vmatpush2.msra.mxu0 0.0
        %3080 = vmatprep.subr.mxu0 0.0
        %3081 = vmatpush2.msra.mxu0 0.0
        %3082 = vmatprep.subr.mxu0 0.0
        %3083 = vmatpush2.msra.mxu0 0.0
        %3084 = vmatprep.subr.mxu0 0.0
        %3085 = vmatpush2.msra.mxu0 0.0
        %3086 = vmatprep.subr.mxu0 0.0
        %3087 = vmatpush2.msra.mxu0 0.0
        %3088 = vmatprep.mubr.f32.mxu0 0.0
        %v3089 = vand.u32 %v2850, 4294901760
        %3090 = vmatmul.mubr.f32.gmra.mxu0 %v3089
        %v3091 = vpop.f32.mrf.mxu0
        %v3092 = vadd.f32 %v2946, %v3091
        %v3093 = vpop.f32.mrf.mxu0
        %3094 = vmatprep.mubr.f32.mxu0 0.0
        %v3095 = vand.u32 %v2853, 4294901760
        %3096 = vmatmul.mubr.f32.gmra.mxu0 %v3095
        %v3097 = vpop.f32.mrf.mxu0
        %v3098 = vadd.f32 %v2956, %v3097
        %v3099 = vpop.f32.mrf.mxu0
        %3100 = vmatprep.mubr.f32.mxu0 0.0
        %v3101 = vand.u32 %v2856, 4294901760
        %3102 = vmatmul.mubr.f32.gmra.mxu0 %v3101
        %v3103 = vpop.f32.mrf.mxu0
        %v3104 = vadd.f32 %v2966, %v3103
        %v3105 = vpop.f32.mrf.mxu0
        %3106 = vmatprep.mubr.f32.mxu0 0.0
        %v3107 = vand.u32 %v2859, 4294901760
        %3108 = vmatmul.mubr.f32.gmra.mxu0 %v3107
        %v3109 = vpop.f32.mrf.mxu0
        %v3110 = vadd.f32 %v2976, %v3109
        %v3111 = vpop.f32.mrf.mxu0
        %3112 = vmatprep.mubr.f32.mxu0 0.0
        %v3113 = vand.u32 %v2862, 4294901760
        %3114 = vmatmul.mubr.f32.gmra.mxu0 %v3113
        %v3115 = vpop.f32.mrf.mxu0
        %v3116 = vadd.f32 %v2986, %v3115
        %v3117 = vpop.f32.mrf.mxu0
        %3118 = vmatprep.mubr.f32.mxu0 0.0
        %v3119 = vand.u32 %v2865, 4294901760
        %3120 = vmatmul.mubr.f32.gmra.mxu0 %v3119
        %v3121 = vpop.f32.mrf.mxu0
        %v3122 = vadd.f32 %v2996, %v3121
        %v3123 = vpop.f32.mrf.mxu0
        %3124 = vmatprep.mubr.f32.mxu0 0.0
        %v3125 = vand.u32 %v2868, 4294901760
        %3126 = vmatmul.mubr.f32.gmra.mxu0 %v3125
        %v3127 = vpop.f32.mrf.mxu0
        %v3128 = vadd.f32 %v3006, %v3127
        %v3129 = vpop.f32.mrf.mxu0
        %3130 = vmatprep.mubr.f32.mxu0 0.0
        %v3131 = vand.u32 %v2871, 4294901760
        %3132 = vmatmul.mubr.f32.gmra.mxu0 %v3131
        %v3133 = vpop.f32.mrf.mxu0
        %v3134 = vadd.f32 %v3016, %v3133
        %v3135 = vpop.f32.mrf.mxu0
        %3136 = vdwg.mxu0
        %3137 = vmatprep.subr.mxu0 0.0
        %3138 = vmatpush1.msra.mxu0 0.0
        %3139 = vmatprep.subr.mxu0 0.0
        %3140 = vmatpush1.msra.mxu0 0.0
        %3141 = vmatprep.subr.mxu0 0.0
        %3142 = vmatpush1.msra.mxu0 0.0
        %3143 = vmatprep.subr.mxu0 0.0
        %3144 = vmatpush1.msra.mxu0 0.0
        %3145 = vmatprep.subr.mxu0 0.0
        %3146 = vmatpush1.msra.mxu0 0.0
        %3147 = vmatprep.subr.mxu0 0.0
        %3148 = vmatpush1.msra.mxu0 0.0
        %3149 = vmatprep.subr.mxu0 0.0
        %3150 = vmatpush1.msra.mxu0 0.0
        %3151 = vmatprep.subr.mxu0 0.0
        %3152 = vmatpush1.msra.mxu0 0.0
        %3153 = vmatprep.subr.mxu0 0.0
        %3154 = vmatpush1.msra.mxu0 0.0
        %3155 = vmatprep.subr.mxu0 0.0
        %3156 = vmatpush1.msra.mxu0 0.0
        %3157 = vmatprep.subr.mxu0 0.0
        %3158 = vmatpush1.msra.mxu0 0.0
        %3159 = vmatprep.subr.mxu0 0.0
        %3160 = vmatpush1.msra.mxu0 0.0
        %3161 = vmatprep.subr.mxu0 0.0
        %3162 = vmatpush1.msra.mxu0 0.0
        %3163 = vmatprep.subr.mxu0 0.0
        %3164 = vmatpush1.msra.mxu0 0.0
        %3165 = vmatprep.subr.mxu0 0.0
        %3166 = vmatpush1.msra.mxu0 0.0
        %3167 = vmatprep.subr.mxu0 0.0
        %v3168 = vand.u32 %v1265, 4294901760
        %v3169 = vsub.f32 %v1265, %v3168
        %3170 = vmatpush1.msra.mxu0 %v3169
        %3171 = vmatprep.subr.mxu0 0.0
        %3172 = vmatpush2.msra.mxu0 0.0
        %3173 = vmatprep.subr.mxu0 0.0
        %3174 = vmatpush2.msra.mxu0 0.0
        %3175 = vmatprep.subr.mxu0 0.0
        %3176 = vmatpush2.msra.mxu0 0.0
        %3177 = vmatprep.subr.mxu0 0.0
        %3178 = vmatpush2.msra.mxu0 0.0
        %3179 = vmatprep.subr.mxu0 0.0
        %3180 = vmatpush2.msra.mxu0 0.0
        %3181 = vmatprep.subr.mxu0 0.0
        %3182 = vmatpush2.msra.mxu0 0.0
        %3183 = vmatprep.subr.mxu0 0.0
        %3184 = vmatpush2.msra.mxu0 0.0
        %3185 = vmatprep.subr.mxu0 0.0
        %3186 = vmatpush2.msra.mxu0 0.0
        %3187 = vmatprep.subr.mxu0 0.0
        %3188 = vmatpush2.msra.mxu0 0.0
        %3189 = vmatprep.subr.mxu0 0.0
        %3190 = vmatpush2.msra.mxu0 0.0
        %3191 = vmatprep.subr.mxu0 0.0
        %3192 = vmatpush2.msra.mxu0 0.0
        %3193 = vmatprep.subr.mxu0 0.0
        %3194 = vmatpush2.msra.mxu0 0.0
        %3195 = vmatprep.subr.mxu0 0.0
        %3196 = vmatpush2.msra.mxu0 0.0
        %3197 = vmatprep.subr.mxu0 0.0
        %3198 = vmatpush2.msra.mxu0 0.0
        %3199 = vmatprep.subr.mxu0 0.0
        %3200 = vmatpush2.msra.mxu0 0.0
        %3201 = vmatprep.subr.mxu0 0.0
        %3202 = vmatpush2.msra.mxu0 0.0
        %3203 = vmatprep.mubr.f32.mxu0 0.0
        %v3204 = vand.u32 %v2850, 4294901760
        %v3205 = vsub.f32 %v2850, %v3204
        %3206 = vmatmul.mubr.f32.gmra.mxu0 %v3205
        %v3207 = vpop.f32.mrf.mxu0
        %v3208 = vadd.f32 %v3092, %v3207
        %v3209 = vpop.f32.mrf.mxu0
        %3210 = vmatprep.mubr.f32.mxu0 0.0
        %v3211 = vand.u32 %v2853, 4294901760
        %v3212 = vsub.f32 %v2853, %v3211
        %3213 = vmatmul.mubr.f32.gmra.mxu0 %v3212
        %v3214 = vpop.f32.mrf.mxu0
        %v3215 = vadd.f32 %v3098, %v3214
        %v3216 = vpop.f32.mrf.mxu0
        %3217 = vmatprep.mubr.f32.mxu0 0.0
        %v3218 = vand.u32 %v2856, 4294901760
        %v3219 = vsub.f32 %v2856, %v3218
        %3220 = vmatmul.mubr.f32.gmra.mxu0 %v3219
        %v3221 = vpop.f32.mrf.mxu0
        %v3222 = vadd.f32 %v3104, %v3221
        %v3223 = vpop.f32.mrf.mxu0
        %3224 = vmatprep.mubr.f32.mxu0 0.0
        %v3225 = vand.u32 %v2859, 4294901760
        %v3226 = vsub.f32 %v2859, %v3225
        %3227 = vmatmul.mubr.f32.gmra.mxu0 %v3226
        %v3228 = vpop.f32.mrf.mxu0
        %v3229 = vadd.f32 %v3110, %v3228
        %v3230 = vpop.f32.mrf.mxu0
        %3231 = vmatprep.mubr.f32.mxu0 0.0
        %v3232 = vand.u32 %v2862, 4294901760
        %v3233 = vsub.f32 %v2862, %v3232
        %3234 = vmatmul.mubr.f32.gmra.mxu0 %v3233
        %v3235 = vpop.f32.mrf.mxu0
        %v3236 = vadd.f32 %v3116, %v3235
        %v3237 = vpop.f32.mrf.mxu0
        %3238 = vmatprep.mubr.f32.mxu0 0.0
        %v3239 = vand.u32 %v2865, 4294901760
        %v3240 = vsub.f32 %v2865, %v3239
        %3241 = vmatmul.mubr.f32.gmra.mxu0 %v3240
        %v3242 = vpop.f32.mrf.mxu0
        %v3243 = vadd.f32 %v3122, %v3242
        %v3244 = vpop.f32.mrf.mxu0
        %3245 = vmatprep.mubr.f32.mxu0 0.0
        %v3246 = vand.u32 %v2868, 4294901760
        %v3247 = vsub.f32 %v2868, %v3246
        %3248 = vmatmul.mubr.f32.gmra.mxu0 %v3247
        %v3249 = vpop.f32.mrf.mxu0
        %v3250 = vadd.f32 %v3128, %v3249
        %v3251 = vpop.f32.mrf.mxu0
        %3252 = vmatprep.mubr.f32.mxu0 0.0
        %v3253 = vand.u32 %v2871, 4294901760
        %v3254 = vsub.f32 %v2871, %v3253
        %3255 = vmatmul.mubr.f32.gmra.mxu0 %v3254
        %v3256 = vpop.f32.mrf.mxu0
        %v3257 = vadd.f32 %v3134, %v3256
        %v3258 = vpop.f32.mrf.mxu0
        %3259 = vdwg.mxu0
        %3260 = vmatprep.subr.mxu0 0.0
        %3261 = vmatpush1.msra.mxu0 0.0
        %3262 = vmatprep.subr.mxu0 0.0
        %3263 = vmatpush1.msra.mxu0 0.0
        %3264 = vmatprep.subr.mxu0 0.0
        %3265 = vmatpush1.msra.mxu0 0.0
        %3266 = vmatprep.subr.mxu0 0.0
        %3267 = vmatpush1.msra.mxu0 0.0
        %3268 = vmatprep.subr.mxu0 0.0
        %3269 = vmatpush1.msra.mxu0 0.0
        %3270 = vmatprep.subr.mxu0 0.0
        %3271 = vmatpush1.msra.mxu0 0.0
        %3272 = vmatprep.subr.mxu0 0.0
        %3273 = vmatpush1.msra.mxu0 0.0
        %3274 = vmatprep.subr.mxu0 0.0
        %3275 = vmatpush1.msra.mxu0 0.0
        %3276 = vmatprep.subr.mxu0 0.0
        %3277 = vmatpush1.msra.mxu0 0.0
        %3278 = vmatprep.subr.mxu0 0.0
        %3279 = vmatpush1.msra.mxu0 0.0
        %3280 = vmatprep.subr.mxu0 0.0
        %3281 = vmatpush1.msra.mxu0 0.0
        %3282 = vmatprep.subr.mxu0 0.0
        %3283 = vmatpush1.msra.mxu0 0.0
        %3284 = vmatprep.subr.mxu0 0.0
        %3285 = vmatpush1.msra.mxu0 0.0
        %3286 = vmatprep.subr.mxu0 0.0
        %3287 = vmatpush1.msra.mxu0 0.0
        %3288 = vmatprep.subr.mxu0 0.0
        %3289 = vmatpush1.msra.mxu0 0.0
        %3290 = vmatprep.subr.mxu0 0.0
        %v3291 = vand.u32 %v1265, 4294901760
        %3292 = vmatpush1.msra.mxu0 %v3291
        %3293 = vmatprep.subr.mxu0 0.0
        %3294 = vmatpush2.msra.mxu0 0.0
        %3295 = vmatprep.subr.mxu0 0.0
        %3296 = vmatpush2.msra.mxu0 0.0
        %3297 = vmatprep.subr.mxu0 0.0
        %3298 = vmatpush2.msra.mxu0 0.0
        %3299 = vmatprep.subr.mxu0 0.0
        %3300 = vmatpush2.msra.mxu0 0.0
        %3301 = vmatprep.subr.mxu0 0.0
        %3302 = vmatpush2.msra.mxu0 0.0
        %3303 = vmatprep.subr.mxu0 0.0
        %3304 = vmatpush2.msra.mxu0 0.0
        %3305 = vmatprep.subr.mxu0 0.0
        %3306 = vmatpush2.msra.mxu0 0.0
        %3307 = vmatprep.subr.mxu0 0.0
        %3308 = vmatpush2.msra.mxu0 0.0
        %3309 = vmatprep.subr.mxu0 0.0
        %3310 = vmatpush2.msra.mxu0 0.0
        %3311 = vmatprep.subr.mxu0 0.0
        %3312 = vmatpush2.msra.mxu0 0.0
        %3313 = vmatprep.subr.mxu0 0.0
        %3314 = vmatpush2.msra.mxu0 0.0
        %3315 = vmatprep.subr.mxu0 0.0
        %3316 = vmatpush2.msra.mxu0 0.0
        %3317 = vmatprep.subr.mxu0 0.0
        %3318 = vmatpush2.msra.mxu0 0.0
        %3319 = vmatprep.subr.mxu0 0.0
        %3320 = vmatpush2.msra.mxu0 0.0
        %3321 = vmatprep.subr.mxu0 0.0
        %3322 = vmatpush2.msra.mxu0 0.0
        %3323 = vmatprep.subr.mxu0 0.0
        %3324 = vmatpush2.msra.mxu0 0.0
        %3325 = vmatprep.mubr.f32.mxu0 0.0
        %v3326 = vand.u32 %v2850, 4294901760
        %v3327 = vsub.f32 %v2850, %v3326
        %v3328 = vand.u32 %v3327, 4294901760
        %3329 = vmatmul.mubr.f32.gmra.mxu0 %v3328
        %v3330 = vpop.f32.mrf.mxu0
        %v3331 = vadd.f32 %v3208, %v3330
        %v3332 = vpop.f32.mrf.mxu0
        %3333 = vmatprep.mubr.f32.mxu0 0.0
        %v3334 = vand.u32 %v2853, 4294901760
        %v3335 = vsub.f32 %v2853, %v3334
        %v3336 = vand.u32 %v3335, 4294901760
        %3337 = vmatmul.mubr.f32.gmra.mxu0 %v3336
        %v3338 = vpop.f32.mrf.mxu0
        %v3339 = vadd.f32 %v3215, %v3338
        %v3340 = vpop.f32.mrf.mxu0
        %3341 = vmatprep.mubr.f32.mxu0 0.0
        %v3342 = vand.u32 %v2856, 4294901760
        %v3343 = vsub.f32 %v2856, %v3342
        %v3344 = vand.u32 %v3343, 4294901760
        %3345 = vmatmul.mubr.f32.gmra.mxu0 %v3344
        %v3346 = vpop.f32.mrf.mxu0
        %v3347 = vadd.f32 %v3222, %v3346
        %v3348 = vpop.f32.mrf.mxu0
        %3349 = vmatprep.mubr.f32.mxu0 0.0
        %v3350 = vand.u32 %v2859, 4294901760
        %v3351 = vsub.f32 %v2859, %v3350
        %v3352 = vand.u32 %v3351, 4294901760
        %3353 = vmatmul.mubr.f32.gmra.mxu0 %v3352
        %v3354 = vpop.f32.mrf.mxu0
        %v3355 = vadd.f32 %v3229, %v3354
        %v3356 = vpop.f32.mrf.mxu0
        %3357 = vmatprep.mubr.f32.mxu0 0.0
        %v3358 = vand.u32 %v2862, 4294901760
        %v3359 = vsub.f32 %v2862, %v3358
        %v3360 = vand.u32 %v3359, 4294901760
        %3361 = vmatmul.mubr.f32.gmra.mxu0 %v3360
        %v3362 = vpop.f32.mrf.mxu0
        %v3363 = vadd.f32 %v3236, %v3362
        %v3364 = vpop.f32.mrf.mxu0
        %3365 = vmatprep.mubr.f32.mxu0 0.0
        %v3366 = vand.u32 %v2865, 4294901760
        %v3367 = vsub.f32 %v2865, %v3366
        %v3368 = vand.u32 %v3367, 4294901760
        %3369 = vmatmul.mubr.f32.gmra.mxu0 %v3368
        %v3370 = vpop.f32.mrf.mxu0
        %v3371 = vadd.f32 %v3243, %v3370
        %v3372 = vpop.f32.mrf.mxu0
        %3373 = vmatprep.mubr.f32.mxu0 0.0
        %v3374 = vand.u32 %v2868, 4294901760
        %v3375 = vsub.f32 %v2868, %v3374
        %v3376 = vand.u32 %v3375, 4294901760
        %3377 = vmatmul.mubr.f32.gmra.mxu0 %v3376
        %v3378 = vpop.f32.mrf.mxu0
        %v3379 = vadd.f32 %v3250, %v3378
        %v3380 = vpop.f32.mrf.mxu0
        %3381 = vmatprep.mubr.f32.mxu0 0.0
        %v3382 = vand.u32 %v2871, 4294901760
        %v3383 = vsub.f32 %v2871, %v3382
        %v3384 = vand.u32 %v3383, 4294901760
        %3385 = vmatmul.mubr.f32.gmra.mxu0 %v3384
        %v3386 = vpop.f32.mrf.mxu0
        %v3387 = vadd.f32 %v3257, %v3386
        %v3388 = vpop.f32.mrf.mxu0
        %3389 = vdwg.mxu0
        %3390 = vmatprep.subr.mxu0 0.0
        %3391 = vmatpush1.msra.mxu0 0.0
        %3392 = vmatprep.subr.mxu0 0.0
        %3393 = vmatpush1.msra.mxu0 0.0
        %3394 = vmatprep.subr.mxu0 0.0
        %3395 = vmatpush1.msra.mxu0 0.0
        %3396 = vmatprep.subr.mxu0 0.0
        %3397 = vmatpush1.msra.mxu0 0.0
        %3398 = vmatprep.subr.mxu0 0.0
        %3399 = vmatpush1.msra.mxu0 0.0
        %3400 = vmatprep.subr.mxu0 0.0
        %3401 = vmatpush1.msra.mxu0 0.0
        %3402 = vmatprep.subr.mxu0 0.0
        %3403 = vmatpush1.msra.mxu0 0.0
        %3404 = vmatprep.subr.mxu0 0.0
        %3405 = vmatpush1.msra.mxu0 0.0
        %3406 = vmatprep.subr.mxu0 0.0
        %3407 = vmatpush1.msra.mxu0 0.0
        %3408 = vmatprep.subr.mxu0 0.0
        %3409 = vmatpush1.msra.mxu0 0.0
        %3410 = vmatprep.subr.mxu0 0.0
        %3411 = vmatpush1.msra.mxu0 0.0
        %3412 = vmatprep.subr.mxu0 0.0
        %3413 = vmatpush1.msra.mxu0 0.0
        %3414 = vmatprep.subr.mxu0 0.0
        %3415 = vmatpush1.msra.mxu0 0.0
        %3416 = vmatprep.subr.mxu0 0.0
        %3417 = vmatpush1.msra.mxu0 0.0
        %3418 = vmatprep.subr.mxu0 0.0
        %3419 = vmatpush1.msra.mxu0 0.0
        %3420 = vmatprep.subr.mxu0 0.0
        %v3421 = vand.u32 %v1265, 4294901760
        %v3422 = vsub.f32 %v1265, %v3421
        %v3423 = vand.u32 %v3422, 4294901760
        %3424 = vmatpush1.msra.mxu0 %v3423
        %3425 = vmatprep.subr.mxu0 0.0
        %3426 = vmatpush2.msra.mxu0 0.0
        %3427 = vmatprep.subr.mxu0 0.0
        %3428 = vmatpush2.msra.mxu0 0.0
        %3429 = vmatprep.subr.mxu0 0.0
        %3430 = vmatpush2.msra.mxu0 0.0
        %3431 = vmatprep.subr.mxu0 0.0
        %3432 = vmatpush2.msra.mxu0 0.0
        %3433 = vmatprep.subr.mxu0 0.0
        %3434 = vmatpush2.msra.mxu0 0.0
        %3435 = vmatprep.subr.mxu0 0.0
        %3436 = vmatpush2.msra.mxu0 0.0
        %3437 = vmatprep.subr.mxu0 0.0
        %3438 = vmatpush2.msra.mxu0 0.0
        %3439 = vmatprep.subr.mxu0 0.0
        %3440 = vmatpush2.msra.mxu0 0.0
        %3441 = vmatprep.subr.mxu0 0.0
        %3442 = vmatpush2.msra.mxu0 0.0
        %3443 = vmatprep.subr.mxu0 0.0
        %3444 = vmatpush2.msra.mxu0 0.0
        %3445 = vmatprep.subr.mxu0 0.0
        %3446 = vmatpush2.msra.mxu0 0.0
        %3447 = vmatprep.subr.mxu0 0.0
        %3448 = vmatpush2.msra.mxu0 0.0
        %3449 = vmatprep.subr.mxu0 0.0
        %3450 = vmatpush2.msra.mxu0 0.0
        %3451 = vmatprep.subr.mxu0 0.0
        %3452 = vmatpush2.msra.mxu0 0.0
        %3453 = vmatprep.subr.mxu0 0.0
        %3454 = vmatpush2.msra.mxu0 0.0
        %3455 = vmatprep.subr.mxu0 0.0
        %3456 = vmatpush2.msra.mxu0 0.0
        %3457 = vmatprep.mubr.f32.mxu0 0.0
        %v3458 = vand.u32 %v2850, 4294901760
        %3459 = vmatmul.mubr.f32.gmra.mxu0 %v3458
        %v3460 = vpop.f32.mrf.mxu0
        %v3461 = vadd.f32 %v3331, %v3460
        %v3462 = vpop.f32.mrf.mxu0
        %3463 = vmatprep.mubr.f32.mxu0 0.0
        %v3464 = vand.u32 %v2853, 4294901760
        %3465 = vmatmul.mubr.f32.gmra.mxu0 %v3464
        %v3466 = vpop.f32.mrf.mxu0
        %v3467 = vadd.f32 %v3339, %v3466
        %v3468 = vpop.f32.mrf.mxu0
        %3469 = vmatprep.mubr.f32.mxu0 0.0
        %v3470 = vand.u32 %v2856, 4294901760
        %3471 = vmatmul.mubr.f32.gmra.mxu0 %v3470
        %v3472 = vpop.f32.mrf.mxu0
        %v3473 = vadd.f32 %v3347, %v3472
        %v3474 = vpop.f32.mrf.mxu0
        %3475 = vmatprep.mubr.f32.mxu0 0.0
        %v3476 = vand.u32 %v2859, 4294901760
        %3477 = vmatmul.mubr.f32.gmra.mxu0 %v3476
        %v3478 = vpop.f32.mrf.mxu0
        %v3479 = vadd.f32 %v3355, %v3478
        %v3480 = vpop.f32.mrf.mxu0
        %3481 = vmatprep.mubr.f32.mxu0 0.0
        %v3482 = vand.u32 %v2862, 4294901760
        %3483 = vmatmul.mubr.f32.gmra.mxu0 %v3482
        %v3484 = vpop.f32.mrf.mxu0
        %v3485 = vadd.f32 %v3363, %v3484
        %v3486 = vpop.f32.mrf.mxu0
        %3487 = vmatprep.mubr.f32.mxu0 0.0
        %v3488 = vand.u32 %v2865, 4294901760
        %3489 = vmatmul.mubr.f32.gmra.mxu0 %v3488
        %v3490 = vpop.f32.mrf.mxu0
        %v3491 = vadd.f32 %v3371, %v3490
        %v3492 = vpop.f32.mrf.mxu0
        %3493 = vmatprep.mubr.f32.mxu0 0.0
        %v3494 = vand.u32 %v2868, 4294901760
        %3495 = vmatmul.mubr.f32.gmra.mxu0 %v3494
        %v3496 = vpop.f32.mrf.mxu0
        %v3497 = vadd.f32 %v3379, %v3496
        %v3498 = vpop.f32.mrf.mxu0
        %3499 = vmatprep.mubr.f32.mxu0 0.0
        %v3500 = vand.u32 %v2871, 4294901760
        %3501 = vmatmul.mubr.f32.gmra.mxu0 %v3500
        %v3502 = vpop.f32.mrf.mxu0
        %v3503 = vadd.f32 %v3387, %v3502
        %v3504 = vpop.f32.mrf.mxu0
        %3505 = vdwg.mxu0
        %3506 = vmatprep.subr.mxu0 0.0
        %3507 = vmatpush1.msra.mxu0 0.0
        %3508 = vmatprep.subr.mxu0 0.0
        %3509 = vmatpush1.msra.mxu0 0.0
        %3510 = vmatprep.subr.mxu0 0.0
        %3511 = vmatpush1.msra.mxu0 0.0
        %3512 = vmatprep.subr.mxu0 0.0
        %3513 = vmatpush1.msra.mxu0 0.0
        %3514 = vmatprep.subr.mxu0 0.0
        %3515 = vmatpush1.msra.mxu0 0.0
        %3516 = vmatprep.subr.mxu0 0.0
        %3517 = vmatpush1.msra.mxu0 0.0
        %3518 = vmatprep.subr.mxu0 0.0
        %3519 = vmatpush1.msra.mxu0 0.0
        %3520 = vmatprep.subr.mxu0 0.0
        %3521 = vmatpush1.msra.mxu0 0.0
        %3522 = vmatprep.subr.mxu0 0.0
        %3523 = vmatpush1.msra.mxu0 0.0
        %3524 = vmatprep.subr.mxu0 0.0
        %3525 = vmatpush1.msra.mxu0 0.0
        %3526 = vmatprep.subr.mxu0 0.0
        %3527 = vmatpush1.msra.mxu0 0.0
        %3528 = vmatprep.subr.mxu0 0.0
        %3529 = vmatpush1.msra.mxu0 0.0
        %3530 = vmatprep.subr.mxu0 0.0
        %3531 = vmatpush1.msra.mxu0 0.0
        %3532 = vmatprep.subr.mxu0 0.0
        %3533 = vmatpush1.msra.mxu0 0.0
        %3534 = vmatprep.subr.mxu0 0.0
        %3535 = vmatpush1.msra.mxu0 0.0
        %3536 = vmatprep.subr.mxu0 0.0
        %v3537 = vand.u32 %v1265, 4294901760
        %3538 = vmatpush1.msra.mxu0 %v3537
        %3539 = vmatprep.subr.mxu0 0.0
        %3540 = vmatpush2.msra.mxu0 0.0
        %3541 = vmatprep.subr.mxu0 0.0
        %3542 = vmatpush2.msra.mxu0 0.0
        %3543 = vmatprep.subr.mxu0 0.0
        %3544 = vmatpush2.msra.mxu0 0.0
        %3545 = vmatprep.subr.mxu0 0.0
        %3546 = vmatpush2.msra.mxu0 0.0
        %3547 = vmatprep.subr.mxu0 0.0
        %3548 = vmatpush2.msra.mxu0 0.0
        %3549 = vmatprep.subr.mxu0 0.0
        %3550 = vmatpush2.msra.mxu0 0.0
        %3551 = vmatprep.subr.mxu0 0.0
        %3552 = vmatpush2.msra.mxu0 0.0
        %3553 = vmatprep.subr.mxu0 0.0
        %3554 = vmatpush2.msra.mxu0 0.0
        %3555 = vmatprep.subr.mxu0 0.0
        %3556 = vmatpush2.msra.mxu0 0.0
        %3557 = vmatprep.subr.mxu0 0.0
        %3558 = vmatpush2.msra.mxu0 0.0
        %3559 = vmatprep.subr.mxu0 0.0
        %3560 = vmatpush2.msra.mxu0 0.0
        %3561 = vmatprep.subr.mxu0 0.0
        %3562 = vmatpush2.msra.mxu0 0.0
        %3563 = vmatprep.subr.mxu0 0.0
        %3564 = vmatpush2.msra.mxu0 0.0
        %3565 = vmatprep.subr.mxu0 0.0
        %3566 = vmatpush2.msra.mxu0 0.0
        %3567 = vmatprep.subr.mxu0 0.0
        %3568 = vmatpush2.msra.mxu0 0.0
        %3569 = vmatprep.subr.mxu0 0.0
        %3570 = vmatpush2.msra.mxu0 0.0
        %3571 = vmatprep.mubr.f32.mxu0 0.0
        %v3572 = vand.u32 %v2850, 4294901760
        %3573 = vmatmul.mubr.f32.gmra.mxu0 %v3572
        %v3574 = vpop.f32.mrf.mxu0
        %v3575 = vadd.f32 %v3461, %v3574
        %v3576 = vpop.f32.mrf.mxu0
        %3577 = vmatprep.mubr.f32.mxu0 0.0
        %v3578 = vand.u32 %v2853, 4294901760
        %3579 = vmatmul.mubr.f32.gmra.mxu0 %v3578
        %v3580 = vpop.f32.mrf.mxu0
        %v3581 = vadd.f32 %v3467, %v3580
        %v3582 = vpop.f32.mrf.mxu0
        %3583 = vmatprep.mubr.f32.mxu0 0.0
        %v3584 = vand.u32 %v2856, 4294901760
        %3585 = vmatmul.mubr.f32.gmra.mxu0 %v3584
        %v3586 = vpop.f32.mrf.mxu0
        %v3587 = vadd.f32 %v3473, %v3586
        %v3588 = vpop.f32.mrf.mxu0
        %3589 = vmatprep.mubr.f32.mxu0 0.0
        %v3590 = vand.u32 %v2859, 4294901760
        %3591 = vmatmul.mubr.f32.gmra.mxu0 %v3590
        %v3592 = vpop.f32.mrf.mxu0
        %v3593 = vadd.f32 %v3479, %v3592
        %v3594 = vpop.f32.mrf.mxu0
        %3595 = vmatprep.mubr.f32.mxu0 0.0
        %v3596 = vand.u32 %v2862, 4294901760
        %3597 = vmatmul.mubr.f32.gmra.mxu0 %v3596
        %v3598 = vpop.f32.mrf.mxu0
        %v3599 = vadd.f32 %v3485, %v3598
        %v3600 = vpop.f32.mrf.mxu0
        %3601 = vmatprep.mubr.f32.mxu0 0.0
        %v3602 = vand.u32 %v2865, 4294901760
        %3603 = vmatmul.mubr.f32.gmra.mxu0 %v3602
        %v3604 = vpop.f32.mrf.mxu0
        %v3605 = vadd.f32 %v3491, %v3604
        %v3606 = vpop.f32.mrf.mxu0
        %3607 = vmatprep.mubr.f32.mxu0 0.0
        %v3608 = vand.u32 %v2868, 4294901760
        %3609 = vmatmul.mubr.f32.gmra.mxu0 %v3608
        %v3610 = vpop.f32.mrf.mxu0
        %v3611 = vadd.f32 %v3497, %v3610
        %v3612 = vpop.f32.mrf.mxu0
        %3613 = vmatprep.mubr.f32.mxu0 0.0
        %v3614 = vand.u32 %v2871, 4294901760
        %3615 = vmatmul.mubr.f32.gmra.mxu0 %v3614
        %v3616 = vpop.f32.mrf.mxu0
        %v3617 = vadd.f32 %v3503, %v3616
        %v3618 = vpop.f32.mrf.mxu0
        %3619 = vdwg.mxu0
        %v3620 = vmul.f32 %v1178, 0.05
        %v3621 = vmul.f32 %v1179, 0.05
        %v3622 = vmul.f32 %v1180, 0.05
        %v3623 = vmul.f32 %v1181, 0.05
        %v3624 = vmul.f32 %v1182, 0.05
        %v3625 = vmul.f32 %v1183, 0.05
        %v3626 = vmul.f32 %v1184, 0.05
        %v3627 = vmul.f32 %v1185, 0.05
        %v3628 = vmul.f32 %v1186, 0.05
        %v3629 = vmul.f32 %v1187, 0.05
        %v3630 = vmul.f32 %v1188, 0.05
        %v3631 = vmul.f32 %v1189, 0.05
        %v3632 = vmul.f32 %v1190, 0.05
        %v3633 = vmul.f32 %v1191, 0.05
        %v3634 = vmul.f32 %v1192, 0.05
        %v3635 = vmul.f32 %v1193, 0.05
        %v3636 = vmul.f32 %v1194, 0.05
        %v3637 = vmul.f32 %v1195, 0.05
        %v3638 = vmul.f32 %v1196, 0.05
        %v3639 = vmul.f32 %v1197, 0.05
        %v3640 = vmul.f32 %v1198, 0.05
        %v3641 = vmul.f32 %v1199, 0.05
        %v3642 = vmul.f32 %v1200, 0.05
        %v3643 = vmul.f32 %v1201, 0.05
        %v3644 = vsub.f32 0.05, %v3620
        %v3645 = vsub.f32 0.05, %v3621
        %v3646 = vsub.f32 0.05, %v3622
        %v3647 = vsub.f32 0.05, %v3623
        %v3648 = vsub.f32 0.05, %v3624
        %v3649 = vsub.f32 0.05, %v3625
        %v3650 = vsub.f32 0.05, %v3626
        %v3651 = vsub.f32 0.05, %v3627
        %v3652 = vsub.f32 0.05, %v3628
        %v3653 = vsub.f32 0.05, %v3629
        %v3654 = vsub.f32 0.05, %v3630
        %v3655 = vsub.f32 0.05, %v3631
        %v3656 = vsub.f32 0.05, %v3632
        %v3657 = vsub.f32 0.05, %v3633
        %v3658 = vsub.f32 0.05, %v3634
        %v3659 = vsub.f32 0.05, %v3635
        %v3660 = vsub.f32 0.05, %v3636
        %v3661 = vsub.f32 0.05, %v3637
        %v3662 = vsub.f32 0.05, %v3638
        %v3663 = vsub.f32 0.05, %v3639
        %v3664 = vsub.f32 0.05, %v3640
        %v3665 = vsub.f32 0.05, %v3641
        %v3666 = vsub.f32 0.05, %v3642
        %v3667 = vsub.f32 0.05, %v3643
        %v3668 = vsub.f32 %v1178, 0.2
        %v3669 = vsub.f32 %v1179, 0.2
        %v3670 = vsub.f32 %v1180, 0.2
        %v3671 = vsub.f32 %v1181, 0.2
        %v3672 = vsub.f32 %v1182, 0.2
        %v3673 = vsub.f32 %v1183, 0.2
        %v3674 = vsub.f32 %v1184, 0.2
        %v3675 = vsub.f32 %v1185, 0.2
        %v3676 = vsub.f32 %v1186, 0.2
        %v3677 = vsub.f32 %v1187, 0.2
        %v3678 = vsub.f32 %v1188, 0.2
        %v3679 = vsub.f32 %v1189, 0.2
        %v3680 = vsub.f32 %v1190, 0.2
        %v3681 = vsub.f32 %v1191, 0.2
        %v3682 = vsub.f32 %v1192, 0.2
        %v3683 = vsub.f32 %v1193, 0.2
        %v3684 = vsub.f32 %v1194, 0.2
        %v3685 = vsub.f32 %v1195, 0.2
        %v3686 = vsub.f32 %v1196, 0.2
        %v3687 = vsub.f32 %v1197, 0.2
        %v3688 = vsub.f32 %v1198, 0.2
        %v3689 = vsub.f32 %v1199, 0.2
        %v3690 = vsub.f32 %v1200, 0.2
        %v3691 = vsub.f32 %v1201, 0.2
        %vm3692 = vcmp.ge.f32.partialorder %v1969, 0.0
        %vm3693 = vcmp.ge.f32.partialorder %v1975, 0.0
        %vm3694 = vcmp.ge.f32.partialorder %v1981, 0.0
        %vm3695 = vcmp.ge.f32.partialorder %v1987, 0.0
        %vm3696 = vcmp.ge.f32.partialorder %v1993, 0.0
        %vm3697 = vcmp.ge.f32.partialorder %v1999, 0.0
        %vm3698 = vcmp.ge.f32.partialorder %v2005, 0.0
        %vm3699 = vcmp.ge.f32.partialorder %v2011, 0.0
        %vm3700 = vcmp.ge.f32.partialorder %v2772, 0.0
        %vm3701 = vcmp.ge.f32.partialorder %v2778, 0.0
        %vm3702 = vcmp.ge.f32.partialorder %v2784, 0.0
        %vm3703 = vcmp.ge.f32.partialorder %v2790, 0.0
        %vm3704 = vcmp.ge.f32.partialorder %v2796, 0.0
        %vm3705 = vcmp.ge.f32.partialorder %v2802, 0.0
        %vm3706 = vcmp.ge.f32.partialorder %v2808, 0.0
        %vm3707 = vcmp.ge.f32.partialorder %v2814, 0.0
        %vm3708 = vcmp.ge.f32.partialorder %v3575, 0.0
        %vm3709 = vcmp.ge.f32.partialorder %v3581, 0.0
        %vm3710 = vcmp.ge.f32.partialorder %v3587, 0.0
        %vm3711 = vcmp.ge.f32.partialorder %v3593, 0.0
        %vm3712 = vcmp.ge.f32.partialorder %v3599, 0.0
        %vm3713 = vcmp.ge.f32.partialorder %v3605, 0.0
        %vm3714 = vcmp.ge.f32.partialorder %v3611, 0.0
        %vm3715 = vcmp.ge.f32.partialorder %v3617, 0.0
        %v3716 = vsel %vm3692, %v3644, %v3668
        %v3717 = vsel %vm3693, %v3645, %v3669
        %v3718 = vsel %vm3694, %v3646, %v3670
        %v3719 = vsel %vm3695, %v3647, %v3671
        %v3720 = vsel %vm3696, %v3648, %v3672
        %v3721 = vsel %vm3697, %v3649, %v3673
        %v3722 = vsel %vm3698, %v3650, %v3674
        %v3723 = vsel %vm3699, %v3651, %v3675
        %v3724 = vsel %vm3700, %v3652, %v3676
        %v3725 = vsel %vm3701, %v3653, %v3677
        %v3726 = vsel %vm3702, %v3654, %v3678
        %v3727 = vsel %vm3703, %v3655, %v3679
        %v3728 = vsel %vm3704, %v3656, %v3680
        %v3729 = vsel %vm3705, %v3657, %v3681
        %v3730 = vsel %vm3706, %v3658, %v3682
        %v3731 = vsel %vm3707, %v3659, %v3683
        %v3732 = vsel %vm3708, %v3660, %v3684
        %v3733 = vsel %vm3709, %v3661, %v3685
        %v3734 = vsel %vm3710, %v3662, %v3686
        %v3735 = vsel %vm3711, %v3663, %v3687
        %v3736 = vsel %vm3712, %v3664, %v3688
        %v3737 = vsel %vm3713, %v3665, %v3689
        %v3738 = vsel %vm3714, %v3666, %v3690
        %v3739 = vsel %vm3715, %v3667, %v3691
        %v3740 = vmax.f32 %v3716, 0.0
        %v3741 = vmax.f32 %v3717, 0.0
        %v3742 = vmax.f32 %v3718, 0.0
        %v3743 = vmax.f32 %v3719, 0.0
        %v3744 = vmax.f32 %v3720, 0.0
        %v3745 = vmax.f32 %v3721, 0.0
        %v3746 = vmax.f32 %v3722, 0.0
        %v3747 = vmax.f32 %v3723, 0.0
        %v3748 = vmax.f32 %v3724, 0.0
        %v3749 = vmax.f32 %v3725, 0.0
        %v3750 = vmax.f32 %v3726, 0.0
        %v3751 = vmax.f32 %v3727, 0.0
        %v3752 = vmax.f32 %v3728, 0.0
        %v3753 = vmax.f32 %v3729, 0.0
        %v3754 = vmax.f32 %v3730, 0.0
        %v3755 = vmax.f32 %v3731, 0.0
        %v3756 = vmax.f32 %v3732, 0.0
        %v3757 = vmax.f32 %v3733, 0.0
        %v3758 = vmax.f32 %v3734, 0.0
        %v3759 = vmax.f32 %v3735, 0.0
        %v3760 = vmax.f32 %v3736, 0.0
        %v3761 = vmax.f32 %v3737, 0.0
        %v3762 = vmax.f32 %v3738, 0.0
        %v3763 = vmax.f32 %v3739, 0.0
        %v3764 = vsel %vm348, %v3740, 0.0
        %3765 = vadd.xlane.f32.xlu0 %v3764
        %v3766 = vpop.xlane.xlu0 %3765
        %v3767 = vsel %vm348, %v3741, 0.0
        %3768 = vadd.xlane.f32.xlu0 %v3767
        %v3769 = vpop.xlane.xlu0 %3768
        %v3770 = vsel %vm348, %v3742, 0.0
        %3771 = vadd.xlane.f32.xlu0 %v3770
        %v3772 = vpop.xlane.xlu0 %3771
        %v3773 = vsel %vm348, %v3743, 0.0
        %3774 = vadd.xlane.f32.xlu0 %v3773
        %v3775 = vpop.xlane.xlu0 %3774
        %v3776 = vsel %vm348, %v3744, 0.0
        %3777 = vadd.xlane.f32.xlu0 %v3776
        %v3778 = vpop.xlane.xlu0 %3777
        %v3779 = vsel %vm348, %v3745, 0.0
        %3780 = vadd.xlane.f32.xlu0 %v3779
        %v3781 = vpop.xlane.xlu0 %3780
        %v3782 = vsel %vm348, %v3746, 0.0
        %3783 = vadd.xlane.f32.xlu0 %v3782
        %v3784 = vpop.xlane.xlu0 %3783
        %v3785 = vsel %vm348, %v3747, 0.0
        %3786 = vadd.xlane.f32.xlu0 %v3785
        %v3787 = vpop.xlane.xlu0 %3786
        %v3788 = vsel %vm348, %v3748, 0.0
        %3789 = vadd.xlane.f32.xlu0 %v3788
        %v3790 = vpop.xlane.xlu0 %3789
        %v3791 = vsel %vm348, %v3749, 0.0
        %3792 = vadd.xlane.f32.xlu0 %v3791
        %v3793 = vpop.xlane.xlu0 %3792
        %v3794 = vsel %vm348, %v3750, 0.0
        %3795 = vadd.xlane.f32.xlu0 %v3794
        %v3796 = vpop.xlane.xlu0 %3795
        %v3797 = vsel %vm348, %v3751, 0.0
        %3798 = vadd.xlane.f32.xlu0 %v3797
        %v3799 = vpop.xlane.xlu0 %3798
        %v3800 = vsel %vm348, %v3752, 0.0
        %3801 = vadd.xlane.f32.xlu0 %v3800
        %v3802 = vpop.xlane.xlu0 %3801
        %v3803 = vsel %vm348, %v3753, 0.0
        %3804 = vadd.xlane.f32.xlu0 %v3803
        %v3805 = vpop.xlane.xlu0 %3804
        %v3806 = vsel %vm348, %v3754, 0.0
        %3807 = vadd.xlane.f32.xlu0 %v3806
        %v3808 = vpop.xlane.xlu0 %3807
        %v3809 = vsel %vm348, %v3755, 0.0
        %3810 = vadd.xlane.f32.xlu0 %v3809
        %v3811 = vpop.xlane.xlu0 %3810
        %v3812 = vsel %vm348, %v3756, 0.0
        %3813 = vadd.xlane.f32.xlu0 %v3812
        %v3814 = vpop.xlane.xlu0 %3813
        %v3815 = vsel %vm348, %v3757, 0.0
        %3816 = vadd.xlane.f32.xlu0 %v3815
        %v3817 = vpop.xlane.xlu0 %3816
        %v3818 = vsel %vm348, %v3758, 0.0
        %3819 = vadd.xlane.f32.xlu0 %v3818
        %v3820 = vpop.xlane.xlu0 %3819
        %v3821 = vsel %vm348, %v3759, 0.0
        %3822 = vadd.xlane.f32.xlu0 %v3821
        %v3823 = vpop.xlane.xlu0 %3822
        %v3824 = vsel %vm348, %v3760, 0.0
        %3825 = vadd.xlane.f32.xlu0 %v3824
        %v3826 = vpop.xlane.xlu0 %3825
        %v3827 = vsel %vm348, %v3761, 0.0
        %3828 = vadd.xlane.f32.xlu0 %v3827
        %v3829 = vpop.xlane.xlu0 %3828
        %v3830 = vsel %vm348, %v3762, 0.0
        %3831 = vadd.xlane.f32.xlu0 %v3830
        %v3832 = vpop.xlane.xlu0 %3831
        %v3833 = vsel %vm348, %v3763, 0.0
        %3834 = vadd.xlane.f32.xlu0 %v3833
        %v3835 = vpop.xlane.xlu0 %3834
        %v3836 = vadd.f32 %v3766, %v3769
        %v3837 = vadd.f32 %v3836, %v3772
        %v3838 = vadd.f32 %v3837, %v3775
        %v3839 = vadd.f32 %v3838, %v3778
        %v3840 = vadd.f32 %v3839, %v3781
        %v3841 = vadd.f32 %v3840, %v3784
        %v3842 = vadd.f32 %v3841, %v3787
        %v3843 = vrot.slane %v3842, 4
        %v3844 = vadd.f32 %v3842, %v3843
        %v3845 = vrot.slane %v3844, 2
        %v3846 = vadd.f32 %v3844, %v3845
        %v3847 = vrot.slane %v3846, 1
        %v3848 = vadd.f32 %v3846, %v3847
        %v3849 = vadd.f32 %v3790, %v3793
        %v3850 = vadd.f32 %v3849, %v3796
        %v3851 = vadd.f32 %v3850, %v3799
        %v3852 = vadd.f32 %v3851, %v3802
        %v3853 = vadd.f32 %v3852, %v3805
        %v3854 = vadd.f32 %v3853, %v3808
        %v3855 = vadd.f32 %v3854, %v3811
        %v3856 = vrot.slane %v3855, 4
        %v3857 = vadd.f32 %v3855, %v3856
        %v3858 = vrot.slane %v3857, 2
        %v3859 = vadd.f32 %v3857, %v3858
        %v3860 = vrot.slane %v3859, 1
        %v3861 = vadd.f32 %v3859, %v3860
        %v3862 = vadd.f32 %v3814, %v3817
        %v3863 = vadd.f32 %v3862, %v3820
        %v3864 = vadd.f32 %v3863, %v3823
        %v3865 = vadd.f32 %v3864, %v3826
        %v3866 = vadd.f32 %v3865, %v3829
        %v3867 = vadd.f32 %v3866, %v3832
        %v3868 = vadd.f32 %v3867, %v3835
        %v3869 = vrot.slane %v3868, 4
        %v3870 = vadd.f32 %v3868, %v3869
        %v3871 = vrot.slane %v3870, 2
        %v3872 = vadd.f32 %v3870, %v3871
        %v3873 = vrot.slane %v3872, 1
        %v3874 = vadd.f32 %v3872, %v3873
        %vm3875 = vcmask 0
        %3876 = vst.msk [vmem:[%s297] sm:$0x1] %vm3875, %v3848
        %3877 = vst.msk [vmem:[%s297 + $0x1] sm:$0x1] %vm3875, %v3861
        %3878 = vst.msk [vmem:[%s297 + $0x2] sm:$0x1] %vm3875, %v3874
        %s3879 = smul.u32 3, %s21
        %p3880 = scmp.lt.s32.totalorder %s3879, 5
        %s3881 = scalar_select %p3880, %s3879, 5
        %s3882 = scalar_lea.vmem %s4, %s3881
        // Predicated region
        $region49: #{tpu_custom_call.1} parent=35 // pred_check
          %p3883 = pneg %p138
        $region50: #{tpu_custom_call.1} parent=35 // pred_check_branch
          %3885 = sbr.rel (%p3883) target = $region52
        $region51: #{tpu_custom_call.1} parent=35 // pred_region
          %s3886 = smul.u32 3, %s21
        $region52: #{tpu_custom_call.1} parent=35 // pred_fallthru
          _
      $region36: #{tpu_custom_call.1} parent=5 // pred_fallthru
        _
      %p3887 = scmp.le.s32.totalorder 2, %s16
      // Predicated region
      $region53: #{tpu_custom_call.1} parent=5 // pred_check
        %p3888 = pneg %p3887
      $region54: #{tpu_custom_call.1} parent=5 // pred_check_branch
        %3890 = sbr.rel (%p3888) target = $region56
      $region55: #{tpu_custom_call.1} parent=5 // pred_region
        %s3891 = ssub.s32 %s16, 2
        // Predicated region
        $region57: #{tpu_custom_call.1} parent=55 // pred_check
          %p3892 = pneg %p144
        $region58: #{tpu_custom_call.1} parent=55 // pred_check_branch
          %3894 = sbr.rel (%p3892) target = $region60
        $region59: #{tpu_custom_call.1} parent=55 // pred_region
          %s3895 = smul.u32 3, %s22
          %p3896 = scmp.lt.s32.totalorder %s3895, 5
          %s3897 = scalar_select %p3896, %s3895, 5
          %s3898 = scalar_lea.vmem %s4, %s3897
        $region60: #{tpu_custom_call.1} parent=55 // pred_fallthru
          _
      $region56: #{tpu_custom_call.1} parent=5 // pred_fallthru
        _
    $region6: #{tpu_custom_call.1} parent=1 // loop_footer
      %s20 = sadd.s32 1, %s16
    $region7: #{tpu_custom_call.1} parent=1 // loop_footer_branch
      %15 = sbr.rel target = $region3
    $region8: #{tpu_custom_call.1} parent=1 // loop_exit
      _
    %3899 = vsyncpa [#allocation3], 1
    %s3900 = scalar_lea.sflag [#allocation3], 1
    %3901 = vsyncpa %s3900, 1
    %3902 = vsyncpa [#allocation5], 1
    %s3903 = scalar_lea.sflag [#allocation5], 1
    %3904 = vsyncpa %s3903, 1

</llo_original>
